<compile_context>
chip_gen: v7x
topology: tpu7x:2x2x1
jax: 0.10.0
libtpu: 0.0.40
codegen_flags: <defaults>
</compile_context>

<pallas_src>
import functools

import numpy as np
import jax
import jax.numpy as jnp
from jax.experimental import pallas as pl
from jax.experimental.pallas import tpu as pltpu

# ---------------------------------------------------------------------------
# Geometric-algebra tables for the 16-dim projective geometric algebra Cl(3,0,1)
# Basis ordering: [1, e0,e1,e2,e3, e01,e02,e03,e12,e13,e23, e012,e013,e023,e123, e0123]
# ---------------------------------------------------------------------------
_BLADES = [(), (0,), (1,), (2,), (3,),
           (0, 1), (0, 2), (0, 3), (1, 2), (1, 3), (2, 3),
           (0, 1, 2), (0, 1, 3), (0, 2, 3), (1, 2, 3),
           (0, 1, 2, 3)]
_IDX = {b: i for i, b in enumerate(_BLADES)}
_METRIC = {0: 0.0, 1: 1.0, 2: 1.0, 3: 1.0}   # e0^2 = 0, e1^2 = e2^2 = e3^2 = 1


def _perm_sign(seq):
    s = 1
    seq = list(seq)
    for i in range(len(seq)):
        for j in range(i + 1, len(seq)):
            if seq[i] > seq[j]:
                s = -s
    return s


def _blade_geom_product(a, b):
    """sign, blade of e_a * e_b in Cl(3,0,1)."""
    gens = list(a) + list(b)
    sign = float(_perm_sign(gens))
    gens = sorted(gens)
    out = []
    k = 0
    while k < len(gens):
        if k + 1 < len(gens) and gens[k] == gens[k + 1]:
            sign *= _METRIC[gens[k]]
            k += 2
        else:
            out.append(gens[k])
            k += 1
    if sign == 0.0:
        return 0.0, ()
    return sign, tuple(out)


def geometric_product_table():
    gp = np.zeros((16, 16, 16), np.float32)
    for i, a in enumerate(_BLADES):
        for j, b in enumerate(_BLADES):
            s, c = _blade_geom_product(a, b)
            if s != 0.0:
                gp[_IDX[c], i, j] += s
    return gp


def _dual(blade):
    comp = tuple(sorted(set(range(4)) - set(blade)))
    return _perm_sign(list(blade) + list(comp)), comp


def _undual(blade):
    comp = tuple(sorted(set(range(4)) - set(blade)))
    return _perm_sign(list(comp) + list(blade)), comp


def join_table():
    """join(x, y) = undual(dual(x) ^ dual(y)) as a (16,16,16) bilinear table."""
    J = np.zeros((16, 16, 16), np.float32)
    for i, a in enumerate(_BLADES):
        sa, ad = _dual(a)
        for j, b in enumerate(_BLADES):
            sb, bd = _dual(b)
            if set(ad) & set(bd):
                continue
            sw = _perm_sign(list(ad) + list(bd))
            w = tuple(sorted(ad + bd))
            su, wu = _undual(w)
            J[_IDX[wu], i, j] += sa * sb * sw * su
    return J


def equi_linear_basis(gp):
    """9 Pin(3,0,1)-equivariant linear maps: 5 grade projections + 4 'multiply by e0' maps."""
    basis = np.zeros((9, 16, 16), np.float32)
    for g in range(5):
        for m, b in enumerate(_BLADES):
            if len(b) == g:
                basis[g, m, m] = 1.0
    e0 = _IDX[(0,)]
    for g in range(4):
        for n, b in enumerate(_BLADES):
            if len(b) == g:
                basis[5 + g, :, n] = gp[:, e0, n]
    return basis


# ---------------------------------------------------------------------------
# Backend / chip-generation configuration
# ---------------------------------------------------------------------------
def _tpu_device_kind():
    if jax.default_backend() != "tpu":
        return None
    try:
        return jax.devices()[0].device_kind.lower()
    except Exception:  # pragma: no cover - defensive
        return "tpu"


def _compute_dtypes():
    """(matmul dtype, Hadamard dtype) per backend.

    CPU / interpret mode: f32 everywhere (the CPU dot thunk has no bf16 x bf16 = f32 path).
    TPU: bf16 matmul operands (f32 MXU accumulation); Hadamard bf16 on v6e/v7x (bf16 VALUs),
    f32 on v5e (no bf16 VALU).
    """
    kind = _tpu_device_kind()
    if kind is None:
        return jnp.float32, jnp.float32
    had = jnp.float32 if "v5" in kind else jnp.bfloat16
    return jnp.bfloat16, had


def _vmem_cap_bytes():
    kind = _tpu_device_kind()
    if kind is None:
        return 64 << 20
    if "v7" in kind or "7x" in kind:
        return 56 << 20          # v7x: 64 MiB physical VMEM per TensorCore, leave headroom
    return 100 << 20             # v5e / v6e: 128 MiB physical VMEM


def _default_tile_n():
    kind = _tpu_device_kind()
    if kind is None or "v7" in kind or "7x" in kind:
        return 512               # keep several grid steps so both v7x TensorCores get work
    return 1024                  # v5e / v6e: bigger blocks amortize per-grid-step overhead


# ---------------------------------------------------------------------------
# Host-side parameter / constant-matrix construction (all structure folded)
# ---------------------------------------------------------------------------
def _equi_linear_eff(w, basis):
    """w: (O, I, 9) -> effective matrix (O*16, I*16) with rows (o,k), cols (i,j)."""
    W = np.einsum("oib,bkj->okij", np.asarray(w, np.float32), basis)
    O, I = w.shape[0], w.shape[1]
    return W.reshape(O * 16, I * 16)


def make_params(in_channels, out_channels, hidden_channels, key, dtype=None):
    assert hidden_channels % 2 == 0, "GeometricBilinear needs even channel number"
    if dtype is None:
        dtype = _compute_dtypes()[0]
    E = hidden_channels // 2
    H = 2 * E
    in_f = in_channels * 16
    GP = geometric_product_table()
    J = join_table()
    basis = equi_linear_basis(GP)

    k1, k2, k3 = jax.random.split(key, 3)
    wl = jax.random.normal(k1, (H, in_channels, 9), jnp.float32) / np.sqrt(9.0 * in_channels)
    wr = jax.random.normal(k2, (H, in_channels, 9), jnp.float32) / np.sqrt(9.0 * in_channels)
    wo = jax.random.normal(k3, (out_channels, H, 9), jnp.float32) / np.sqrt(9.0 * H)

    wl_eff = _equi_linear_eff(wl, basis)     # (H*16, in_f)
    wr_eff = _equi_linear_eff(wr, basis)     # (H*16, in_f)
    wo_eff = _equi_linear_eff(wo, basis)     # (out_f, H*16)

    # Fold the left equivariant linear into the per-channel bilinear tables.
    # Row order (h,k,j):  bdwl[(h,k,j), f] = sum_i T_h[k,i,j] * wl_eff[(h,i), f]
    bdwl = np.zeros((H * 256, in_f), np.float32)
    for h in range(H):
        T = GP if h < E else J                               # gp half / join half
        wl_blk = wl_eff[h * 16:(h + 1) * 16, :]              # (16_i, in_f)
        bdwl[h * 256:(h + 1) * 256, :] = np.einsum(
            "kij,if->kjf", T, wl_blk).reshape(256, in_f)

    # Fold the j-summation and the output equivariant linear into one matrix:
    # out[(o,m), n] = sum_{h,k,j} w_out[(o,m),(h,k,j)] * prod[(h,k,j), n]
    w_out = np.repeat(wo_eff, 16, axis=1)                    # (out_f, H*256), cols (h,k,j)

    kernel_params = (jnp.asarray(bdwl, dtype),
                     jnp.asarray(wr_eff, dtype),
                     jnp.asarray(w_out, dtype))
    raw = (wl, wr, wo, jnp.asarray(basis), jnp.asarray(GP), jnp.asarray(J), E)
    return kernel_params, raw


# ---------------------------------------------------------------------------
# Pallas kernel
# ---------------------------------------------------------------------------
def _pgb_kernel(x1_ref, x2_ref, bdwl_ref, wr_ref, wout_ref, out_ref, acc_ref, *, had_dtype):
    """Feature-major, K-blocked geometric bilinear.

    x1_ref/x2_ref : (in_f, tn)      lane-dense input tiles
    bdwl_ref      : (H*256, in_f)   folded left-linear + bilinear tables, rows (h,k,j)
    wr_ref        : (H*16, in_f)    right equivariant linear, rows (h,j)
    wout_ref      : (out_f, H*256)  folded j-sum + output linear, cols (h,k,j)
    out_ref       : (out_f, tn)     lane-dense output tile (no in-kernel transpose)
    acc_ref       : (out_f, tn) f32 VMEM scratch accumulator
    """
    f32 = jnp.float32
    mm_dtype = bdwl_ref.dtype
    hidden = wr_ref.shape[0] // 16
    tn = x1_ref.shape[1]

    x1 = x1_ref[...].astype(mm_dtype)                       # (in_f, tn)
    x2 = x2_ref[...].astype(mm_dtype)

    # Right equivariant linear for all hidden channels at once (small): r[(h,j), n]
    r = jnp.dot(wr_ref[...], x2, preferred_element_type=had_dtype)       # (H*16, tn)

    acc_ref[...] = jnp.zeros_like(acc_ref)

    # K-blocked hot path: one hidden channel (256 (k,j)-rows) per step.  Keeps the t/prod
    # intermediates at 256*tn instead of H*256*tn and lets MXU and VPU work interleave.
    for h in range(hidden):
        lo = h * 256
        # t[(k,j), n] = sum_i T_h[k,i,j] * l[(h,i), n]   (left linear folded into bdwl)
        t = jnp.dot(bdwl_ref[lo:lo + 256, :], x1,
                    preferred_element_type=had_dtype)                    # (256, tn)
        rh = r[h * 16:(h + 1) * 16]                                      # (16, tn)
        # Per-channel bilinear: prod[(k,j), n] = t[(k,j), n] * r[(j), n]
        # (sublane broadcast over k; VPU only, bf16 on v6e/v7x, f32 on v5e/CPU)
        prod = (t.reshape(16, 16, tn) * rh.reshape(1, 16, tn)).reshape(256, tn)
        prod = prod.astype(mm_dtype)
        # Fused j-sum + output equivariant linear for this channel chunk.
        acc_ref[...] += jnp.dot(wout_ref[:, lo:lo + 256], prod,
                                preferred_element_type=f32)              # (out_f, tn)

    out_ref[...] = acc_ref[...].astype(out_ref.dtype)


def _round_up(x, m):
    return (x + m - 1) // m * m


def pairwise_geometric_bilinear(mv1, mv2, params, *, tile_n=None):
    """mv1, mv2: (..., in_channels, 16) float32 -> (..., out_channels, 16) float32."""
    bdwl, wr_eff, w_out = params
    mm_dtype = bdwl.dtype
    had_dtype = _compute_dtypes()[1]
    in_f = mv1.shape[-2] * 16
    out_f = int(w_out.shape[0])
    h16 = int(wr_eff.shape[0])
    batch_shape = mv1.shape[:-2]
    N = int(np.prod(batch_shape)) if batch_shape else 1

    # Feature-major inputs: ONE host-side transpose (plain XLA) buys lane-dense (in_f, tn)
    # kernel tiles, contiguous DMA rows and plain (M,K)@(K,N) dots inside the kernel.
    x1 = mv1.reshape(N, in_f).T          # (in_f, N)
    x2 = mv2.reshape(N, in_f).T

    if tile_n is None:
        tile_n = _default_tile_n()
    tn = _round_up(min(tile_n, _round_up(N, 128)), 128)
    n_pad = (-N) % tn
    if n_pad:                            # zero-padding is safe: everything is (bi)linear
        x1 = jnp.pad(x1, ((0, 0), (0, n_pad)))
        x2 = jnp.pad(x2, ((0, 0), (0, n_pad)))
    Np = N + n_pad

    # VMEM budget (generous): single-buffered constants, double-buffered IO tiles,
    # per-chunk intermediates incl. the materialized r broadcast and dtype casts, scratch.
    mm_sz = jnp.dtype(mm_dtype).itemsize
    had_sz = jnp.dtype(had_dtype).itemsize
    chunk = 256
    consts = (int(bdwl.size) + int(wr_eff.size) + int(w_out.size)) * mm_sz   # Buffered(1)
    io = (2 * 2 * in_f * tn * 4          # x1, x2 f32 tiles, double-buffered (lane-dense)
          + 2 * out_f * tn * 4)          # output f32 tile, double-buffered
    interm = (2 * in_f * tn * mm_sz                      # x1/x2 compute-dtype casts
              + h16 * tn * had_sz                        # r
              + chunk * tn * (2 * had_sz + mm_sz)        # per-chunk t, broadcast prod, prod cast
              + out_f * tn * 4)                          # acc scratch
    vmem_limit = int(min(max(consts + io + interm + (16 << 20), 32 << 20),
                         _vmem_cap_bytes()))

    def const_spec(a):
        # Grid-invariant constants: fetched once, single-buffered (no 2x VMEM copy).
        return pl.BlockSpec(a.shape, lambda i: (0, 0), pipeline_mode=pl.Buffered(1))

    kernel = functools.partial(_pgb_kernel, had_dtype=had_dtype)

    out2d = pl.pallas_call(
        kernel,
        out_shape=jax.ShapeDtypeStruct((out_f, Np), jnp.float32),
        grid_spec=pltpu.PrefetchScalarGridSpec(
            num_scalar_prefetch=0,
            grid=(Np // tn,),
            in_specs=[
                pl.BlockSpec((in_f, tn), lambda i: (0, i)),
                pl.BlockSpec((in_f, tn), lambda i: (0, i)),
                const_spec(bdwl), const_spec(wr_eff), const_spec(w_out),
            ],
            out_specs=pl.BlockSpec((out_f, tn), lambda i: (0, i)),
            scratch_shapes=[pltpu.VMEM((out_f, tn), jnp.float32)],
        ),
        compiler_params=pltpu.CompilerParams(
            dimension_semantics=("parallel",),
            vmem_limit_bytes=vmem_limit),
    )(x1, x2, bdwl, wr_eff, w_out)

    if n_pad:
        out2d = out2d[:, :N]
    # Back to batch-major multivectors in the wrapper (plain XLA transpose/reshape).
    return out2d.T.reshape(*batch_shape, out_f // 16, 16)


# ---------------------------------------------------------------------------
# Pure-JAX reference (same math, f32, no Pallas) for validation
# ---------------------------------------------------------------------------
def reference_forward(mv1, mv2, raw):
    wl, wr, wo, basis, GP, J, E = raw

    def equi_linear(x, w):
        return jnp.einsum("oib,bkj,...ij->...ok", w, basis, x)

    l = equi_linear(mv1, wl)
    r = equi_linear(mv2, wr)
    gp = jnp.einsum("kij,...ci,...cj->...ck", GP, l[..., :E, :], r[..., :E, :])
    jn = jnp.einsum("kij,...ci,...cj->...ck", J, l[..., E:, :], r[..., E:, :])
    cat = jnp.concatenate([gp, jn], axis=-2)
    return equi_linear(cat, wo)


# ---------------------------------------------------------------------------
if __name__ == "__main__":
    B, S = 2, 256                        # flattened batch N = 512
    in_channels, out_channels, hidden_channels = 4, 4, 8

    key = jax.random.PRNGKey(0)
    kp, kx1, kx2 = jax.random.split(key, 3)
    params, raw = make_params(in_channels, out_channels, hidden_channels, kp)

    mv1 = jax.random.normal(kx1, (B, S, in_channels, 16), jnp.float32)
    mv2 = jax.random.normal(kx2, (B, S, in_channels, 16), jnp.float32)

    # tile_n=128 -> 4 grid steps at this small demo size (production default is auto per chip).
    out = pairwise_geometric_bilinear(mv1, mv2, params, tile_n=128)
    out = jax.block_until_ready(out)
    assert out.shape == (B, S, out_channels, 16), out.shape

    ref = reference_forward(mv1, mv2, raw)
    np.testing.assert_allclose(np.asarray(out), np.asarray(ref), rtol=5e-2, atol=5e-2)

    print("KERNEL_OK")
</pallas_src>

<mosaic_0001>
module attributes {stable_mosaic.version = 11 : i64} {
  func.func @_pgb_kernel(%arg0: i32, %arg1: memref<64x128xf32, #tpu.memory_space<vmem>>, %arg2: memref<64x128xf32, #tpu.memory_space<vmem>>, %arg3: memref<2048x64xf32, #tpu.memory_space<vmem>>, %arg4: memref<128x64xf32, #tpu.memory_space<vmem>>, %arg5: memref<64x2048xf32, #tpu.memory_space<vmem>>, %arg6: memref<64x128xf32, #tpu.memory_space<vmem>>, %arg7: memref<64x128xf32, #tpu.memory_space<vmem>>) attributes {dimension_semantics = [#tpu.dimension_semantics<parallel>], iteration_bounds = array<i64: 4>, scalar_prefetch = 0 : i64, scratch_operands = 1 : i64, tpu.core_type = #tpu.core_type<tc>, window_params = [{transform_indices = @transform_0, window_bounds = array<i64: 64, 128>}, {transform_indices = @transform_1, window_bounds = array<i64: 64, 128>}, {pipeline_mode = #tpu.pipeline_mode<synchronous>, transform_indices = @transform_2, window_bounds = array<i64: 2048, 64>}, {pipeline_mode = #tpu.pipeline_mode<synchronous>, transform_indices = @transform_3, window_bounds = array<i64: 128, 64>}, {pipeline_mode = #tpu.pipeline_mode<synchronous>, transform_indices = @transform_4, window_bounds = array<i64: 64, 2048>}, {transform_indices = @transform_5, window_bounds = array<i64: 64, 128>}]} {
    %c0 = arith.constant 0 : index
    %c0_0 = arith.constant 0 : index
    %0 = vector.load %arg1[%c0, %c0_0] : memref<64x128xf32, #tpu.memory_space<vmem>>, vector<64x128xf32>
    %c0_1 = arith.constant 0 : index
    %c0_2 = arith.constant 0 : index
    %1 = vector.load %arg2[%c0_1, %c0_2] : memref<64x128xf32, #tpu.memory_space<vmem>>, vector<64x128xf32>
    %c0_3 = arith.constant 0 : index
    %c0_4 = arith.constant 0 : index
    %2 = vector.load %arg4[%c0_3, %c0_4] : memref<128x64xf32, #tpu.memory_space<vmem>>, vector<128x64xf32>
    %cst = arith.constant dense<0.000000e+00> : vector<128x128xf32>
    %3 = tpu.matmul %2, %1, %cst {dimension_numbers = #tpu.dot_dimension_numbers<[1], [0], [0], [1], [0, 0, 1, 1], [], []>} : vector<128x64xf32>, vector<64x128xf32>, vector<128x128xf32> -> vector<128x128xf32>
    %cst_5 = arith.constant 0.000000e+00 : f32
    %4 = vector.broadcast %cst_5 : f32 to vector<64x128xf32>
    %c0_6 = arith.constant 0 : index
    %c0_7 = arith.constant 0 : index
    %5 = vector.load %arg7[%c0_6, %c0_7] : memref<64x128xf32, #tpu.memory_space<vmem>>, vector<64x128xf32>
    tpu.vector_store %arg7[%c0_6, %c0_7], %4 {strides = array<i32>} : memref<64x128xf32, #tpu.memory_space<vmem>>, vector<64x128xf32>,
    %c0_8 = arith.constant 0 : index
    %c0_9 = arith.constant 0 : index
    %6 = vector.load %arg3[%c0_8, %c0_9] : memref<2048x64xf32, #tpu.memory_space<vmem>>, vector<256x64xf32>
    %cst_10 = arith.constant dense<0.000000e+00> : vector<256x128xf32>
    %7 = tpu.matmul %6, %0, %cst_10 {dimension_numbers = #tpu.dot_dimension_numbers<[1], [0], [0], [1], [0, 0, 1, 1], [], []>} : vector<256x64xf32>, vector<64x128xf32>, vector<256x128xf32> -> vector<256x128xf32>
    %8 = vector.extract_strided_slice %3 {offsets = [0, 0], sizes = [16, 128], strides = [1, 1]} : vector<128x128xf32> to vector<16x128xf32>
    %9 = vector.shape_cast %7 : vector<256x128xf32> to vector<16x16x128xf32>
    %10 = vector.shape_cast %8 : vector<16x128xf32> to vector<1x16x128xf32>
    %11 = vector.broadcast %10 : vector<1x16x128xf32> to vector<16x16x128xf32>
    %12 = arith.mulf %9, %11 : vector<16x16x128xf32>
    %13 = vector.shape_cast %12 : vector<16x16x128xf32> to vector<256x128xf32>
    %c0_11 = arith.constant 0 : index
    %c0_12 = arith.constant 0 : index
    %14 = vector.load %arg7[%c0_11, %c0_12] : memref<64x128xf32, #tpu.memory_space<vmem>>, vector<64x128xf32>
    %c0_13 = arith.constant 0 : index
    %c0_14 = arith.constant 0 : index
    %15 = vector.load %arg5[%c0_13, %c0_14] : memref<64x2048xf32, #tpu.memory_space<vmem>>, vector<64x256xf32>
    %cst_15 = arith.constant dense<0.000000e+00> : vector<64x128xf32>
    %16 = tpu.matmul %15, %13, %cst_15 {dimension_numbers = #tpu.dot_dimension_numbers<[1], [0], [0], [1], [0, 0, 1, 1], [], []>} : vector<64x256xf32>, vector<256x128xf32>, vector<64x128xf32> -> vector<64x128xf32>
    %17 = arith.addf %14, %16 : vector<64x128xf32>
    %c0_16 = arith.constant 0 : index
    %c0_17 = arith.constant 0 : index
    %18 = vector.load %arg7[%c0_16, %c0_17] : memref<64x128xf32, #tpu.memory_space<vmem>>, vector<64x128xf32>
    tpu.vector_store %arg7[%c0_16, %c0_17], %17 {strides = array<i32>} : memref<64x128xf32, #tpu.memory_space<vmem>>, vector<64x128xf32>,
    %c256 = arith.constant 256 : index
    %c0_18 = arith.constant 0 : index
    %19 = vector.load %arg3[%c256, %c0_18] : memref<2048x64xf32, #tpu.memory_space<vmem>>, vector<256x64xf32>
    %cst_19 = arith.constant dense<0.000000e+00> : vector<256x128xf32>
    %20 = tpu.matmul %19, %0, %cst_19 {dimension_numbers = #tpu.dot_dimension_numbers<[1], [0], [0], [1], [0, 0, 1, 1], [], []>} : vector<256x64xf32>, vector<64x128xf32>, vector<256x128xf32> -> vector<256x128xf32>
    %21 = vector.extract_strided_slice %3 {offsets = [16, 0], sizes = [16, 128], strides = [1, 1]} : vector<128x128xf32> to vector<16x128xf32>
    %22 = vector.shape_cast %20 : vector<256x128xf32> to vector<16x16x128xf32>
    %23 = vector.shape_cast %21 : vector<16x128xf32> to vector<1x16x128xf32>
    %24 = vector.broadcast %23 : vector<1x16x128xf32> to vector<16x16x128xf32>
    %25 = arith.mulf %22, %24 : vector<16x16x128xf32>
    %26 = vector.shape_cast %25 : vector<16x16x128xf32> to vector<256x128xf32>
    %c0_20 = arith.constant 0 : index
    %c0_21 = arith.constant 0 : index
    %27 = vector.load %arg7[%c0_20, %c0_21] : memref<64x128xf32, #tpu.memory_space<vmem>>, vector<64x128xf32>
    %c0_22 = arith.constant 0 : index
    %c256_23 = arith.constant 256 : index
    %28 = vector.load %arg5[%c0_22, %c256_23] : memref<64x2048xf32, #tpu.memory_space<vmem>>, vector<64x256xf32>
    %cst_24 = arith.constant dense<0.000000e+00> : vector<64x128xf32>
    %29 = tpu.matmul %28, %26, %cst_24 {dimension_numbers = #tpu.dot_dimension_numbers<[1], [0], [0], [1], [0, 0, 1, 1], [], []>} : vector<64x256xf32>, vector<256x128xf32>, vector<64x128xf32> -> vector<64x128xf32>
    %30 = arith.addf %27, %29 : vector<64x128xf32>
    %c0_25 = arith.constant 0 : index
    %c0_26 = arith.constant 0 : index
    %31 = vector.load %arg7[%c0_25, %c0_26] : memref<64x128xf32, #tpu.memory_space<vmem>>, vector<64x128xf32>
    tpu.vector_store %arg7[%c0_25, %c0_26], %30 {strides = array<i32>} : memref<64x128xf32, #tpu.memory_space<vmem>>, vector<64x128xf32>,
    %c512 = arith.constant 512 : index
    %c0_27 = arith.constant 0 : index
    %32 = vector.load %arg3[%c512, %c0_27] : memref<2048x64xf32, #tpu.memory_space<vmem>>, vector<256x64xf32>
    %cst_28 = arith.constant dense<0.000000e+00> : vector<256x128xf32>
    %33 = tpu.matmul %32, %0, %cst_28 {dimension_numbers = #tpu.dot_dimension_numbers<[1], [0], [0], [1], [0, 0, 1, 1], [], []>} : vector<256x64xf32>, vector<64x128xf32>, vector<256x128xf32> -> vector<256x128xf32>
    %34 = vector.extract_strided_slice %3 {offsets = [32, 0], sizes = [16, 128], strides = [1, 1]} : vector<128x128xf32> to vector<16x128xf32>
    %35 = vector.shape_cast %33 : vector<256x128xf32> to vector<16x16x128xf32>
    %36 = vector.shape_cast %34 : vector<16x128xf32> to vector<1x16x128xf32>
    %37 = vector.broadcast %36 : vector<1x16x128xf32> to vector<16x16x128xf32>
    %38 = arith.mulf %35, %37 : vector<16x16x128xf32>
    %39 = vector.shape_cast %38 : vector<16x16x128xf32> to vector<256x128xf32>
    %c0_29 = arith.constant 0 : index
    %c0_30 = arith.constant 0 : index
    %40 = vector.load %arg7[%c0_29, %c0_30] : memref<64x128xf32, #tpu.memory_space<vmem>>, vector<64x128xf32>
    %c0_31 = arith.constant 0 : index
    %c512_32 = arith.constant 512 : index
    %41 = vector.load %arg5[%c0_31, %c512_32] : memref<64x2048xf32, #tpu.memory_space<vmem>>, vector<64x256xf32>
    %cst_33 = arith.constant dense<0.000000e+00> : vector<64x128xf32>
    %42 = tpu.matmul %41, %39, %cst_33 {dimension_numbers = #tpu.dot_dimension_numbers<[1], [0], [0], [1], [0, 0, 1, 1], [], []>} : vector<64x256xf32>, vector<256x128xf32>, vector<64x128xf32> -> vector<64x128xf32>
    %43 = arith.addf %40, %42 : vector<64x128xf32>
    %c0_34 = arith.constant 0 : index
    %c0_35 = arith.constant 0 : index
    %44 = vector.load %arg7[%c0_34, %c0_35] : memref<64x128xf32, #tpu.memory_space<vmem>>, vector<64x128xf32>
    tpu.vector_store %arg7[%c0_34, %c0_35], %43 {strides = array<i32>} : memref<64x128xf32, #tpu.memory_space<vmem>>, vector<64x128xf32>,
    %c768 = arith.constant 768 : index
    %c0_36 = arith.constant 0 : index
    %45 = vector.load %arg3[%c768, %c0_36] : memref<2048x64xf32, #tpu.memory_space<vmem>>, vector<256x64xf32>
    %cst_37 = arith.constant dense<0.000000e+00> : vector<256x128xf32>
    %46 = tpu.matmul %45, %0, %cst_37 {dimension_numbers = #tpu.dot_dimension_numbers<[1], [0], [0], [1], [0, 0, 1, 1], [], []>} : vector<256x64xf32>, vector<64x128xf32>, vector<256x128xf32> -> vector<256x128xf32>
    %47 = vector.extract_strided_slice %3 {offsets = [48, 0], sizes = [16, 128], strides = [1, 1]} : vector<128x128xf32> to vector<16x128xf32>
    %48 = vector.shape_cast %46 : vector<256x128xf32> to vector<16x16x128xf32>
    %49 = vector.shape_cast %47 : vector<16x128xf32> to vector<1x16x128xf32>
    %50 = vector.broadcast %49 : vector<1x16x128xf32> to vector<16x16x128xf32>
    %51 = arith.mulf %48, %50 : vector<16x16x128xf32>
    %52 = vector.shape_cast %51 : vector<16x16x128xf32> to vector<256x128xf32>
    %c0_38 = arith.constant 0 : index
    %c0_39 = arith.constant 0 : index
    %53 = vector.load %arg7[%c0_38, %c0_39] : memref<64x128xf32, #tpu.memory_space<vmem>>, vector<64x128xf32>
    %c0_40 = arith.constant 0 : index
    %c768_41 = arith.constant 768 : index
    %54 = vector.load %arg5[%c0_40, %c768_41] : memref<64x2048xf32, #tpu.memory_space<vmem>>, vector<64x256xf32>
    %cst_42 = arith.constant dense<0.000000e+00> : vector<64x128xf32>
    %55 = tpu.matmul %54, %52, %cst_42 {dimension_numbers = #tpu.dot_dimension_numbers<[1], [0], [0], [1], [0, 0, 1, 1], [], []>} : vector<64x256xf32>, vector<256x128xf32>, vector<64x128xf32> -> vector<64x128xf32>
    %56 = arith.addf %53, %55 : vector<64x128xf32>
    %c0_43 = arith.constant 0 : index
    %c0_44 = arith.constant 0 : index
    %57 = vector.load %arg7[%c0_43, %c0_44] : memref<64x128xf32, #tpu.memory_space<vmem>>, vector<64x128xf32>
    tpu.vector_store %arg7[%c0_43, %c0_44], %56 {strides = array<i32>} : memref<64x128xf32, #tpu.memory_space<vmem>>, vector<64x128xf32>,
    %c1024 = arith.constant 1024 : index
    %c0_45 = arith.constant 0 : index
    %58 = vector.load %arg3[%c1024, %c0_45] : memref<2048x64xf32, #tpu.memory_space<vmem>>, vector<256x64xf32>
    %cst_46 = arith.constant dense<0.000000e+00> : vector<256x128xf32>
    %59 = tpu.matmul %58, %0, %cst_46 {dimension_numbers = #tpu.dot_dimension_numbers<[1], [0], [0], [1], [0, 0, 1, 1], [], []>} : vector<256x64xf32>, vector<64x128xf32>, vector<256x128xf32> -> vector<256x128xf32>
    %60 = vector.extract_strided_slice %3 {offsets = [64, 0], sizes = [16, 128], strides = [1, 1]} : vector<128x128xf32> to vector<16x128xf32>
    %61 = vector.shape_cast %59 : vector<256x128xf32> to vector<16x16x128xf32>
    %62 = vector.shape_cast %60 : vector<16x128xf32> to vector<1x16x128xf32>
    %63 = vector.broadcast %62 : vector<1x16x128xf32> to vector<16x16x128xf32>
    %64 = arith.mulf %61, %63 : vector<16x16x128xf32>
    %65 = vector.shape_cast %64 : vector<16x16x128xf32> to vector<256x128xf32>
    %c0_47 = arith.constant 0 : index
    %c0_48 = arith.constant 0 : index
    %66 = vector.load %arg7[%c0_47, %c0_48] : memref<64x128xf32, #tpu.memory_space<vmem>>, vector<64x128xf32>
    %c0_49 = arith.constant 0 : index
    %c1024_50 = arith.constant 1024 : index
    %67 = vector.load %arg5[%c0_49, %c1024_50] : memref<64x2048xf32, #tpu.memory_space<vmem>>, vector<64x256xf32>
    %cst_51 = arith.constant dense<0.000000e+00> : vector<64x128xf32>
    %68 = tpu.matmul %67, %65, %cst_51 {dimension_numbers = #tpu.dot_dimension_numbers<[1], [0], [0], [1], [0, 0, 1, 1], [], []>} : vector<64x256xf32>, vector<256x128xf32>, vector<64x128xf32> -> vector<64x128xf32>
    %69 = arith.addf %66, %68 : vector<64x128xf32>
    %c0_52 = arith.constant 0 : index
    %c0_53 = arith.constant 0 : index
    %70 = vector.load %arg7[%c0_52, %c0_53] : memref<64x128xf32, #tpu.memory_space<vmem>>, vector<64x128xf32>
    tpu.vector_store %arg7[%c0_52, %c0_53], %69 {strides = array<i32>} : memref<64x128xf32, #tpu.memory_space<vmem>>, vector<64x128xf32>,
    %c1280 = arith.constant 1280 : index
    %c0_54 = arith.constant 0 : index
    %71 = vector.load %arg3[%c1280, %c0_54] : memref<2048x64xf32, #tpu.memory_space<vmem>>, vector<256x64xf32>
    %cst_55 = arith.constant dense<0.000000e+00> : vector<256x128xf32>
    %72 = tpu.matmul %71, %0, %cst_55 {dimension_numbers = #tpu.dot_dimension_numbers<[1], [0], [0], [1], [0, 0, 1, 1], [], []>} : vector<256x64xf32>, vector<64x128xf32>, vector<256x128xf32> -> vector<256x128xf32>
    %73 = vector.extract_strided_slice %3 {offsets = [80, 0], sizes = [16, 128], strides = [1, 1]} : vector<128x128xf32> to vector<16x128xf32>
    %74 = vector.shape_cast %72 : vector<256x128xf32> to vector<16x16x128xf32>
    %75 = vector.shape_cast %73 : vector<16x128xf32> to vector<1x16x128xf32>
    %76 = vector.broadcast %75 : vector<1x16x128xf32> to vector<16x16x128xf32>
    %77 = arith.mulf %74, %76 : vector<16x16x128xf32>
    %78 = vector.shape_cast %77 : vector<16x16x128xf32> to vector<256x128xf32>
    %c0_56 = arith.constant 0 : index
    %c0_57 = arith.constant 0 : index
    %79 = vector.load %arg7[%c0_56, %c0_57] : memref<64x128xf32, #tpu.memory_space<vmem>>, vector<64x128xf32>
    %c0_58 = arith.constant 0 : index
    %c1280_59 = arith.constant 1280 : index
    %80 = vector.load %arg5[%c0_58, %c1280_59] : memref<64x2048xf32, #tpu.memory_space<vmem>>, vector<64x256xf32>
    %cst_60 = arith.constant dense<0.000000e+00> : vector<64x128xf32>
    %81 = tpu.matmul %80, %78, %cst_60 {dimension_numbers = #tpu.dot_dimension_numbers<[1], [0], [0], [1], [0, 0, 1, 1], [], []>} : vector<64x256xf32>, vector<256x128xf32>, vector<64x128xf32> -> vector<64x128xf32>
    %82 = arith.addf %79, %81 : vector<64x128xf32>
    %c0_61 = arith.constant 0 : index
    %c0_62 = arith.constant 0 : index
    %83 = vector.load %arg7[%c0_61, %c0_62] : memref<64x128xf32, #tpu.memory_space<vmem>>, vector<64x128xf32>
    tpu.vector_store %arg7[%c0_61, %c0_62], %82 {strides = array<i32>} : memref<64x128xf32, #tpu.memory_space<vmem>>, vector<64x128xf32>,
    %c1536 = arith.constant 1536 : index
    %c0_63 = arith.constant 0 : index
    %84 = vector.load %arg3[%c1536, %c0_63] : memref<2048x64xf32, #tpu.memory_space<vmem>>, vector<256x64xf32>
    %cst_64 = arith.constant dense<0.000000e+00> : vector<256x128xf32>
    %85 = tpu.matmul %84, %0, %cst_64 {dimension_numbers = #tpu.dot_dimension_numbers<[1], [0], [0], [1], [0, 0, 1, 1], [], []>} : vector<256x64xf32>, vector<64x128xf32>, vector<256x128xf32> -> vector<256x128xf32>
    %86 = vector.extract_strided_slice %3 {offsets = [96, 0], sizes = [16, 128], strides = [1, 1]} : vector<128x128xf32> to vector<16x128xf32>
    %87 = vector.shape_cast %85 : vector<256x128xf32> to vector<16x16x128xf32>
    %88 = vector.shape_cast %86 : vector<16x128xf32> to vector<1x16x128xf32>
    %89 = vector.broadcast %88 : vector<1x16x128xf32> to vector<16x16x128xf32>
    %90 = arith.mulf %87, %89 : vector<16x16x128xf32>
    %91 = vector.shape_cast %90 : vector<16x16x128xf32> to vector<256x128xf32>
    %c0_65 = arith.constant 0 : index
    %c0_66 = arith.constant 0 : index
    %92 = vector.load %arg7[%c0_65, %c0_66] : memref<64x128xf32, #tpu.memory_space<vmem>>, vector<64x128xf32>
    %c0_67 = arith.constant 0 : index
    %c1536_68 = arith.constant 1536 : index
    %93 = vector.load %arg5[%c0_67, %c1536_68] : memref<64x2048xf32, #tpu.memory_space<vmem>>, vector<64x256xf32>
    %cst_69 = arith.constant dense<0.000000e+00> : vector<64x128xf32>
    %94 = tpu.matmul %93, %91, %cst_69 {dimension_numbers = #tpu.dot_dimension_numbers<[1], [0], [0], [1], [0, 0, 1, 1], [], []>} : vector<64x256xf32>, vector<256x128xf32>, vector<64x128xf32> -> vector<64x128xf32>
    %95 = arith.addf %92, %94 : vector<64x128xf32>
    %c0_70 = arith.constant 0 : index
    %c0_71 = arith.constant 0 : index
    %96 = vector.load %arg7[%c0_70, %c0_71] : memref<64x128xf32, #tpu.memory_space<vmem>>, vector<64x128xf32>
    tpu.vector_store %arg7[%c0_70, %c0_71], %95 {strides = array<i32>} : memref<64x128xf32, #tpu.memory_space<vmem>>, vector<64x128xf32>,
    %c1792 = arith.constant 1792 : index
    %c0_72 = arith.constant 0 : index
    %97 = vector.load %arg3[%c1792, %c0_72] : memref<2048x64xf32, #tpu.memory_space<vmem>>, vector<256x64xf32>
    %cst_73 = arith.constant dense<0.000000e+00> : vector<256x128xf32>
    %98 = tpu.matmul %97, %0, %cst_73 {dimension_numbers = #tpu.dot_dimension_numbers<[1], [0], [0], [1], [0, 0, 1, 1], [], []>} : vector<256x64xf32>, vector<64x128xf32>, vector<256x128xf32> -> vector<256x128xf32>
    %99 = vector.extract_strided_slice %3 {offsets = [112, 0], sizes = [16, 128], strides = [1, 1]} : vector<128x128xf32> to vector<16x128xf32>
    %100 = vector.shape_cast %98 : vector<256x128xf32> to vector<16x16x128xf32>
    %101 = vector.shape_cast %99 : vector<16x128xf32> to vector<1x16x128xf32>
    %102 = vector.broadcast %101 : vector<1x16x128xf32> to vector<16x16x128xf32>
    %103 = arith.mulf %100, %102 : vector<16x16x128xf32>
    %104 = vector.shape_cast %103 : vector<16x16x128xf32> to vector<256x128xf32>
    %c0_74 = arith.constant 0 : index
    %c0_75 = arith.constant 0 : index
    %105 = vector.load %arg7[%c0_74, %c0_75] : memref<64x128xf32, #tpu.memory_space<vmem>>, vector<64x128xf32>
    %c0_76 = arith.constant 0 : index
    %c1792_77 = arith.constant 1792 : index
    %106 = vector.load %arg5[%c0_76, %c1792_77] : memref<64x2048xf32, #tpu.memory_space<vmem>>, vector<64x256xf32>
    %cst_78 = arith.constant dense<0.000000e+00> : vector<64x128xf32>
    %107 = tpu.matmul %106, %104, %cst_78 {dimension_numbers = #tpu.dot_dimension_numbers<[1], [0], [0], [1], [0, 0, 1, 1], [], []>} : vector<64x256xf32>, vector<256x128xf32>, vector<64x128xf32> -> vector<64x128xf32>
    %108 = arith.addf %105, %107 : vector<64x128xf32>
    %c0_79 = arith.constant 0 : index
    %c0_80 = arith.constant 0 : index
    %109 = vector.load %arg7[%c0_79, %c0_80] : memref<64x128xf32, #tpu.memory_space<vmem>>, vector<64x128xf32>
    tpu.vector_store %arg7[%c0_79, %c0_80], %108 {strides = array<i32>} : memref<64x128xf32, #tpu.memory_space<vmem>>, vector<64x128xf32>,
    %c0_81 = arith.constant 0 : index
    %c0_82 = arith.constant 0 : index
    %110 = vector.load %arg7[%c0_81, %c0_82] : memref<64x128xf32, #tpu.memory_space<vmem>>, vector<64x128xf32>
    %c0_83 = arith.constant 0 : index
    %c0_84 = arith.constant 0 : index
    %111 = vector.load %arg6[%c0_83, %c0_84] : memref<64x128xf32, #tpu.memory_space<vmem>>, vector<64x128xf32>
    tpu.vector_store %arg6[%c0_83, %c0_84], %110 {strides = array<i32>} : memref<64x128xf32, #tpu.memory_space<vmem>>, vector<64x128xf32>,
    return
  }
  func.func @transform_0(%arg0: i32) -> (i32, i32) {
    %c0_i32 = arith.constant 0 : i32
    %c0_i32_0 = arith.constant 0 : i32
    return %c0_i32, %arg0 : i32, i32
  }
  func.func @transform_1(%arg0: i32) -> (i32, i32) {
    %c0_i32 = arith.constant 0 : i32
    %c0_i32_0 = arith.constant 0 : i32
    return %c0_i32, %arg0 : i32, i32
  }
  func.func @transform_2(%arg0: i32) -> (i32, i32) {
    %c0_i32 = arith.constant 0 : i32
    %c0_i32_0 = arith.constant 0 : i32
    %c0_i32_1 = arith.constant 0 : i32
    return %c0_i32, %c0_i32_0 : i32, i32
  }
  func.func @transform_3(%arg0: i32) -> (i32, i32) {
    %c0_i32 = arith.constant 0 : i32
    %c0_i32_0 = arith.constant 0 : i32
    %c0_i32_1 = arith.constant 0 : i32
    return %c0_i32, %c0_i32_0 : i32, i32
  }
  func.func @transform_4(%arg0: i32) -> (i32, i32) {
    %c0_i32 = arith.constant 0 : i32
    %c0_i32_0 = arith.constant 0 : i32
    %c0_i32_1 = arith.constant 0 : i32
    return %c0_i32, %c0_i32_0 : i32, i32
  }
  func.func @transform_5(%arg0: i32) -> (i32, i32) {
    %c0_i32 = arith.constant 0 : i32
    %c0_i32_0 = arith.constant 0 : i32
    return %c0_i32, %arg0 : i32, i32
  }
}

</mosaic_0001>

<llo_original>
// kernel: tpu_custom_call.1
$region0: #{tpu_custom_call.1}
  #allocation0 [shape = 'u32[]', space=smem, size = 0x4, offset = 0x4, fixed_abs, tag = 'smem constant byte address 0x4 - core index']
  #allocation1 [shape = 'u32[144,128]{1,0:T(1,128)}', space=vmem, size = 0x12000, scoped, tag = 'internal scratch']
  #allocation2 [shape = 'f32[64,128]{1,0:T(8,128)}', space=vmem, size = 0x8000, scoped, tag = 'scratch operand']
  %s0 = inlined_call_operand.vmem [shape: f32[64,512], index: 0, kind: input, shape index: {}]
  %s1 = inlined_call_operand.vmem [shape: f32[64,512], index: 1, kind: input, shape index: {}]
  %s2 = inlined_call_operand.vmem [shape: f32[2048,64], index: 2, kind: input, shape index: {}]
  %s3 = inlined_call_operand.vmem [shape: f32[128,64], index: 3, kind: input, shape index: {}]
  %s4 = inlined_call_operand.vmem [shape: f32[64,2048], index: 4, kind: input, shape index: {}]
  %s5 = inlined_call_operand.hbm [shape: f32[64,512], index: 5, kind: output, shape index: {}]
  %s6 = sld [smem:[#allocation0]]
  $region129: #{tpu_custom_call.1} parent=0
    _
  %s8 = ssub.s32 1, %s6
  %s9 = scalar_select 0, %s8, %s6
  $region1: #{tpu_custom_call.1} parent=0
    #allocation3 [shape = 'u8[65536]{0}', space=vmem, size = 0x10000, scoped, tag = 'input window, operand 0']
    #allocation4 [shape = 'u8[65536]{0}', space=vmem, size = 0x10000, scoped, tag = 'input window, operand 1']
    #allocation5 [shape = 'u8[65536]{0}', space=vmem, size = 0x10000, scoped, tag = 'output window, operand 0']
    #allocation6 [shape = 's32[2]{0}', space=sflag, size = 0x8, scoped, tag = 'scoped memory for tpu_custom_call.1']
    %10 = vsyncpa [#allocation6], 0
    %s11 = scalar_lea.sflag [#allocation6], 1
    %12 = vsyncpa %s11, 0
    loop: start=0, step=1, limit=6
    $region2: #{tpu_custom_call.1} parent=1 // loop_pre_header
      _
    $region3: #{tpu_custom_call.1} parent=1 // loop_header
      %s14 = sphi 0, %s18
      %p15 = scmp.ge.s32.totalorder %s14, 6
      %s24 = sphi 0, %s26
      %s27 = sphi 0, %s24
      %s28 = sphi 0, %s27
      %s44 = sphi 0, %s28
      %s50 = sphi 0, %s52
      %s53 = sphi 0, %s50
      %s54 = sphi 0, %s53
      %s70 = sphi 0, %s54
      %s74 = sphi 0, %s74
      %s76 = sphi 0, %s74
      %s77 = sphi 0, %s76
      %s91 = sphi 0, %s77
      %s95 = sphi 0, %s95
      %s97 = sphi 0, %s95
      %s98 = sphi 0, %s97
      %s112 = sphi 0, %s98
      %s116 = sphi 0, %s116
      %s118 = sphi 0, %s116
      %s119 = sphi 0, %s118
      %s133 = sphi 0, %s119
      %s139 = sphi 0, %s141
      %s142 = sphi 0, %s139
      %s143 = sphi 0, %s142
      %s159 = sphi 0, %s143
    $region4: #{tpu_custom_call.1} parent=1 // loop_header_branch
      %17 = sbr.rel (%p15) target = $region8
    $region5: #{tpu_custom_call.1} parent=1 // loop_body
      %s19 = ssub.s32 %s14, 1
      %s20 = ssub.s32 %s14, 2
      %s21 = sadd.s32 %s14, 1
      %s22 = ssub.s32 %s14, %s21
      %p23 = scmp.eq.s32.totalorder %s22, 0
      %s25 = sadd.s32 %s24, 1
      %s26 = scalar_select %p23, %s24, %s25
      %p29 = pneg %p23
      %p30 = scmp.eq.s32.totalorder %s14, 3
      %p31 = por %p29, %p30
      %p32 = scmp.ne.s32.totalorder %s24, %s27
      %p33 = scmp.eq.s32.totalorder %s14, 0
      %p34 = por %p32, %p33
      %p35 = scmp.ne.s32.totalorder %s24, %s27
      %p36 = scmp.eq.s32.totalorder %s19, 3
      %p37 = por %p35, %p36
      %p38 = scmp.ne.s32.totalorder %s27, %s28
      %p39 = scmp.eq.s32.totalorder %s19, 0
      %p40 = por %p38, %p39
      %p41 = scmp.ne.s32.totalorder %s27, %s28
      %p42 = scmp.eq.s32.totalorder %s20, 3
      %p43 = por %p41, %p42
      %p45 = scmp.ne.s32.totalorder %s28, %s44
      %p46 = scmp.eq.s32.totalorder %s20, 0
      %p47 = por %p45, %p46
      %s48 = ssub.s32 %s14, %s21
      %p49 = scmp.eq.s32.totalorder %s48, 0
      %s51 = sadd.s32 %s50, 1
      %s52 = scalar_select %p49, %s50, %s51
      %p55 = pneg %p49
      %p56 = scmp.eq.s32.totalorder %s14, 3
      %p57 = por %p55, %p56
      %p58 = scmp.ne.s32.totalorder %s50, %s53
      %p59 = scmp.eq.s32.totalorder %s14, 0
      %p60 = por %p58, %p59
      %p61 = scmp.ne.s32.totalorder %s50, %s53
      %p62 = scmp.eq.s32.totalorder %s19, 3
      %p63 = por %p61, %p62
      %p64 = scmp.ne.s32.totalorder %s53, %s54
      %p65 = scmp.eq.s32.totalorder %s19, 0
      %p66 = por %p64, %p65
      %p67 = scmp.ne.s32.totalorder %s53, %s54
      %p68 = scmp.eq.s32.totalorder %s20, 3
      %p69 = por %p67, %p68
      %p71 = scmp.ne.s32.totalorder %s54, %s70
      %p72 = scmp.eq.s32.totalorder %s20, 0
      %p73 = por %p71, %p72
      %s75 = sadd.s32 %s74, 1
      %p78 = scmp.eq.s32.totalorder %s14, 3
      %p79 = scmp.ne.s32.totalorder %s74, %s76
      %p80 = scmp.eq.s32.totalorder %s14, 0
      %p81 = por %p79, %p80
      %p82 = scmp.ne.s32.totalorder %s74, %s76
      %p83 = scmp.eq.s32.totalorder %s19, 3
      %p84 = por %p82, %p83
      %p85 = scmp.ne.s32.totalorder %s76, %s77
      %p86 = scmp.eq.s32.totalorder %s19, 0
      %p87 = por %p85, %p86
      %p88 = scmp.ne.s32.totalorder %s76, %s77
      %p89 = scmp.eq.s32.totalorder %s20, 3
      %p90 = por %p88, %p89
      %p92 = scmp.ne.s32.totalorder %s77, %s91
      %p93 = scmp.eq.s32.totalorder %s20, 0
      %p94 = por %p92, %p93
      %s96 = sadd.s32 %s95, 1
      %p99 = scmp.eq.s32.totalorder %s14, 3
      %p100 = scmp.ne.s32.totalorder %s95, %s97
      %p101 = scmp.eq.s32.totalorder %s14, 0
      %p102 = por %p100, %p101
      %p103 = scmp.ne.s32.totalorder %s95, %s97
      %p104 = scmp.eq.s32.totalorder %s19, 3
      %p105 = por %p103, %p104
      %p106 = scmp.ne.s32.totalorder %s97, %s98
      %p107 = scmp.eq.s32.totalorder %s19, 0
      %p108 = por %p106, %p107
      %p109 = scmp.ne.s32.totalorder %s97, %s98
      %p110 = scmp.eq.s32.totalorder %s20, 3
      %p111 = por %p109, %p110
      %p113 = scmp.ne.s32.totalorder %s98, %s112
      %p114 = scmp.eq.s32.totalorder %s20, 0
      %p115 = por %p113, %p114
      %s117 = sadd.s32 %s116, 1
      %p120 = scmp.eq.s32.totalorder %s14, 3
      %p121 = scmp.ne.s32.totalorder %s116, %s118
      %p122 = scmp.eq.s32.totalorder %s14, 0
      %p123 = por %p121, %p122
      %p124 = scmp.ne.s32.totalorder %s116, %s118
      %p125 = scmp.eq.s32.totalorder %s19, 3
      %p126 = por %p124, %p125
      %p127 = scmp.ne.s32.totalorder %s118, %s119
      %p128 = scmp.eq.s32.totalorder %s19, 0
      %p129 = por %p127, %p128
      %p130 = scmp.ne.s32.totalorder %s118, %s119
      %p131 = scmp.eq.s32.totalorder %s20, 3
      %p132 = por %p130, %p131
      %p134 = scmp.ne.s32.totalorder %s119, %s133
      %p135 = scmp.eq.s32.totalorder %s20, 0
      %p136 = por %p134, %p135
      %s137 = ssub.s32 %s14, %s21
      %p138 = scmp.eq.s32.totalorder %s137, 0
      %s140 = sadd.s32 %s139, 1
      %s141 = scalar_select %p138, %s139, %s140
      %p144 = pneg %p138
      %p145 = scmp.eq.s32.totalorder %s14, 3
      %p146 = por %p144, %p145
      %p147 = scmp.ne.s32.totalorder %s139, %s142
      %p148 = scmp.eq.s32.totalorder %s14, 0
      %p149 = por %p147, %p148
      %p150 = scmp.ne.s32.totalorder %s139, %s142
      %p151 = scmp.eq.s32.totalorder %s19, 3
      %p152 = por %p150, %p151
      %p153 = scmp.ne.s32.totalorder %s142, %s143
      %p154 = scmp.eq.s32.totalorder %s19, 0
      %p155 = por %p153, %p154
      %p156 = scmp.ne.s32.totalorder %s142, %s143
      %p157 = scmp.eq.s32.totalorder %s20, 3
      %p158 = por %p156, %p157
      %p160 = scmp.ne.s32.totalorder %s143, %s159
      %p161 = scmp.eq.s32.totalorder %s20, 0
      %p162 = por %p160, %p161
      %p163 = scmp.le.s32.totalorder 1, %s14
      %p164 = scmp.lt.s32.totalorder %s14, 5
      %p165 = pnand %p163, %p164
      %p166 = pneg %p165
      // Predicated region
      $region9: #{tpu_custom_call.1} parent=5 // pred_check
        _
      $region10: #{tpu_custom_call.1} parent=5 // pred_check_branch
        %168 = sbr.rel (%p165) target = $region12
      $region11: #{tpu_custom_call.1} parent=5 // pred_region
        %s169 = ssub.s32 %s14, 1
        // Predicated region
        $region13: #{tpu_custom_call.1} parent=11 // pred_check
          %p170 = pneg %p87
        $region14: #{tpu_custom_call.1} parent=11 // pred_check_branch
          %172 = sbr.rel (%p170) target = $region16
        $region15: #{tpu_custom_call.1} parent=11 // pred_region
          _
        $region16: #{tpu_custom_call.1} parent=11 // pred_fallthru
          _
        // Predicated region
        $region17: #{tpu_custom_call.1} parent=11 // pred_check
          %p173 = pneg %p108
        $region18: #{tpu_custom_call.1} parent=11 // pred_check_branch
          %175 = sbr.rel (%p173) target = $region20
        $region19: #{tpu_custom_call.1} parent=11 // pred_region
          _
        $region20: #{tpu_custom_call.1} parent=11 // pred_fallthru
          _
        // Predicated region
        $region21: #{tpu_custom_call.1} parent=11 // pred_check
          %p176 = pneg %p129
        $region22: #{tpu_custom_call.1} parent=11 // pred_check_branch
          %178 = sbr.rel (%p176) target = $region24
        $region23: #{tpu_custom_call.1} parent=11 // pred_region
          _
        $region24: #{tpu_custom_call.1} parent=11 // pred_fallthru
          _
      $region12: #{tpu_custom_call.1} parent=5 // pred_fallthru
        _
      %p179 = scmp.lt.s32.totalorder %s14, 4
      // Predicated region
      $region25: #{tpu_custom_call.1} parent=5 // pred_check
        %p180 = pneg %p179
      $region26: #{tpu_custom_call.1} parent=5 // pred_check_branch
        %182 = sbr.rel (%p180) target = $region28
      $region27: #{tpu_custom_call.1} parent=5 // pred_region
        // Predicated region
        $region29: #{tpu_custom_call.1} parent=27 // pred_check
          %p183 = pneg %p34
        $region30: #{tpu_custom_call.1} parent=27 // pred_check_branch
          %185 = sbr.rel (%p183) target = $region32
        $region31: #{tpu_custom_call.1} parent=27 // pred_region
          %s186 = sand.u32 %s24, 1
          %s187 = sand.u32 %s24, 1
          %s188 = smul.addr %s187, 64
          %s189 = scalar_lea.vmem [#allocation3], %s188
          %s190 = smul.addr %s14, 8
          %s191 = scalar_lea.vmem %s0, %s190
          // Predicated region
          $region33: #{tpu_custom_call.1} parent=31 // pred_check
            _
          $region34: #{tpu_custom_call.1} parent=31 // pred_check_branch
            %193 = sbr.rel (0) target = $region36
          $region35: #{tpu_custom_call.1} parent=31 // pred_region
            // Predicated region
            $region37: #{tpu_custom_call.1} parent=35 // pred_check
              _
            $region38: #{tpu_custom_call.1} parent=35 // pred_check_branch
              %195 = sbr.rel (0) target = $region40
            $region39: #{tpu_custom_call.1} parent=35 // pred_region
              // Predicated region
              $region52: #{tpu_custom_call.1} parent=39 // pred_check
                _
              $region53: #{tpu_custom_call.1} parent=39 // pred_check_branch
                %224 = sbr.rel (0) target = $region55
              $region54: #{tpu_custom_call.1} parent=39 // pred_region
                loop: start=0, step=1, limit=1
                $region56: #{tpu_custom_call.1} parent=54 // loop_pre_header
                  _
                $region57: #{tpu_custom_call.1} parent=54 // loop_header
                  %s226 = sphi 0, %s230
                  %p227 = scmp.ge.s32.totalorder %s226, 1
                  %s231 = sphi %s191, %s191
                  %s232 = sphi %s189, %s189
                $region58: #{tpu_custom_call.1} parent=54 // loop_header_branch
                  %229 = sbr.rel (%p227) target = $region62
                $region59: #{tpu_custom_call.1} parent=54 // loop_body
                  %v233 = vld [vmem:[%s231] sm:$0xff]
                  %234 = vst [vmem:[%s232] sm:$0xff] %v233
                  %v235 = vld [vmem:[%s231 + $0x20] sm:$0xff]
                  %236 = vst [vmem:[%s232 + $0x8] sm:$0xff] %v235
                  %v237 = vld [vmem:[%s231 + $0x40] sm:$0xff]
                  %238 = vst [vmem:[%s232 + $0x10] sm:$0xff] %v237
                  %v239 = vld [vmem:[%s231 + $0x60] sm:$0xff]
                  %240 = vst [vmem:[%s232 + $0x18] sm:$0xff] %v239
                  %v241 = vld [vmem:[%s231 + $0x80] sm:$0xff]
                  %242 = vst [vmem:[%s232 + $0x20] sm:$0xff] %v241
                  %v243 = vld [vmem:[%s231 + $0xa0] sm:$0xff]
                  %244 = vst [vmem:[%s232 + $0x28] sm:$0xff] %v243
                  %v245 = vld [vmem:[%s231 + $0xc0] sm:$0xff]
                  %246 = vst [vmem:[%s232 + $0x30] sm:$0xff] %v245
                  %v247 = vld [vmem:[%s231 + $0xe0] sm:$0xff]
                  %248 = vst [vmem:[%s232 + $0x38] sm:$0xff] %v247
                $region60: #{tpu_custom_call.1} parent=54 // loop_footer
                  %s230 = sadd.s32 1, %s226
                $region61: #{tpu_custom_call.1} parent=54 // loop_footer_branch
                  %225 = sbr.rel target = $region57
                $region62: #{tpu_custom_call.1} parent=54 // loop_exit
                  _
              $region55: #{tpu_custom_call.1} parent=39 // pred_fallthru
                _
              // Predicated region
              $region63: #{tpu_custom_call.1} parent=39 // pred_check
                _
              $region64: #{tpu_custom_call.1} parent=39 // pred_check_branch
                %250 = sbr.rel target = $region66
              $region65: #{tpu_custom_call.1} parent=39 // pred_region
                _
              $region66: #{tpu_custom_call.1} parent=39 // pred_fallthru
                _
            $region40: #{tpu_custom_call.1} parent=35 // pred_fallthru
              _
            // Predicated region
            $region41: #{tpu_custom_call.1} parent=35 // pred_check
              _
            $region42: #{tpu_custom_call.1} parent=35 // pred_check_branch
              %197 = sbr.rel target = $region44
            $region43: #{tpu_custom_call.1} parent=35 // pred_region
              loop: start=0, step=1, limit=1
              $region45: #{tpu_custom_call.1} parent=43 // loop_pre_header
                _
              $region46: #{tpu_custom_call.1} parent=43 // loop_header
                %s200 = sphi 0, %s204
                %p201 = scmp.ge.s32.totalorder %s200, 1
                %s205 = sphi %s191, %s191
                %s206 = sphi %s189, %s189
              $region47: #{tpu_custom_call.1} parent=43 // loop_header_branch
                %203 = sbr.rel (%p201) target = $region51
              $region48: #{tpu_custom_call.1} parent=43 // loop_body
                %v207 = vld [vmem:[%s205] sm:$0xff]
                %208 = vst [vmem:[%s206] sm:$0xff] %v207
                %v209 = vld [vmem:[%s205 + $0x20] sm:$0xff]
                %210 = vst [vmem:[%s206 + $0x8] sm:$0xff] %v209
                %v211 = vld [vmem:[%s205 + $0x40] sm:$0xff]
                %212 = vst [vmem:[%s206 + $0x10] sm:$0xff] %v211
                %v213 = vld [vmem:[%s205 + $0x60] sm:$0xff]
                %214 = vst [vmem:[%s206 + $0x18] sm:$0xff] %v213
                %v215 = vld [vmem:[%s205 + $0x80] sm:$0xff]
                %216 = vst [vmem:[%s206 + $0x20] sm:$0xff] %v215
                %v217 = vld [vmem:[%s205 + $0xa0] sm:$0xff]
                %218 = vst [vmem:[%s206 + $0x28] sm:$0xff] %v217
                %v219 = vld [vmem:[%s205 + $0xc0] sm:$0xff]
                %220 = vst [vmem:[%s206 + $0x30] sm:$0xff] %v219
                %v221 = vld [vmem:[%s205 + $0xe0] sm:$0xff]
                %222 = vst [vmem:[%s206 + $0x38] sm:$0xff] %v221
              $region49: #{tpu_custom_call.1} parent=43 // loop_footer
                %s204 = sadd.s32 1, %s200
              $region50: #{tpu_custom_call.1} parent=43 // loop_footer_branch
                %199 = sbr.rel target = $region46
              $region51: #{tpu_custom_call.1} parent=43 // loop_exit
                _
            $region44: #{tpu_custom_call.1} parent=35 // pred_fallthru
              _
          $region36: #{tpu_custom_call.1} parent=31 // pred_fallthru
            _
          %251 = vnop
        $region32: #{tpu_custom_call.1} parent=27 // pred_fallthru
          _
        // Predicated region
        $region67: #{tpu_custom_call.1} parent=27 // pred_check
          %p252 = pneg %p60
        $region68: #{tpu_custom_call.1} parent=27 // pred_check_branch
          %254 = sbr.rel (%p252) target = $region70
        $region69: #{tpu_custom_call.1} parent=27 // pred_region
          %s255 = sand.u32 %s50, 1
          %s256 = sand.u32 %s50, 1
          %s257 = smul.addr %s256, 64
          %s258 = scalar_lea.vmem [#allocation4], %s257
          %s259 = smul.addr %s14, 8
          %s260 = scalar_lea.vmem %s1, %s259
          // Predicated region
          $region71: #{tpu_custom_call.1} parent=69 // pred_check
            _
          $region72: #{tpu_custom_call.1} parent=69 // pred_check_branch
            %262 = sbr.rel (0) target = $region74
          $region73: #{tpu_custom_call.1} parent=69 // pred_region
            // Predicated region
            $region75: #{tpu_custom_call.1} parent=73 // pred_check
              _
            $region76: #{tpu_custom_call.1} parent=73 // pred_check_branch
              %264 = sbr.rel (0) target = $region78
            $region77: #{tpu_custom_call.1} parent=73 // pred_region
              // Predicated region
              $region90: #{tpu_custom_call.1} parent=77 // pred_check
                _
              $region91: #{tpu_custom_call.1} parent=77 // pred_check_branch
                %293 = sbr.rel (0) target = $region93
              $region92: #{tpu_custom_call.1} parent=77 // pred_region
                loop: start=0, step=1, limit=1
                $region94: #{tpu_custom_call.1} parent=92 // loop_pre_header
                  _
                $region95: #{tpu_custom_call.1} parent=92 // loop_header
                  %s295 = sphi 0, %s299
                  %p296 = scmp.ge.s32.totalorder %s295, 1
                  %s300 = sphi %s260, %s260
                  %s301 = sphi %s258, %s258
                $region96: #{tpu_custom_call.1} parent=92 // loop_header_branch
                  %298 = sbr.rel (%p296) target = $region100
                $region97: #{tpu_custom_call.1} parent=92 // loop_body
                  %v302 = vld [vmem:[%s300] sm:$0xff]
                  %303 = vst [vmem:[%s301] sm:$0xff] %v302
                  %v304 = vld [vmem:[%s300 + $0x20] sm:$0xff]
                  %305 = vst [vmem:[%s301 + $0x8] sm:$0xff] %v304
                  %v306 = vld [vmem:[%s300 + $0x40] sm:$0xff]
                  %307 = vst [vmem:[%s301 + $0x10] sm:$0xff] %v306
                  %v308 = vld [vmem:[%s300 + $0x60] sm:$0xff]
                  %309 = vst [vmem:[%s301 + $0x18] sm:$0xff] %v308
                  %v310 = vld [vmem:[%s300 + $0x80] sm:$0xff]
                  %311 = vst [vmem:[%s301 + $0x20] sm:$0xff] %v310
                  %v312 = vld [vmem:[%s300 + $0xa0] sm:$0xff]
                  %313 = vst [vmem:[%s301 + $0x28] sm:$0xff] %v312
                  %v314 = vld [vmem:[%s300 + $0xc0] sm:$0xff]
                  %315 = vst [vmem:[%s301 + $0x30] sm:$0xff] %v314
                  %v316 = vld [vmem:[%s300 + $0xe0] sm:$0xff]
                  %317 = vst [vmem:[%s301 + $0x38] sm:$0xff] %v316
                $region98: #{tpu_custom_call.1} parent=92 // loop_footer
                  %s299 = sadd.s32 1, %s295
                $region99: #{tpu_custom_call.1} parent=92 // loop_footer_branch
                  %294 = sbr.rel target = $region95
                $region100: #{tpu_custom_call.1} parent=92 // loop_exit
                  _
              $region93: #{tpu_custom_call.1} parent=77 // pred_fallthru
                _
              // Predicated region
              $region101: #{tpu_custom_call.1} parent=77 // pred_check
                _
              $region102: #{tpu_custom_call.1} parent=77 // pred_check_branch
                %319 = sbr.rel target = $region104
              $region103: #{tpu_custom_call.1} parent=77 // pred_region
                _
              $region104: #{tpu_custom_call.1} parent=77 // pred_fallthru
                _
            $region78: #{tpu_custom_call.1} parent=73 // pred_fallthru
              _
            // Predicated region
            $region79: #{tpu_custom_call.1} parent=73 // pred_check
              _
            $region80: #{tpu_custom_call.1} parent=73 // pred_check_branch
              %266 = sbr.rel target = $region82
            $region81: #{tpu_custom_call.1} parent=73 // pred_region
              loop: start=0, step=1, limit=1
              $region83: #{tpu_custom_call.1} parent=81 // loop_pre_header
                _
              $region84: #{tpu_custom_call.1} parent=81 // loop_header
                %s269 = sphi 0, %s273
                %p270 = scmp.ge.s32.totalorder %s269, 1
                %s274 = sphi %s260, %s260
                %s275 = sphi %s258, %s258
              $region85: #{tpu_custom_call.1} parent=81 // loop_header_branch
                %272 = sbr.rel (%p270) target = $region89
              $region86: #{tpu_custom_call.1} parent=81 // loop_body
                %v276 = vld [vmem:[%s274] sm:$0xff]
                %277 = vst [vmem:[%s275] sm:$0xff] %v276
                %v278 = vld [vmem:[%s274 + $0x20] sm:$0xff]
                %279 = vst [vmem:[%s275 + $0x8] sm:$0xff] %v278
                %v280 = vld [vmem:[%s274 + $0x40] sm:$0xff]
                %281 = vst [vmem:[%s275 + $0x10] sm:$0xff] %v280
                %v282 = vld [vmem:[%s274 + $0x60] sm:$0xff]
                %283 = vst [vmem:[%s275 + $0x18] sm:$0xff] %v282
                %v284 = vld [vmem:[%s274 + $0x80] sm:$0xff]
                %285 = vst [vmem:[%s275 + $0x20] sm:$0xff] %v284
                %v286 = vld [vmem:[%s274 + $0xa0] sm:$0xff]
                %287 = vst [vmem:[%s275 + $0x28] sm:$0xff] %v286
                %v288 = vld [vmem:[%s274 + $0xc0] sm:$0xff]
                %289 = vst [vmem:[%s275 + $0x30] sm:$0xff] %v288
                %v290 = vld [vmem:[%s274 + $0xe0] sm:$0xff]
                %291 = vst [vmem:[%s275 + $0x38] sm:$0xff] %v290
              $region87: #{tpu_custom_call.1} parent=81 // loop_footer
                %s273 = sadd.s32 1, %s269
              $region88: #{tpu_custom_call.1} parent=81 // loop_footer_branch
                %268 = sbr.rel target = $region84
              $region89: #{tpu_custom_call.1} parent=81 // loop_exit
                _
            $region82: #{tpu_custom_call.1} parent=73 // pred_fallthru
              _
          $region74: #{tpu_custom_call.1} parent=69 // pred_fallthru
            _
          %320 = vnop
        $region70: #{tpu_custom_call.1} parent=27 // pred_fallthru
          _
      $region28: #{tpu_custom_call.1} parent=5 // pred_fallthru
        _
      %p321 = scmp.le.s32.totalorder 1, %s14
      %p322 = scmp.lt.s32.totalorder %s14, 5
      %p323 = pnand %p321, %p322
      %p324 = pneg %p323
      // Predicated region
      $region105: #{tpu_custom_call.1} parent=5 // pred_check
        _
      $region106: #{tpu_custom_call.1} parent=5 // pred_check_branch
        %326 = sbr.rel (%p323) target = $region108
      $region107: #{tpu_custom_call.1} parent=5 // pred_region
        %s327 = ssub.s32 %s14, 1
        %s328 = sand.u32 %s27, 1
        %s329 = sand.u32 %s27, 1
        %s330 = smul.addr %s329, 64
        %s331 = scalar_lea.vmem [#allocation3], %s330
        // Predicated region
        $region109: #{tpu_custom_call.1} parent=107 // pred_check
          %p332 = pneg %p40
        $region110: #{tpu_custom_call.1} parent=107 // pred_check_branch
          %334 = sbr.rel (%p332) target = $region112
        $region111: #{tpu_custom_call.1} parent=107 // pred_region
          _
        $region112: #{tpu_custom_call.1} parent=107 // pred_fallthru
          _
        %s335 = sand.u32 %s53, 1
        %s336 = sand.u32 %s53, 1
        %s337 = smul.addr %s336, 64
        %s338 = scalar_lea.vmem [#allocation4], %s337
        // Predicated region
        $region113: #{tpu_custom_call.1} parent=107 // pred_check
          %p339 = pneg %p66
        $region114: #{tpu_custom_call.1} parent=107 // pred_check_branch
          %341 = sbr.rel (%p339) target = $region116
        $region115: #{tpu_custom_call.1} parent=107 // pred_region
          _
        $region116: #{tpu_custom_call.1} parent=107 // pred_fallthru
          _
        %s342 = sand.u32 %s27, 1
        %s343 = sand.u32 %s27, 1
        %s344 = smul.addr %s343, 64
        %s345 = scalar_lea.vmem [#allocation3], %s344
        %p346 = pneg %p40
        %p347 = pneg %p37
        %s348 = sand.u32 %s53, 1
        %s349 = sand.u32 %s53, 1
        %s350 = smul.addr %s349, 64
        %s351 = scalar_lea.vmem [#allocation4], %s350
        %p352 = pneg %p66
        %p353 = pneg %p63
        %p354 = pneg %p87
        %p355 = pneg %p84
        %p356 = pneg %p108
        %p357 = pneg %p105
        %p358 = pneg %p129
        %p359 = pneg %p126
        %p360 = pneg %p155
        %p361 = pneg %p152
        %s362 = sand.u32 %s142, 1
        %s363 = scalar_lea.sflag [#allocation6], %s362
        %s364 = sand.u32 %s142, 1
        %s365 = smul.addr %s364, 64
        %s366 = scalar_lea.vmem [#allocation5], %s365
        %v367 = vld [vmem:[%s331] sm:$0xff]
        %v368 = vld [vmem:[%s331 + $0x8] sm:$0xff]
        %v369 = vld [vmem:[%s331 + $0x10] sm:$0xff]
        %v370 = vld [vmem:[%s331 + $0x18] sm:$0xff]
        %v371 = vld [vmem:[%s331 + $0x20] sm:$0xff]
        %v372 = vld [vmem:[%s331 + $0x28] sm:$0xff]
        %v373 = vld [vmem:[%s331 + $0x30] sm:$0xff]
        %v374 = vld [vmem:[%s331 + $0x38] sm:$0xff]
        %v375 = vld [vmem:[%s338] sm:$0xff]
        %v376 = vld [vmem:[%s338 + $0x8] sm:$0xff]
        %v377 = vld [vmem:[%s338 + $0x10] sm:$0xff]
        %v378 = vld [vmem:[%s338 + $0x18] sm:$0xff]
        %v379 = vld [vmem:[%s338 + $0x20] sm:$0xff]
        %v380 = vld [vmem:[%s338 + $0x28] sm:$0xff]
        %v381 = vld [vmem:[%s338 + $0x30] sm:$0xff]
        %v382 = vld [vmem:[%s338 + $0x38] sm:$0xff]
        %v383 = vld [vmem:[%s3] sm:$0xff]
        %v384 = vld [vmem:[%s3 + $0x8] sm:$0xff]
        %v385 = vld [vmem:[%s3 + $0x10] sm:$0xff]
        %v386 = vld [vmem:[%s3 + $0x18] sm:$0xff]
        %v387 = vld [vmem:[%s3 + $0x20] sm:$0xff]
        %v388 = vld [vmem:[%s3 + $0x28] sm:$0xff]
        %v389 = vld [vmem:[%s3 + $0x30] sm:$0xff]
        %v390 = vld [vmem:[%s3 + $0x38] sm:$0xff]
        %v391 = vld [vmem:[%s3 + $0x40] sm:$0xff]
        %v392 = vld [vmem:[%s3 + $0x48] sm:$0xff]
        %v393 = vld [vmem:[%s3 + $0x50] sm:$0xff]
        %v394 = vld [vmem:[%s3 + $0x58] sm:$0xff]
        %v395 = vld [vmem:[%s3 + $0x60] sm:$0xff]
        %v396 = vld [vmem:[%s3 + $0x68] sm:$0xff]
        %v397 = vld [vmem:[%s3 + $0x70] sm:$0xff]
        %v398 = vld [vmem:[%s3 + $0x78] sm:$0xff]
        %vm399 = vcmask 523264
        %v401 = vsel %vm399, %v383, 0
        %v404 = vsel %vm399, %v384, 0
        %v407 = vsel %vm399, %v385, 0
        %v410 = vsel %vm399, %v386, 0
        %v413 = vsel %vm399, %v387, 0
        %v416 = vsel %vm399, %v388, 0
        %v419 = vsel %vm399, %v389, 0
        %v422 = vsel %vm399, %v390, 0
        %v425 = vsel %vm399, %v391, 0
        %v428 = vsel %vm399, %v392, 0
        %v431 = vsel %vm399, %v393, 0
        %v434 = vsel %vm399, %v394, 0
        %v437 = vsel %vm399, %v395, 0
        %v440 = vsel %vm399, %v396, 0
        %v443 = vsel %vm399, %v397, 0
        %v446 = vsel %vm399, %v398, 0
        %448 = vmatprep.subr.mxu0 0.0
        %449 = vmatpush1.msra.mxu0 %v375
        %450 = vmatprep.subr.mxu0 0.0
        %451 = vmatpush1.msra.mxu0 %v376
        %452 = vmatprep.subr.mxu0 0.0
        %453 = vmatpush1.msra.mxu0 %v377
        %454 = vmatprep.subr.mxu0 0.0
        %455 = vmatpush1.msra.mxu0 %v378
        %456 = vmatprep.subr.mxu0 0.0
        %457 = vmatpush1.msra.mxu0 %v379
        %458 = vmatprep.subr.mxu0 0.0
        %459 = vmatpush1.msra.mxu0 %v380
        %460 = vmatprep.subr.mxu0 0.0
        %461 = vmatpush1.msra.mxu0 %v381
        %462 = vmatprep.subr.mxu0 0.0
        %463 = vmatpush1.msra.mxu0 %v382
        %464 = vmatprep.subr.mxu0 0.0
        %465 = vmatpush1.msra.mxu0 0.0
        %466 = vmatprep.subr.mxu0 0.0
        %467 = vmatpush1.msra.mxu0 0.0
        %468 = vmatprep.subr.mxu0 0.0
        %469 = vmatpush1.msra.mxu0 0.0
        %470 = vmatprep.subr.mxu0 0.0
        %471 = vmatpush1.msra.mxu0 0.0
        %472 = vmatprep.subr.mxu0 0.0
        %473 = vmatpush1.msra.mxu0 0.0
        %474 = vmatprep.subr.mxu0 0.0
        %475 = vmatpush1.msra.mxu0 0.0
        %476 = vmatprep.subr.mxu0 0.0
        %477 = vmatpush1.msra.mxu0 0.0
        %478 = vmatprep.subr.mxu0 0.0
        %479 = vmatpush1.msra.mxu0 0.0
        %480 = vmatprep.subr.mxu0 0.0
        %481 = vmatpush1.msra.mxu0 0.0
        %482 = vmatprep.subr.mxu0 0.0
        %483 = vmatpush1.msra.mxu0 0.0
        %484 = vmatprep.subr.mxu0 0.0
        %485 = vmatpush1.msra.mxu0 0.0
        %486 = vmatprep.subr.mxu0 0.0
        %487 = vmatpush1.msra.mxu0 0.0
        %488 = vmatprep.subr.mxu0 0.0
        %489 = vmatpush1.msra.mxu0 0.0
        %490 = vmatprep.subr.mxu0 0.0
        %491 = vmatpush1.msra.mxu0 0.0
        %492 = vmatprep.subr.mxu0 0.0
        %493 = vmatpush1.msra.mxu0 0.0
        %494 = vmatprep.subr.mxu0 0.0
        %495 = vmatpush1.msra.mxu0 0.0
        %496 = vmatprep.subr.mxu0 0.0
        %497 = vmatpush1.msra.mxu0 0.0
        %498 = vmatprep.subr.mxu0 0.0
        %499 = vmatpush1.msra.mxu0 0.0
        %500 = vmatprep.subr.mxu0 0.0
        %501 = vmatpush1.msra.mxu0 0.0
        %502 = vmatprep.subr.mxu0 0.0
        %503 = vmatpush1.msra.mxu0 0.0
        %504 = vmatprep.subr.mxu0 0.0
        %505 = vmatpush1.msra.mxu0 0.0
        %506 = vmatprep.subr.mxu0 0.0
        %507 = vmatpush1.msra.mxu0 0.0
        %508 = vmatprep.subr.mxu0 0.0
        %509 = vmatpush1.msra.mxu0 0.0
        %510 = vmatprep.subr.mxu0 0.0
        %511 = vmatpush1.msra.mxu0 0.0
        %512 = vmatprep.mubr.f32.mxu0 0.0
        %513 = vmatmul.mubr.f32.gmra.mrb[0].mxu0 %v401
        %v514 = vpop.f32.mrb[0].mxu0
        %v515 = vadd.f32 0.0, %v514
        %v516 = vpop.f32.mrb[0].mxu0
        %517 = vmatprep.mubr.f32.mxu0 0.0
        %518 = vmatmul.mubr.f32.gmra.mrb[0].mxu0 %v404
        %v519 = vpop.f32.mrb[0].mxu0
        %v520 = vadd.f32 0.0, %v519
        %v521 = vpop.f32.mrb[0].mxu0
        %522 = vmatprep.mubr.f32.mxu0 0.0
        %523 = vmatmul.mubr.f32.gmra.mrb[0].mxu0 %v407
        %v524 = vpop.f32.mrb[0].mxu0
        %v525 = vadd.f32 0.0, %v524
        %v526 = vpop.f32.mrb[0].mxu0
        %527 = vmatprep.mubr.f32.mxu0 0.0
        %528 = vmatmul.mubr.f32.gmra.mrb[0].mxu0 %v410
        %v529 = vpop.f32.mrb[0].mxu0
        %v530 = vadd.f32 0.0, %v529
        %v531 = vpop.f32.mrb[0].mxu0
        %532 = vmatprep.mubr.f32.mxu0 0.0
        %533 = vmatmul.mubr.f32.gmra.mrb[0].mxu0 %v413
        %v534 = vpop.f32.mrb[0].mxu0
        %v535 = vadd.f32 0.0, %v534
        %v536 = vpop.f32.mrb[0].mxu0
        %537 = vmatprep.mubr.f32.mxu0 0.0
        %538 = vmatmul.mubr.f32.gmra.mrb[0].mxu0 %v416
        %v539 = vpop.f32.mrb[0].mxu0
        %v540 = vadd.f32 0.0, %v539
        %v541 = vpop.f32.mrb[0].mxu0
        %542 = vmatprep.mubr.f32.mxu0 0.0
        %543 = vmatmul.mubr.f32.gmra.mrb[0].mxu0 %v419
        %v544 = vpop.f32.mrb[0].mxu0
        %v545 = vadd.f32 0.0, %v544
        %v546 = vpop.f32.mrb[0].mxu0
        %547 = vmatprep.mubr.f32.mxu0 0.0
        %548 = vmatmul.mubr.f32.gmra.mrb[0].mxu0 %v422
        %v549 = vpop.f32.mrb[0].mxu0
        %v550 = vadd.f32 0.0, %v549
        %v551 = vpop.f32.mrb[0].mxu0
        %552 = vmatprep.mubr.f32.mxu0 0.0
        %553 = vmatmul.mubr.f32.gmra.mrb[0].mxu0 %v425
        %v554 = vpop.f32.mrb[0].mxu0
        %v555 = vadd.f32 0.0, %v554
        %v556 = vpop.f32.mrb[0].mxu0
        %557 = vmatprep.mubr.f32.mxu0 0.0
        %558 = vmatmul.mubr.f32.gmra.mrb[0].mxu0 %v428
        %v559 = vpop.f32.mrb[0].mxu0
        %v560 = vadd.f32 0.0, %v559
        %v561 = vpop.f32.mrb[0].mxu0
        %562 = vmatprep.mubr.f32.mxu0 0.0
        %563 = vmatmul.mubr.f32.gmra.mrb[0].mxu0 %v431
        %v564 = vpop.f32.mrb[0].mxu0
        %v565 = vadd.f32 0.0, %v564
        %v566 = vpop.f32.mrb[0].mxu0
        %567 = vmatprep.mubr.f32.mxu0 0.0
        %568 = vmatmul.mubr.f32.gmra.mrb[0].mxu0 %v434
        %v569 = vpop.f32.mrb[0].mxu0
        %v570 = vadd.f32 0.0, %v569
        %v571 = vpop.f32.mrb[0].mxu0
        %572 = vmatprep.mubr.f32.mxu0 0.0
        %573 = vmatmul.mubr.f32.gmra.mrb[0].mxu0 %v437
        %v574 = vpop.f32.mrb[0].mxu0
        %v575 = vadd.f32 0.0, %v574
        %v576 = vpop.f32.mrb[0].mxu0
        %577 = vmatprep.mubr.f32.mxu0 0.0
        %578 = vmatmul.mubr.f32.gmra.mrb[0].mxu0 %v440
        %v579 = vpop.f32.mrb[0].mxu0
        %v580 = vadd.f32 0.0, %v579
        %v581 = vpop.f32.mrb[0].mxu0
        %582 = vmatprep.mubr.f32.mxu0 0.0
        %583 = vmatmul.mubr.f32.gmra.mrb[0].mxu0 %v443
        %v584 = vpop.f32.mrb[0].mxu0
        %v585 = vadd.f32 0.0, %v584
        %v586 = vpop.f32.mrb[0].mxu0
        %587 = vmatprep.mubr.f32.mxu0 0.0
        %588 = vmatmul.mubr.f32.gmra.mrb[0].mxu0 %v446
        %v589 = vpop.f32.mrb[0].mxu0
        %v590 = vadd.f32 0.0, %v589
        %v591 = vpop.f32.mrb[0].mxu0
        %592 = vdwg.mxu0
        %593 = vst [vmem:[#allocation2] sm:$0xff] 0.0
        %594 = vst [vmem:[#allocation2 + $0x8] sm:$0xff] 0.0
        %595 = vst [vmem:[#allocation2 + $0x10] sm:$0xff] 0.0
        %596 = vst [vmem:[#allocation2 + $0x18] sm:$0xff] 0.0
        %597 = vst [vmem:[#allocation2 + $0x20] sm:$0xff] 0.0
        %598 = vst [vmem:[#allocation2 + $0x28] sm:$0xff] 0.0
        %599 = vst [vmem:[#allocation2 + $0x30] sm:$0xff] 0.0
        %600 = vst [vmem:[#allocation2 + $0x38] sm:$0xff] 0.0
        %v601 = vld [vmem:[%s2] sm:$0xff]
        %v602 = vld [vmem:[%s2 + $0x8] sm:$0xff]
        %v603 = vld [vmem:[%s2 + $0x10] sm:$0xff]
        %v604 = vld [vmem:[%s2 + $0x18] sm:$0xff]
        %v605 = vld [vmem:[%s2 + $0x20] sm:$0xff]
        %v606 = vld [vmem:[%s2 + $0x28] sm:$0xff]
        %v607 = vld [vmem:[%s2 + $0x30] sm:$0xff]
        %v608 = vld [vmem:[%s2 + $0x38] sm:$0xff]
        %v609 = vld [vmem:[%s2 + $0x40] sm:$0xff]
        %v610 = vld [vmem:[%s2 + $0x48] sm:$0xff]
        %v611 = vld [vmem:[%s2 + $0x50] sm:$0xff]
        %v612 = vld [vmem:[%s2 + $0x58] sm:$0xff]
        %v613 = vld [vmem:[%s2 + $0x60] sm:$0xff]
        %v614 = vld [vmem:[%s2 + $0x68] sm:$0xff]
        %v615 = vld [vmem:[%s2 + $0x70] sm:$0xff]
        %v616 = vld [vmem:[%s2 + $0x78] sm:$0xff]
        %v617 = vld [vmem:[%s2 + $0x80] sm:$0xff]
        %v618 = vld [vmem:[%s2 + $0x88] sm:$0xff]
        %v619 = vld [vmem:[%s2 + $0x90] sm:$0xff]
        %v620 = vld [vmem:[%s2 + $0x98] sm:$0xff]
        %v621 = vld [vmem:[%s2 + $0xa0] sm:$0xff]
        %v622 = vld [vmem:[%s2 + $0xa8] sm:$0xff]
        %v623 = vld [vmem:[%s2 + $0xb0] sm:$0xff]
        %v624 = vld [vmem:[%s2 + $0xb8] sm:$0xff]
        %v625 = vld [vmem:[%s2 + $0xc0] sm:$0xff]
        %v626 = vld [vmem:[%s2 + $0xc8] sm:$0xff]
        %v627 = vld [vmem:[%s2 + $0xd0] sm:$0xff]
        %v628 = vld [vmem:[%s2 + $0xd8] sm:$0xff]
        %v629 = vld [vmem:[%s2 + $0xe0] sm:$0xff]
        %v630 = vld [vmem:[%s2 + $0xe8] sm:$0xff]
        %v631 = vld [vmem:[%s2 + $0xf0] sm:$0xff]
        %v632 = vld [vmem:[%s2 + $0xf8] sm:$0xff]
        %v634 = vsel %vm399, %v601, 0
        %v637 = vsel %vm399, %v602, 0
        %v640 = vsel %vm399, %v603, 0
        %v643 = vsel %vm399, %v604, 0
        %v646 = vsel %vm399, %v605, 0
        %v649 = vsel %vm399, %v606, 0
        %v652 = vsel %vm399, %v607, 0
        %v655 = vsel %vm399, %v608, 0
        %v658 = vsel %vm399, %v609, 0
        %v661 = vsel %vm399, %v610, 0
        %v664 = vsel %vm399, %v611, 0
        %v667 = vsel %vm399, %v612, 0
        %v670 = vsel %vm399, %v613, 0
        %v673 = vsel %vm399, %v614, 0
        %v676 = vsel %vm399, %v615, 0
        %v679 = vsel %vm399, %v616, 0
        %v682 = vsel %vm399, %v617, 0
        %v685 = vsel %vm399, %v618, 0
        %v688 = vsel %vm399, %v619, 0
        %v691 = vsel %vm399, %v620, 0
        %v694 = vsel %vm399, %v621, 0
        %v697 = vsel %vm399, %v622, 0
        %v700 = vsel %vm399, %v623, 0
        %v703 = vsel %vm399, %v624, 0
        %v706 = vsel %vm399, %v625, 0
        %v709 = vsel %vm399, %v626, 0
        %v712 = vsel %vm399, %v627, 0
        %v715 = vsel %vm399, %v628, 0
        %v718 = vsel %vm399, %v629, 0
        %v721 = vsel %vm399, %v630, 0
        %v724 = vsel %vm399, %v631, 0
        %v727 = vsel %vm399, %v632, 0
        %729 = vmatprep.subr.mxu0 0.0
        %730 = vmatpush1.msra.mxu0 %v367
        %731 = vmatprep.subr.mxu0 0.0
        %732 = vmatpush1.msra.mxu0 %v368
        %733 = vmatprep.subr.mxu0 0.0
        %734 = vmatpush1.msra.mxu0 %v369
        %735 = vmatprep.subr.mxu0 0.0
        %736 = vmatpush1.msra.mxu0 %v370
        %737 = vmatprep.subr.mxu0 0.0
        %738 = vmatpush1.msra.mxu0 %v371
        %739 = vmatprep.subr.mxu0 0.0
        %740 = vmatpush1.msra.mxu0 %v372
        %741 = vmatprep.subr.mxu0 0.0
        %742 = vmatpush1.msra.mxu0 %v373
        %743 = vmatprep.subr.mxu0 0.0
        %744 = vmatpush1.msra.mxu0 %v374
        %745 = vmatprep.subr.mxu0 0.0
        %746 = vmatpush1.msra.mxu0 0.0
        %747 = vmatprep.subr.mxu0 0.0
        %748 = vmatpush1.msra.mxu0 0.0
        %749 = vmatprep.subr.mxu0 0.0
        %750 = vmatpush1.msra.mxu0 0.0
        %751 = vmatprep.subr.mxu0 0.0
        %752 = vmatpush1.msra.mxu0 0.0
        %753 = vmatprep.subr.mxu0 0.0
        %754 = vmatpush1.msra.mxu0 0.0
        %755 = vmatprep.subr.mxu0 0.0
        %756 = vmatpush1.msra.mxu0 0.0
        %757 = vmatprep.subr.mxu0 0.0
        %758 = vmatpush1.msra.mxu0 0.0
        %759 = vmatprep.subr.mxu0 0.0
        %760 = vmatpush1.msra.mxu0 0.0
        %761 = vmatprep.subr.mxu0 0.0
        %762 = vmatpush1.msra.mxu0 0.0
        %763 = vmatprep.subr.mxu0 0.0
        %764 = vmatpush1.msra.mxu0 0.0
        %765 = vmatprep.subr.mxu0 0.0
        %766 = vmatpush1.msra.mxu0 0.0
        %767 = vmatprep.subr.mxu0 0.0
        %768 = vmatpush1.msra.mxu0 0.0
        %769 = vmatprep.subr.mxu0 0.0
        %770 = vmatpush1.msra.mxu0 0.0
        %771 = vmatprep.subr.mxu0 0.0
        %772 = vmatpush1.msra.mxu0 0.0
        %773 = vmatprep.subr.mxu0 0.0
        %774 = vmatpush1.msra.mxu0 0.0
        %775 = vmatprep.subr.mxu0 0.0
        %776 = vmatpush1.msra.mxu0 0.0
        %777 = vmatprep.subr.mxu0 0.0
        %778 = vmatpush1.msra.mxu0 0.0
        %779 = vmatprep.subr.mxu0 0.0
        %780 = vmatpush1.msra.mxu0 0.0
        %781 = vmatprep.subr.mxu0 0.0
        %782 = vmatpush1.msra.mxu0 0.0
        %783 = vmatprep.subr.mxu0 0.0
        %784 = vmatpush1.msra.mxu0 0.0
        %785 = vmatprep.subr.mxu0 0.0
        %786 = vmatpush1.msra.mxu0 0.0
        %787 = vmatprep.subr.mxu0 0.0
        %788 = vmatpush1.msra.mxu0 0.0
        %789 = vmatprep.subr.mxu0 0.0
        %790 = vmatpush1.msra.mxu0 0.0
        %791 = vmatprep.subr.mxu0 0.0
        %792 = vmatpush1.msra.mxu0 0.0
        %793 = vmatprep.mubr.f32.mxu0 0.0
        %794 = vmatmul.mubr.f32.gmra.mrb[0].mxu0 %v634
        %v795 = vpop.f32.mrb[0].mxu0
        %v796 = vadd.f32 0.0, %v795
        %v797 = vpop.f32.mrb[0].mxu0
        %798 = vmatprep.mubr.f32.mxu0 0.0
        %799 = vmatmul.mubr.f32.gmra.mrb[0].mxu0 %v637
        %v800 = vpop.f32.mrb[0].mxu0
        %v801 = vadd.f32 0.0, %v800
        %v802 = vpop.f32.mrb[0].mxu0
        %803 = vmatprep.mubr.f32.mxu0 0.0
        %804 = vmatmul.mubr.f32.gmra.mrb[0].mxu0 %v640
        %v805 = vpop.f32.mrb[0].mxu0
        %v806 = vadd.f32 0.0, %v805
        %v807 = vpop.f32.mrb[0].mxu0
        %808 = vmatprep.mubr.f32.mxu0 0.0
        %809 = vmatmul.mubr.f32.gmra.mrb[0].mxu0 %v643
        %v810 = vpop.f32.mrb[0].mxu0
        %v811 = vadd.f32 0.0, %v810
        %v812 = vpop.f32.mrb[0].mxu0
        %813 = vmatprep.mubr.f32.mxu0 0.0
        %814 = vmatmul.mubr.f32.gmra.mrb[0].mxu0 %v646
        %v815 = vpop.f32.mrb[0].mxu0
        %v816 = vadd.f32 0.0, %v815
        %v817 = vpop.f32.mrb[0].mxu0
        %818 = vmatprep.mubr.f32.mxu0 0.0
        %819 = vmatmul.mubr.f32.gmra.mrb[0].mxu0 %v649
        %v820 = vpop.f32.mrb[0].mxu0
        %v821 = vadd.f32 0.0, %v820
        %v822 = vpop.f32.mrb[0].mxu0
        %823 = vmatprep.mubr.f32.mxu0 0.0
        %824 = vmatmul.mubr.f32.gmra.mrb[0].mxu0 %v652
        %v825 = vpop.f32.mrb[0].mxu0
        %v826 = vadd.f32 0.0, %v825
        %v827 = vpop.f32.mrb[0].mxu0
        %828 = vmatprep.mubr.f32.mxu0 0.0
        %829 = vmatmul.mubr.f32.gmra.mrb[0].mxu0 %v655
        %v830 = vpop.f32.mrb[0].mxu0
        %v831 = vadd.f32 0.0, %v830
        %v832 = vpop.f32.mrb[0].mxu0
        %833 = vmatprep.mubr.f32.mxu0 0.0
        %834 = vmatmul.mubr.f32.gmra.mrb[0].mxu0 %v658
        %v835 = vpop.f32.mrb[0].mxu0
        %v836 = vadd.f32 0.0, %v835
        %v837 = vpop.f32.mrb[0].mxu0
        %838 = vmatprep.mubr.f32.mxu0 0.0
        %839 = vmatmul.mubr.f32.gmra.mrb[0].mxu0 %v661
        %v840 = vpop.f32.mrb[0].mxu0
        %v841 = vadd.f32 0.0, %v840
        %v842 = vpop.f32.mrb[0].mxu0
        %843 = vmatprep.mubr.f32.mxu0 0.0
        %844 = vmatmul.mubr.f32.gmra.mrb[0].mxu0 %v664
        %v845 = vpop.f32.mrb[0].mxu0
        %v846 = vadd.f32 0.0, %v845
        %v847 = vpop.f32.mrb[0].mxu0
        %848 = vmatprep.mubr.f32.mxu0 0.0
        %849 = vmatmul.mubr.f32.gmra.mrb[0].mxu0 %v667
        %v850 = vpop.f32.mrb[0].mxu0
        %v851 = vadd.f32 0.0, %v850
        %v852 = vpop.f32.mrb[0].mxu0
        %853 = vmatprep.mubr.f32.mxu0 0.0
        %854 = vmatmul.mubr.f32.gmra.mrb[0].mxu0 %v670
        %v855 = vpop.f32.mrb[0].mxu0
        %v856 = vadd.f32 0.0, %v855
        %v857 = vpop.f32.mrb[0].mxu0
        %858 = vmatprep.mubr.f32.mxu0 0.0
        %859 = vmatmul.mubr.f32.gmra.mrb[0].mxu0 %v673
        %v860 = vpop.f32.mrb[0].mxu0
        %v861 = vadd.f32 0.0, %v860
        %v862 = vpop.f32.mrb[0].mxu0
        %863 = vmatprep.mubr.f32.mxu0 0.0
        %864 = vmatmul.mubr.f32.gmra.mrb[0].mxu0 %v676
        %v865 = vpop.f32.mrb[0].mxu0
        %v866 = vadd.f32 0.0, %v865
        %v867 = vpop.f32.mrb[0].mxu0
        %868 = vmatprep.mubr.f32.mxu0 0.0
        %869 = vmatmul.mubr.f32.gmra.mrb[0].mxu0 %v679
        %v870 = vpop.f32.mrb[0].mxu0
        %v871 = vadd.f32 0.0, %v870
        %v872 = vpop.f32.mrb[0].mxu0
        %873 = vmatprep.mubr.f32.mxu0 0.0
        %874 = vmatmul.mubr.f32.gmra.mrb[0].mxu0 %v682
        %v875 = vpop.f32.mrb[0].mxu0
        %v876 = vadd.f32 0.0, %v875
        %v877 = vpop.f32.mrb[0].mxu0
        %878 = vmatprep.mubr.f32.mxu0 0.0
        %879 = vmatmul.mubr.f32.gmra.mrb[0].mxu0 %v685
        %v880 = vpop.f32.mrb[0].mxu0
        %v881 = vadd.f32 0.0, %v880
        %v882 = vpop.f32.mrb[0].mxu0
        %883 = vmatprep.mubr.f32.mxu0 0.0
        %884 = vmatmul.mubr.f32.gmra.mrb[0].mxu0 %v688
        %v885 = vpop.f32.mrb[0].mxu0
        %v886 = vadd.f32 0.0, %v885
        %v887 = vpop.f32.mrb[0].mxu0
        %888 = vmatprep.mubr.f32.mxu0 0.0
        %889 = vmatmul.mubr.f32.gmra.mrb[0].mxu0 %v691
        %v890 = vpop.f32.mrb[0].mxu0
        %v891 = vadd.f32 0.0, %v890
        %v892 = vpop.f32.mrb[0].mxu0
        %893 = vmatprep.mubr.f32.mxu0 0.0
        %894 = vmatmul.mubr.f32.gmra.mrb[0].mxu0 %v694
        %v895 = vpop.f32.mrb[0].mxu0
        %v896 = vadd.f32 0.0, %v895
        %v897 = vpop.f32.mrb[0].mxu0
        %898 = vmatprep.mubr.f32.mxu0 0.0
        %899 = vmatmul.mubr.f32.gmra.mrb[0].mxu0 %v697
        %v900 = vpop.f32.mrb[0].mxu0
        %v901 = vadd.f32 0.0, %v900
        %v902 = vpop.f32.mrb[0].mxu0
        %903 = vmatprep.mubr.f32.mxu0 0.0
        %904 = vmatmul.mubr.f32.gmra.mrb[0].mxu0 %v700
        %v905 = vpop.f32.mrb[0].mxu0
        %v906 = vadd.f32 0.0, %v905
        %v907 = vpop.f32.mrb[0].mxu0
        %908 = vmatprep.mubr.f32.mxu0 0.0
        %909 = vmatmul.mubr.f32.gmra.mrb[0].mxu0 %v703
        %v910 = vpop.f32.mrb[0].mxu0
        %v911 = vadd.f32 0.0, %v910
        %v912 = vpop.f32.mrb[0].mxu0
        %913 = vmatprep.mubr.f32.mxu0 0.0
        %914 = vmatmul.mubr.f32.gmra.mrb[0].mxu0 %v706
        %v915 = vpop.f32.mrb[0].mxu0
        %v916 = vadd.f32 0.0, %v915
        %v917 = vpop.f32.mrb[0].mxu0
        %918 = vmatprep.mubr.f32.mxu0 0.0
        %919 = vmatmul.mubr.f32.gmra.mrb[0].mxu0 %v709
        %v920 = vpop.f32.mrb[0].mxu0
        %v921 = vadd.f32 0.0, %v920
        %v922 = vpop.f32.mrb[0].mxu0
        %923 = vmatprep.mubr.f32.mxu0 0.0
        %924 = vmatmul.mubr.f32.gmra.mrb[0].mxu0 %v712
        %v925 = vpop.f32.mrb[0].mxu0
        %v926 = vadd.f32 0.0, %v925
        %v927 = vpop.f32.mrb[0].mxu0
        %928 = vmatprep.mubr.f32.mxu0 0.0
        %929 = vmatmul.mubr.f32.gmra.mrb[0].mxu0 %v715
        %v930 = vpop.f32.mrb[0].mxu0
        %v931 = vadd.f32 0.0, %v930
        %v932 = vpop.f32.mrb[0].mxu0
        %933 = vmatprep.mubr.f32.mxu0 0.0
        %934 = vmatmul.mubr.f32.gmra.mrb[0].mxu0 %v718
        %v935 = vpop.f32.mrb[0].mxu0
        %v936 = vadd.f32 0.0, %v935
        %v937 = vpop.f32.mrb[0].mxu0
        %938 = vmatprep.mubr.f32.mxu0 0.0
        %939 = vmatmul.mubr.f32.gmra.mrb[0].mxu0 %v721
        %v940 = vpop.f32.mrb[0].mxu0
        %v941 = vadd.f32 0.0, %v940
        %v942 = vpop.f32.mrb[0].mxu0
        %943 = vmatprep.mubr.f32.mxu0 0.0
        %944 = vmatmul.mubr.f32.gmra.mrb[0].mxu0 %v724
        %v945 = vpop.f32.mrb[0].mxu0
        %v946 = vadd.f32 0.0, %v945
        %v947 = vpop.f32.mrb[0].mxu0
        %948 = vmatprep.mubr.f32.mxu0 0.0
        %949 = vmatmul.mubr.f32.gmra.mrb[0].mxu0 %v727
        %v950 = vpop.f32.mrb[0].mxu0
        %v951 = vadd.f32 0.0, %v950
        %v952 = vpop.f32.mrb[0].mxu0
        %953 = vdwg.mxu0
        %v954 = vmul.f32 %v796, %v515
        %v955 = vmul.f32 %v801, %v520
        %v956 = vmul.f32 %v806, %v515
        %v957 = vmul.f32 %v811, %v520
        %v958 = vmul.f32 %v816, %v515
        %v959 = vmul.f32 %v821, %v520
        %v960 = vmul.f32 %v826, %v515
        %v961 = vmul.f32 %v831, %v520
        %v962 = vmul.f32 %v836, %v515
        %v963 = vmul.f32 %v841, %v520
        %v964 = vmul.f32 %v846, %v515
        %v965 = vmul.f32 %v851, %v520
        %v966 = vmul.f32 %v856, %v515
        %v967 = vmul.f32 %v861, %v520
        %v968 = vmul.f32 %v866, %v515
        %v969 = vmul.f32 %v871, %v520
        %v970 = vmul.f32 %v876, %v515
        %v971 = vmul.f32 %v881, %v520
        %v972 = vmul.f32 %v886, %v515
        %v973 = vmul.f32 %v891, %v520
        %v974 = vmul.f32 %v896, %v515
        %v975 = vmul.f32 %v901, %v520
        %v976 = vmul.f32 %v906, %v515
        %v977 = vmul.f32 %v911, %v520
        %v978 = vmul.f32 %v916, %v515
        %v979 = vmul.f32 %v921, %v520
        %v980 = vmul.f32 %v926, %v515
        %v981 = vmul.f32 %v931, %v520
        %v982 = vmul.f32 %v936, %v515
        %v983 = vmul.f32 %v941, %v520
        %v984 = vmul.f32 %v946, %v515
        %v985 = vmul.f32 %v951, %v520
        %v986 = vld [vmem:[#allocation2] sm:$0xff]
        %v987 = vld [vmem:[#allocation2 + $0x8] sm:$0xff]
        %v988 = vld [vmem:[#allocation2 + $0x10] sm:$0xff]
        %v989 = vld [vmem:[#allocation2 + $0x18] sm:$0xff]
        %v990 = vld [vmem:[#allocation2 + $0x20] sm:$0xff]
        %v991 = vld [vmem:[#allocation2 + $0x28] sm:$0xff]
        %v992 = vld [vmem:[#allocation2 + $0x30] sm:$0xff]
        %v993 = vld [vmem:[#allocation2 + $0x38] sm:$0xff]
        %v994 = vld [vmem:[%s4] sm:$0xff]
        %v995 = vld [vmem:[%s4 + $0x8] sm:$0xff]
        %v996 = vld [vmem:[%s4 + $0x80] sm:$0xff]
        %v997 = vld [vmem:[%s4 + $0x88] sm:$0xff]
        %v998 = vld [vmem:[%s4 + $0x100] sm:$0xff]
        %v999 = vld [vmem:[%s4 + $0x108] sm:$0xff]
        %v1000 = vld [vmem:[%s4 + $0x180] sm:$0xff]
        %v1001 = vld [vmem:[%s4 + $0x188] sm:$0xff]
        %v1002 = vld [vmem:[%s4 + $0x200] sm:$0xff]
        %v1003 = vld [vmem:[%s4 + $0x208] sm:$0xff]
        %v1004 = vld [vmem:[%s4 + $0x280] sm:$0xff]
        %v1005 = vld [vmem:[%s4 + $0x288] sm:$0xff]
        %v1006 = vld [vmem:[%s4 + $0x300] sm:$0xff]
        %v1007 = vld [vmem:[%s4 + $0x308] sm:$0xff]
        %v1008 = vld [vmem:[%s4 + $0x380] sm:$0xff]
        %v1009 = vld [vmem:[%s4 + $0x388] sm:$0xff]
        %1010 = vmatprep.subr.mxu0 0.0
        %1011 = vmatpush1.msra.mxu0 %v954
        %1012 = vmatprep.subr.mxu0 0.0
        %1013 = vmatpush1.msra.mxu0 %v955
        %1014 = vmatprep.subr.mxu0 0.0
        %1015 = vmatpush1.msra.mxu0 %v956
        %1016 = vmatprep.subr.mxu0 0.0
        %1017 = vmatpush1.msra.mxu0 %v957
        %1018 = vmatprep.subr.mxu0 0.0
        %1019 = vmatpush1.msra.mxu0 %v958
        %1020 = vmatprep.subr.mxu0 0.0
        %1021 = vmatpush1.msra.mxu0 %v959
        %1022 = vmatprep.subr.mxu0 0.0
        %1023 = vmatpush1.msra.mxu0 %v960
        %1024 = vmatprep.subr.mxu0 0.0
        %1025 = vmatpush1.msra.mxu0 %v961
        %1026 = vmatprep.subr.mxu0 0.0
        %1027 = vmatpush1.msra.mxu0 %v962
        %1028 = vmatprep.subr.mxu0 0.0
        %1029 = vmatpush1.msra.mxu0 %v963
        %1030 = vmatprep.subr.mxu0 0.0
        %1031 = vmatpush1.msra.mxu0 %v964
        %1032 = vmatprep.subr.mxu0 0.0
        %1033 = vmatpush1.msra.mxu0 %v965
        %1034 = vmatprep.subr.mxu0 0.0
        %1035 = vmatpush1.msra.mxu0 %v966
        %1036 = vmatprep.subr.mxu0 0.0
        %1037 = vmatpush1.msra.mxu0 %v967
        %1038 = vmatprep.subr.mxu0 0.0
        %1039 = vmatpush1.msra.mxu0 %v968
        %1040 = vmatprep.subr.mxu0 0.0
        %1041 = vmatpush1.msra.mxu0 %v969
        %1042 = vmatprep.subr.mxu0 0.0
        %1043 = vmatpush1.msra.mxu0 %v970
        %1044 = vmatprep.subr.mxu0 0.0
        %1045 = vmatpush1.msra.mxu0 %v971
        %1046 = vmatprep.subr.mxu0 0.0
        %1047 = vmatpush1.msra.mxu0 %v972
        %1048 = vmatprep.subr.mxu0 0.0
        %1049 = vmatpush1.msra.mxu0 %v973
        %1050 = vmatprep.subr.mxu0 0.0
        %1051 = vmatpush1.msra.mxu0 %v974
        %1052 = vmatprep.subr.mxu0 0.0
        %1053 = vmatpush1.msra.mxu0 %v975
        %1054 = vmatprep.subr.mxu0 0.0
        %1055 = vmatpush1.msra.mxu0 %v976
        %1056 = vmatprep.subr.mxu0 0.0
        %1057 = vmatpush1.msra.mxu0 %v977
        %1058 = vmatprep.subr.mxu0 0.0
        %1059 = vmatpush1.msra.mxu0 %v978
        %1060 = vmatprep.subr.mxu0 0.0
        %1061 = vmatpush1.msra.mxu0 %v979
        %1062 = vmatprep.subr.mxu0 0.0
        %1063 = vmatpush1.msra.mxu0 %v980
        %1064 = vmatprep.subr.mxu0 0.0
        %1065 = vmatpush1.msra.mxu0 %v981
        %1066 = vmatprep.subr.mxu0 0.0
        %1067 = vmatpush1.msra.mxu0 %v982
        %1068 = vmatprep.subr.mxu0 0.0
        %1069 = vmatpush1.msra.mxu0 %v983
        %1070 = vmatprep.subr.mxu0 0.0
        %1071 = vmatpush1.msra.mxu0 %v984
        %1072 = vmatprep.subr.mxu0 0.0
        %1073 = vmatpush1.msra.mxu0 %v985
        %1074 = vmatprep.mubr.f32.mxu0 %v995
        %1075 = vmatmul.mubr.f32.gmra.mrb[0].mxu0 %v994
        %v1076 = vpop.f32.mrb[0].mxu0
        %v1077 = vadd.f32 0.0, %v1076
        %v1078 = vpop.f32.mrb[0].mxu0
        %1079 = vmatprep.mubr.f32.mxu0 %v997
        %1080 = vmatmul.mubr.f32.gmra.mrb[0].mxu0 %v996
        %v1081 = vpop.f32.mrb[0].mxu0
        %v1082 = vadd.f32 0.0, %v1081
        %v1083 = vpop.f32.mrb[0].mxu0
        %1084 = vmatprep.mubr.f32.mxu0 %v999
        %1085 = vmatmul.mubr.f32.gmra.mrb[0].mxu0 %v998
        %v1086 = vpop.f32.mrb[0].mxu0
        %v1087 = vadd.f32 0.0, %v1086
        %v1088 = vpop.f32.mrb[0].mxu0
        %1089 = vmatprep.mubr.f32.mxu0 %v1001
        %1090 = vmatmul.mubr.f32.gmra.mrb[0].mxu0 %v1000
        %v1091 = vpop.f32.mrb[0].mxu0
        %v1092 = vadd.f32 0.0, %v1091
        %v1093 = vpop.f32.mrb[0].mxu0
        %1094 = vmatprep.mubr.f32.mxu0 %v1003
        %1095 = vmatmul.mubr.f32.gmra.mrb[0].mxu0 %v1002
        %v1096 = vpop.f32.mrb[0].mxu0
        %v1097 = vadd.f32 0.0, %v1096
        %v1098 = vpop.f32.mrb[0].mxu0
        %1099 = vmatprep.mubr.f32.mxu0 %v1005
        %1100 = vmatmul.mubr.f32.gmra.mrb[0].mxu0 %v1004
        %v1101 = vpop.f32.mrb[0].mxu0
        %v1102 = vadd.f32 0.0, %v1101
        %v1103 = vpop.f32.mrb[0].mxu0
        %1104 = vmatprep.mubr.f32.mxu0 %v1007
        %1105 = vmatmul.mubr.f32.gmra.mrb[0].mxu0 %v1006
        %v1106 = vpop.f32.mrb[0].mxu0
        %v1107 = vadd.f32 0.0, %v1106
        %v1108 = vpop.f32.mrb[0].mxu0
        %1109 = vmatprep.mubr.f32.mxu0 %v1009
        %1110 = vmatmul.mubr.f32.gmra.mrb[0].mxu0 %v1008
        %v1111 = vpop.f32.mrb[0].mxu0
        %v1112 = vadd.f32 0.0, %v1111
        %v1113 = vpop.f32.mrb[0].mxu0
        %1114 = vdwg.mxu0
        %v1115 = vadd.f32 %v986, %v1077
        %v1116 = vadd.f32 %v987, %v1082
        %v1117 = vadd.f32 %v988, %v1087
        %v1118 = vadd.f32 %v989, %v1092
        %v1119 = vadd.f32 %v990, %v1097
        %v1120 = vadd.f32 %v991, %v1102
        %v1121 = vadd.f32 %v992, %v1107
        %v1122 = vadd.f32 %v993, %v1112
        %1123 = vst [vmem:[#allocation2] sm:$0xff] %v1115
        %1124 = vst [vmem:[#allocation2 + $0x8] sm:$0xff] %v1116
        %1125 = vst [vmem:[#allocation2 + $0x10] sm:$0xff] %v1117
        %1126 = vst [vmem:[#allocation2 + $0x18] sm:$0xff] %v1118
        %1127 = vst [vmem:[#allocation2 + $0x20] sm:$0xff] %v1119
        %1128 = vst [vmem:[#allocation2 + $0x28] sm:$0xff] %v1120
        %1129 = vst [vmem:[#allocation2 + $0x30] sm:$0xff] %v1121
        %1130 = vst [vmem:[#allocation2 + $0x38] sm:$0xff] %v1122
        %v1131 = vld [vmem:[%s2 + $0x100] sm:$0xff]
        %v1132 = vld [vmem:[%s2 + $0x108] sm:$0xff]
        %v1133 = vld [vmem:[%s2 + $0x110] sm:$0xff]
        %v1134 = vld [vmem:[%s2 + $0x118] sm:$0xff]
        %v1135 = vld [vmem:[%s2 + $0x120] sm:$0xff]
        %v1136 = vld [vmem:[%s2 + $0x128] sm:$0xff]
        %v1137 = vld [vmem:[%s2 + $0x130] sm:$0xff]
        %v1138 = vld [vmem:[%s2 + $0x138] sm:$0xff]
        %v1139 = vld [vmem:[%s2 + $0x140] sm:$0xff]
        %v1140 = vld [vmem:[%s2 + $0x148] sm:$0xff]
        %v1141 = vld [vmem:[%s2 + $0x150] sm:$0xff]
        %v1142 = vld [vmem:[%s2 + $0x158] sm:$0xff]
        %v1143 = vld [vmem:[%s2 + $0x160] sm:$0xff]
        %v1144 = vld [vmem:[%s2 + $0x168] sm:$0xff]
        %v1145 = vld [vmem:[%s2 + $0x170] sm:$0xff]
        %v1146 = vld [vmem:[%s2 + $0x178] sm:$0xff]
        %v1147 = vld [vmem:[%s2 + $0x180] sm:$0xff]
        %v1148 = vld [vmem:[%s2 + $0x188] sm:$0xff]
        %v1149 = vld [vmem:[%s2 + $0x190] sm:$0xff]
        %v1150 = vld [vmem:[%s2 + $0x198] sm:$0xff]
        %v1151 = vld [vmem:[%s2 + $0x1a0] sm:$0xff]
        %v1152 = vld [vmem:[%s2 + $0x1a8] sm:$0xff]
        %v1153 = vld [vmem:[%s2 + $0x1b0] sm:$0xff]
        %v1154 = vld [vmem:[%s2 + $0x1b8] sm:$0xff]
        %v1155 = vld [vmem:[%s2 + $0x1c0] sm:$0xff]
        %v1156 = vld [vmem:[%s2 + $0x1c8] sm:$0xff]
        %v1157 = vld [vmem:[%s2 + $0x1d0] sm:$0xff]
        %v1158 = vld [vmem:[%s2 + $0x1d8] sm:$0xff]
        %v1159 = vld [vmem:[%s2 + $0x1e0] sm:$0xff]
        %v1160 = vld [vmem:[%s2 + $0x1e8] sm:$0xff]
        %v1161 = vld [vmem:[%s2 + $0x1f0] sm:$0xff]
        %v1162 = vld [vmem:[%s2 + $0x1f8] sm:$0xff]
        %v1164 = vsel %vm399, %v1131, 0
        %v1167 = vsel %vm399, %v1132, 0
        %v1170 = vsel %vm399, %v1133, 0
        %v1173 = vsel %vm399, %v1134, 0
        %v1176 = vsel %vm399, %v1135, 0
        %v1179 = vsel %vm399, %v1136, 0
        %v1182 = vsel %vm399, %v1137, 0
        %v1185 = vsel %vm399, %v1138, 0
        %v1188 = vsel %vm399, %v1139, 0
        %v1191 = vsel %vm399, %v1140, 0
        %v1194 = vsel %vm399, %v1141, 0
        %v1197 = vsel %vm399, %v1142, 0
        %v1200 = vsel %vm399, %v1143, 0
        %v1203 = vsel %vm399, %v1144, 0
        %v1206 = vsel %vm399, %v1145, 0
        %v1209 = vsel %vm399, %v1146, 0
        %v1212 = vsel %vm399, %v1147, 0
        %v1215 = vsel %vm399, %v1148, 0
        %v1218 = vsel %vm399, %v1149, 0
        %v1221 = vsel %vm399, %v1150, 0
        %v1224 = vsel %vm399, %v1151, 0
        %v1227 = vsel %vm399, %v1152, 0
        %v1230 = vsel %vm399, %v1153, 0
        %v1233 = vsel %vm399, %v1154, 0
        %v1236 = vsel %vm399, %v1155, 0
        %v1239 = vsel %vm399, %v1156, 0
        %v1242 = vsel %vm399, %v1157, 0
        %v1245 = vsel %vm399, %v1158, 0
        %v1248 = vsel %vm399, %v1159, 0
        %v1251 = vsel %vm399, %v1160, 0
        %v1254 = vsel %vm399, %v1161, 0
        %v1257 = vsel %vm399, %v1162, 0
        %1259 = vmatprep.subr.mxu0 0.0
        %1260 = vmatpush1.msra.mxu0 %v367
        %1261 = vmatprep.subr.mxu0 0.0
        %1262 = vmatpush1.msra.mxu0 %v368
        %1263 = vmatprep.subr.mxu0 0.0
        %1264 = vmatpush1.msra.mxu0 %v369
        %1265 = vmatprep.subr.mxu0 0.0
        %1266 = vmatpush1.msra.mxu0 %v370
        %1267 = vmatprep.subr.mxu0 0.0
        %1268 = vmatpush1.msra.mxu0 %v371
        %1269 = vmatprep.subr.mxu0 0.0
        %1270 = vmatpush1.msra.mxu0 %v372
        %1271 = vmatprep.subr.mxu0 0.0
        %1272 = vmatpush1.msra.mxu0 %v373
        %1273 = vmatprep.subr.mxu0 0.0
        %1274 = vmatpush1.msra.mxu0 %v374
        %1275 = vmatprep.subr.mxu0 0.0
        %1276 = vmatpush1.msra.mxu0 0.0
        %1277 = vmatprep.subr.mxu0 0.0
        %1278 = vmatpush1.msra.mxu0 0.0
        %1279 = vmatprep.subr.mxu0 0.0
        %1280 = vmatpush1.msra.mxu0 0.0
        %1281 = vmatprep.subr.mxu0 0.0
        %1282 = vmatpush1.msra.mxu0 0.0
        %1283 = vmatprep.subr.mxu0 0.0
        %1284 = vmatpush1.msra.mxu0 0.0
        %1285 = vmatprep.subr.mxu0 0.0
        %1286 = vmatpush1.msra.mxu0 0.0
        %1287 = vmatprep.subr.mxu0 0.0
        %1288 = vmatpush1.msra.mxu0 0.0
        %1289 = vmatprep.subr.mxu0 0.0
        %1290 = vmatpush1.msra.mxu0 0.0
        %1291 = vmatprep.subr.mxu0 0.0
        %1292 = vmatpush1.msra.mxu0 0.0
        %1293 = vmatprep.subr.mxu0 0.0
        %1294 = vmatpush1.msra.mxu0 0.0
        %1295 = vmatprep.subr.mxu0 0.0
        %1296 = vmatpush1.msra.mxu0 0.0
        %1297 = vmatprep.subr.mxu0 0.0
        %1298 = vmatpush1.msra.mxu0 0.0
        %1299 = vmatprep.subr.mxu0 0.0
        %1300 = vmatpush1.msra.mxu0 0.0
        %1301 = vmatprep.subr.mxu0 0.0
        %1302 = vmatpush1.msra.mxu0 0.0
        %1303 = vmatprep.subr.mxu0 0.0
        %1304 = vmatpush1.msra.mxu0 0.0
        %1305 = vmatprep.subr.mxu0 0.0
        %1306 = vmatpush1.msra.mxu0 0.0
        %1307 = vmatprep.subr.mxu0 0.0
        %1308 = vmatpush1.msra.mxu0 0.0
        %1309 = vmatprep.subr.mxu0 0.0
        %1310 = vmatpush1.msra.mxu0 0.0
        %1311 = vmatprep.subr.mxu0 0.0
        %1312 = vmatpush1.msra.mxu0 0.0
        %1313 = vmatprep.subr.mxu0 0.0
        %1314 = vmatpush1.msra.mxu0 0.0
        %1315 = vmatprep.subr.mxu0 0.0
        %1316 = vmatpush1.msra.mxu0 0.0
        %1317 = vmatprep.subr.mxu0 0.0
        %1318 = vmatpush1.msra.mxu0 0.0
        %1319 = vmatprep.subr.mxu0 0.0
        %1320 = vmatpush1.msra.mxu0 0.0
        %1321 = vmatprep.subr.mxu0 0.0
        %1322 = vmatpush1.msra.mxu0 0.0
        %1323 = vmatprep.mubr.f32.mxu0 0.0
        %1324 = vmatmul.mubr.f32.gmra.mrb[0].mxu0 %v1164
        %v1325 = vpop.f32.mrb[0].mxu0
        %v1326 = vadd.f32 0.0, %v1325
        %v1327 = vpop.f32.mrb[0].mxu0
        %1328 = vmatprep.mubr.f32.mxu0 0.0
        %1329 = vmatmul.mubr.f32.gmra.mrb[0].mxu0 %v1167
        %v1330 = vpop.f32.mrb[0].mxu0
        %v1331 = vadd.f32 0.0, %v1330
        %v1332 = vpop.f32.mrb[0].mxu0
        %1333 = vmatprep.mubr.f32.mxu0 0.0
        %1334 = vmatmul.mubr.f32.gmra.mrb[0].mxu0 %v1170
        %v1335 = vpop.f32.mrb[0].mxu0
        %v1336 = vadd.f32 0.0, %v1335
        %v1337 = vpop.f32.mrb[0].mxu0
        %1338 = vmatprep.mubr.f32.mxu0 0.0
        %1339 = vmatmul.mubr.f32.gmra.mrb[0].mxu0 %v1173
        %v1340 = vpop.f32.mrb[0].mxu0
        %v1341 = vadd.f32 0.0, %v1340
        %v1342 = vpop.f32.mrb[0].mxu0
        %1343 = vmatprep.mubr.f32.mxu0 0.0
        %1344 = vmatmul.mubr.f32.gmra.mrb[0].mxu0 %v1176
        %v1345 = vpop.f32.mrb[0].mxu0
        %v1346 = vadd.f32 0.0, %v1345
        %v1347 = vpop.f32.mrb[0].mxu0
        %1348 = vmatprep.mubr.f32.mxu0 0.0
        %1349 = vmatmul.mubr.f32.gmra.mrb[0].mxu0 %v1179
        %v1350 = vpop.f32.mrb[0].mxu0
        %v1351 = vadd.f32 0.0, %v1350
        %v1352 = vpop.f32.mrb[0].mxu0
        %1353 = vmatprep.mubr.f32.mxu0 0.0
        %1354 = vmatmul.mubr.f32.gmra.mrb[0].mxu0 %v1182
        %v1355 = vpop.f32.mrb[0].mxu0
        %v1356 = vadd.f32 0.0, %v1355
        %v1357 = vpop.f32.mrb[0].mxu0
        %1358 = vmatprep.mubr.f32.mxu0 0.0
        %1359 = vmatmul.mubr.f32.gmra.mrb[0].mxu0 %v1185
        %v1360 = vpop.f32.mrb[0].mxu0
        %v1361 = vadd.f32 0.0, %v1360
        %v1362 = vpop.f32.mrb[0].mxu0
        %1363 = vmatprep.mubr.f32.mxu0 0.0
        %1364 = vmatmul.mubr.f32.gmra.mrb[0].mxu0 %v1188
        %v1365 = vpop.f32.mrb[0].mxu0
        %v1366 = vadd.f32 0.0, %v1365
        %v1367 = vpop.f32.mrb[0].mxu0
        %1368 = vmatprep.mubr.f32.mxu0 0.0
        %1369 = vmatmul.mubr.f32.gmra.mrb[0].mxu0 %v1191
        %v1370 = vpop.f32.mrb[0].mxu0
        %v1371 = vadd.f32 0.0, %v1370
        %v1372 = vpop.f32.mrb[0].mxu0
        %1373 = vmatprep.mubr.f32.mxu0 0.0
        %1374 = vmatmul.mubr.f32.gmra.mrb[0].mxu0 %v1194
        %v1375 = vpop.f32.mrb[0].mxu0
        %v1376 = vadd.f32 0.0, %v1375
        %v1377 = vpop.f32.mrb[0].mxu0
        %1378 = vmatprep.mubr.f32.mxu0 0.0
        %1379 = vmatmul.mubr.f32.gmra.mrb[0].mxu0 %v1197
        %v1380 = vpop.f32.mrb[0].mxu0
        %v1381 = vadd.f32 0.0, %v1380
        %v1382 = vpop.f32.mrb[0].mxu0
        %1383 = vmatprep.mubr.f32.mxu0 0.0
        %1384 = vmatmul.mubr.f32.gmra.mrb[0].mxu0 %v1200
        %v1385 = vpop.f32.mrb[0].mxu0
        %v1386 = vadd.f32 0.0, %v1385
        %v1387 = vpop.f32.mrb[0].mxu0
        %1388 = vmatprep.mubr.f32.mxu0 0.0
        %1389 = vmatmul.mubr.f32.gmra.mrb[0].mxu0 %v1203
        %v1390 = vpop.f32.mrb[0].mxu0
        %v1391 = vadd.f32 0.0, %v1390
        %v1392 = vpop.f32.mrb[0].mxu0
        %1393 = vmatprep.mubr.f32.mxu0 0.0
        %1394 = vmatmul.mubr.f32.gmra.mrb[0].mxu0 %v1206
        %v1395 = vpop.f32.mrb[0].mxu0
        %v1396 = vadd.f32 0.0, %v1395
        %v1397 = vpop.f32.mrb[0].mxu0
        %1398 = vmatprep.mubr.f32.mxu0 0.0
        %1399 = vmatmul.mubr.f32.gmra.mrb[0].mxu0 %v1209
        %v1400 = vpop.f32.mrb[0].mxu0
        %v1401 = vadd.f32 0.0, %v1400
        %v1402 = vpop.f32.mrb[0].mxu0
        %1403 = vmatprep.mubr.f32.mxu0 0.0
        %1404 = vmatmul.mubr.f32.gmra.mrb[0].mxu0 %v1212
        %v1405 = vpop.f32.mrb[0].mxu0
        %v1406 = vadd.f32 0.0, %v1405
        %v1407 = vpop.f32.mrb[0].mxu0
        %1408 = vmatprep.mubr.f32.mxu0 0.0
        %1409 = vmatmul.mubr.f32.gmra.mrb[0].mxu0 %v1215
        %v1410 = vpop.f32.mrb[0].mxu0
        %v1411 = vadd.f32 0.0, %v1410
        %v1412 = vpop.f32.mrb[0].mxu0
        %1413 = vmatprep.mubr.f32.mxu0 0.0
        %1414 = vmatmul.mubr.f32.gmra.mrb[0].mxu0 %v1218
        %v1415 = vpop.f32.mrb[0].mxu0
        %v1416 = vadd.f32 0.0, %v1415
        %v1417 = vpop.f32.mrb[0].mxu0
        %1418 = vmatprep.mubr.f32.mxu0 0.0
        %1419 = vmatmul.mubr.f32.gmra.mrb[0].mxu0 %v1221
        %v1420 = vpop.f32.mrb[0].mxu0
        %v1421 = vadd.f32 0.0, %v1420
        %v1422 = vpop.f32.mrb[0].mxu0
        %1423 = vmatprep.mubr.f32.mxu0 0.0
        %1424 = vmatmul.mubr.f32.gmra.mrb[0].mxu0 %v1224
        %v1425 = vpop.f32.mrb[0].mxu0
        %v1426 = vadd.f32 0.0, %v1425
        %v1427 = vpop.f32.mrb[0].mxu0
        %1428 = vmatprep.mubr.f32.mxu0 0.0
        %1429 = vmatmul.mubr.f32.gmra.mrb[0].mxu0 %v1227
        %v1430 = vpop.f32.mrb[0].mxu0
        %v1431 = vadd.f32 0.0, %v1430
        %v1432 = vpop.f32.mrb[0].mxu0
        %1433 = vmatprep.mubr.f32.mxu0 0.0
        %1434 = vmatmul.mubr.f32.gmra.mrb[0].mxu0 %v1230
        %v1435 = vpop.f32.mrb[0].mxu0
        %v1436 = vadd.f32 0.0, %v1435
        %v1437 = vpop.f32.mrb[0].mxu0
        %1438 = vmatprep.mubr.f32.mxu0 0.0
        %1439 = vmatmul.mubr.f32.gmra.mrb[0].mxu0 %v1233
        %v1440 = vpop.f32.mrb[0].mxu0
        %v1441 = vadd.f32 0.0, %v1440
        %v1442 = vpop.f32.mrb[0].mxu0
        %1443 = vmatprep.mubr.f32.mxu0 0.0
        %1444 = vmatmul.mubr.f32.gmra.mrb[0].mxu0 %v1236
        %v1445 = vpop.f32.mrb[0].mxu0
        %v1446 = vadd.f32 0.0, %v1445
        %v1447 = vpop.f32.mrb[0].mxu0
        %1448 = vmatprep.mubr.f32.mxu0 0.0
        %1449 = vmatmul.mubr.f32.gmra.mrb[0].mxu0 %v1239
        %v1450 = vpop.f32.mrb[0].mxu0
        %v1451 = vadd.f32 0.0, %v1450
        %v1452 = vpop.f32.mrb[0].mxu0
        %1453 = vmatprep.mubr.f32.mxu0 0.0
        %1454 = vmatmul.mubr.f32.gmra.mrb[0].mxu0 %v1242
        %v1455 = vpop.f32.mrb[0].mxu0
        %v1456 = vadd.f32 0.0, %v1455
        %v1457 = vpop.f32.mrb[0].mxu0
        %1458 = vmatprep.mubr.f32.mxu0 0.0
        %1459 = vmatmul.mubr.f32.gmra.mrb[0].mxu0 %v1245
        %v1460 = vpop.f32.mrb[0].mxu0
        %v1461 = vadd.f32 0.0, %v1460
        %v1462 = vpop.f32.mrb[0].mxu0
        %1463 = vmatprep.mubr.f32.mxu0 0.0
        %1464 = vmatmul.mubr.f32.gmra.mrb[0].mxu0 %v1248
        %v1465 = vpop.f32.mrb[0].mxu0
        %v1466 = vadd.f32 0.0, %v1465
        %v1467 = vpop.f32.mrb[0].mxu0
        %1468 = vmatprep.mubr.f32.mxu0 0.0
        %1469 = vmatmul.mubr.f32.gmra.mrb[0].mxu0 %v1251
        %v1470 = vpop.f32.mrb[0].mxu0
        %v1471 = vadd.f32 0.0, %v1470
        %v1472 = vpop.f32.mrb[0].mxu0
        %1473 = vmatprep.mubr.f32.mxu0 0.0
        %1474 = vmatmul.mubr.f32.gmra.mrb[0].mxu0 %v1254
        %v1475 = vpop.f32.mrb[0].mxu0
        %v1476 = vadd.f32 0.0, %v1475
        %v1477 = vpop.f32.mrb[0].mxu0
        %1478 = vmatprep.mubr.f32.mxu0 0.0
        %1479 = vmatmul.mubr.f32.gmra.mrb[0].mxu0 %v1257
        %v1480 = vpop.f32.mrb[0].mxu0
        %v1481 = vadd.f32 0.0, %v1480
        %v1482 = vpop.f32.mrb[0].mxu0
        %1483 = vdwg.mxu0
        %v1484 = vmul.f32 %v1326, %v525
        %v1485 = vmul.f32 %v1331, %v530
        %v1486 = vmul.f32 %v1336, %v525
        %v1487 = vmul.f32 %v1341, %v530
        %v1488 = vmul.f32 %v1346, %v525
        %v1489 = vmul.f32 %v1351, %v530
        %v1490 = vmul.f32 %v1356, %v525
        %v1491 = vmul.f32 %v1361, %v530
        %v1492 = vmul.f32 %v1366, %v525
        %v1493 = vmul.f32 %v1371, %v530
        %v1494 = vmul.f32 %v1376, %v525
        %v1495 = vmul.f32 %v1381, %v530
        %v1496 = vmul.f32 %v1386, %v525
        %v1497 = vmul.f32 %v1391, %v530
        %v1498 = vmul.f32 %v1396, %v525
        %v1499 = vmul.f32 %v1401, %v530
        %v1500 = vmul.f32 %v1406, %v525
        %v1501 = vmul.f32 %v1411, %v530
        %v1502 = vmul.f32 %v1416, %v525
        %v1503 = vmul.f32 %v1421, %v530
        %v1504 = vmul.f32 %v1426, %v525
        %v1505 = vmul.f32 %v1431, %v530
        %v1506 = vmul.f32 %v1436, %v525
        %v1507 = vmul.f32 %v1441, %v530
        %v1508 = vmul.f32 %v1446, %v525
        %v1509 = vmul.f32 %v1451, %v530
        %v1510 = vmul.f32 %v1456, %v525
        %v1511 = vmul.f32 %v1461, %v530
        %v1512 = vmul.f32 %v1466, %v525
        %v1513 = vmul.f32 %v1471, %v530
        %v1514 = vmul.f32 %v1476, %v525
        %v1515 = vmul.f32 %v1481, %v530
        %v1516 = vld [vmem:[#allocation2] sm:$0xff]
        %v1517 = vld [vmem:[#allocation2 + $0x8] sm:$0xff]
        %v1518 = vld [vmem:[#allocation2 + $0x10] sm:$0xff]
        %v1519 = vld [vmem:[#allocation2 + $0x18] sm:$0xff]
        %v1520 = vld [vmem:[#allocation2 + $0x20] sm:$0xff]
        %v1521 = vld [vmem:[#allocation2 + $0x28] sm:$0xff]
        %v1522 = vld [vmem:[#allocation2 + $0x30] sm:$0xff]
        %v1523 = vld [vmem:[#allocation2 + $0x38] sm:$0xff]
        %v1524 = vld [vmem:[%s4 + $0x10] sm:$0xff]
        %v1525 = vld [vmem:[%s4 + $0x18] sm:$0xff]
        %v1526 = vld [vmem:[%s4 + $0x90] sm:$0xff]
        %v1527 = vld [vmem:[%s4 + $0x98] sm:$0xff]
        %v1528 = vld [vmem:[%s4 + $0x110] sm:$0xff]
        %v1529 = vld [vmem:[%s4 + $0x118] sm:$0xff]
        %v1530 = vld [vmem:[%s4 + $0x190] sm:$0xff]
        %v1531 = vld [vmem:[%s4 + $0x198] sm:$0xff]
        %v1532 = vld [vmem:[%s4 + $0x210] sm:$0xff]
        %v1533 = vld [vmem:[%s4 + $0x218] sm:$0xff]
        %v1534 = vld [vmem:[%s4 + $0x290] sm:$0xff]
        %v1535 = vld [vmem:[%s4 + $0x298] sm:$0xff]
        %v1536 = vld [vmem:[%s4 + $0x310] sm:$0xff]
        %v1537 = vld [vmem:[%s4 + $0x318] sm:$0xff]
        %v1538 = vld [vmem:[%s4 + $0x390] sm:$0xff]
        %v1539 = vld [vmem:[%s4 + $0x398] sm:$0xff]
        %1540 = vmatprep.subr.mxu0 0.0
        %1541 = vmatpush1.msra.mxu0 %v1484
        %1542 = vmatprep.subr.mxu0 0.0
        %1543 = vmatpush1.msra.mxu0 %v1485
        %1544 = vmatprep.subr.mxu0 0.0
        %1545 = vmatpush1.msra.mxu0 %v1486
        %1546 = vmatprep.subr.mxu0 0.0
        %1547 = vmatpush1.msra.mxu0 %v1487
        %1548 = vmatprep.subr.mxu0 0.0
        %1549 = vmatpush1.msra.mxu0 %v1488
        %1550 = vmatprep.subr.mxu0 0.0
        %1551 = vmatpush1.msra.mxu0 %v1489
        %1552 = vmatprep.subr.mxu0 0.0
        %1553 = vmatpush1.msra.mxu0 %v1490
        %1554 = vmatprep.subr.mxu0 0.0
        %1555 = vmatpush1.msra.mxu0 %v1491
        %1556 = vmatprep.subr.mxu0 0.0
        %1557 = vmatpush1.msra.mxu0 %v1492
        %1558 = vmatprep.subr.mxu0 0.0
        %1559 = vmatpush1.msra.mxu0 %v1493
        %1560 = vmatprep.subr.mxu0 0.0
        %1561 = vmatpush1.msra.mxu0 %v1494
        %1562 = vmatprep.subr.mxu0 0.0
        %1563 = vmatpush1.msra.mxu0 %v1495
        %1564 = vmatprep.subr.mxu0 0.0
        %1565 = vmatpush1.msra.mxu0 %v1496
        %1566 = vmatprep.subr.mxu0 0.0
        %1567 = vmatpush1.msra.mxu0 %v1497
        %1568 = vmatprep.subr.mxu0 0.0
        %1569 = vmatpush1.msra.mxu0 %v1498
        %1570 = vmatprep.subr.mxu0 0.0
        %1571 = vmatpush1.msra.mxu0 %v1499
        %1572 = vmatprep.subr.mxu0 0.0
        %1573 = vmatpush1.msra.mxu0 %v1500
        %1574 = vmatprep.subr.mxu0 0.0
        %1575 = vmatpush1.msra.mxu0 %v1501
        %1576 = vmatprep.subr.mxu0 0.0
        %1577 = vmatpush1.msra.mxu0 %v1502
        %1578 = vmatprep.subr.mxu0 0.0
        %1579 = vmatpush1.msra.mxu0 %v1503
        %1580 = vmatprep.subr.mxu0 0.0
        %1581 = vmatpush1.msra.mxu0 %v1504
        %1582 = vmatprep.subr.mxu0 0.0
        %1583 = vmatpush1.msra.mxu0 %v1505
        %1584 = vmatprep.subr.mxu0 0.0
        %1585 = vmatpush1.msra.mxu0 %v1506
        %1586 = vmatprep.subr.mxu0 0.0
        %1587 = vmatpush1.msra.mxu0 %v1507
        %1588 = vmatprep.subr.mxu0 0.0
        %1589 = vmatpush1.msra.mxu0 %v1508
        %1590 = vmatprep.subr.mxu0 0.0
        %1591 = vmatpush1.msra.mxu0 %v1509
        %1592 = vmatprep.subr.mxu0 0.0
        %1593 = vmatpush1.msra.mxu0 %v1510
        %1594 = vmatprep.subr.mxu0 0.0
        %1595 = vmatpush1.msra.mxu0 %v1511
        %1596 = vmatprep.subr.mxu0 0.0
        %1597 = vmatpush1.msra.mxu0 %v1512
        %1598 = vmatprep.subr.mxu0 0.0
        %1599 = vmatpush1.msra.mxu0 %v1513
        %1600 = vmatprep.subr.mxu0 0.0
        %1601 = vmatpush1.msra.mxu0 %v1514
        %1602 = vmatprep.subr.mxu0 0.0
        %1603 = vmatpush1.msra.mxu0 %v1515
        %1604 = vmatprep.mubr.f32.mxu0 %v1525
        %1605 = vmatmul.mubr.f32.gmra.mrb[0].mxu0 %v1524
        %v1606 = vpop.f32.mrb[0].mxu0
        %v1607 = vadd.f32 0.0, %v1606
        %v1608 = vpop.f32.mrb[0].mxu0
        %1609 = vmatprep.mubr.f32.mxu0 %v1527
        %1610 = vmatmul.mubr.f32.gmra.mrb[0].mxu0 %v1526
        %v1611 = vpop.f32.mrb[0].mxu0
        %v1612 = vadd.f32 0.0, %v1611
        %v1613 = vpop.f32.mrb[0].mxu0
        %1614 = vmatprep.mubr.f32.mxu0 %v1529
        %1615 = vmatmul.mubr.f32.gmra.mrb[0].mxu0 %v1528
        %v1616 = vpop.f32.mrb[0].mxu0
        %v1617 = vadd.f32 0.0, %v1616
        %v1618 = vpop.f32.mrb[0].mxu0
        %1619 = vmatprep.mubr.f32.mxu0 %v1531
        %1620 = vmatmul.mubr.f32.gmra.mrb[0].mxu0 %v1530
        %v1621 = vpop.f32.mrb[0].mxu0
        %v1622 = vadd.f32 0.0, %v1621
        %v1623 = vpop.f32.mrb[0].mxu0
        %1624 = vmatprep.mubr.f32.mxu0 %v1533
        %1625 = vmatmul.mubr.f32.gmra.mrb[0].mxu0 %v1532
        %v1626 = vpop.f32.mrb[0].mxu0
        %v1627 = vadd.f32 0.0, %v1626
        %v1628 = vpop.f32.mrb[0].mxu0
        %1629 = vmatprep.mubr.f32.mxu0 %v1535
        %1630 = vmatmul.mubr.f32.gmra.mrb[0].mxu0 %v1534
        %v1631 = vpop.f32.mrb[0].mxu0
        %v1632 = vadd.f32 0.0, %v1631
        %v1633 = vpop.f32.mrb[0].mxu0
        %1634 = vmatprep.mubr.f32.mxu0 %v1537
        %1635 = vmatmul.mubr.f32.gmra.mrb[0].mxu0 %v1536
        %v1636 = vpop.f32.mrb[0].mxu0
        %v1637 = vadd.f32 0.0, %v1636
        %v1638 = vpop.f32.mrb[0].mxu0
        %1639 = vmatprep.mubr.f32.mxu0 %v1539
        %1640 = vmatmul.mubr.f32.gmra.mrb[0].mxu0 %v1538
        %v1641 = vpop.f32.mrb[0].mxu0
        %v1642 = vadd.f32 0.0, %v1641
        %v1643 = vpop.f32.mrb[0].mxu0
        %1644 = vdwg.mxu0
        %v1645 = vadd.f32 %v1516, %v1607
        %v1646 = vadd.f32 %v1517, %v1612
        %v1647 = vadd.f32 %v1518, %v1617
        %v1648 = vadd.f32 %v1519, %v1622
        %v1649 = vadd.f32 %v1520, %v1627
        %v1650 = vadd.f32 %v1521, %v1632
        %v1651 = vadd.f32 %v1522, %v1637
        %v1652 = vadd.f32 %v1523, %v1642
        %1653 = vst [vmem:[#allocation2] sm:$0xff] %v1645
        %1654 = vst [vmem:[#allocation2 + $0x8] sm:$0xff] %v1646
        %1655 = vst [vmem:[#allocation2 + $0x10] sm:$0xff] %v1647
        %1656 = vst [vmem:[#allocation2 + $0x18] sm:$0xff] %v1648
        %1657 = vst [vmem:[#allocation2 + $0x20] sm:$0xff] %v1649
        %1658 = vst [vmem:[#allocation2 + $0x28] sm:$0xff] %v1650
        %1659 = vst [vmem:[#allocation2 + $0x30] sm:$0xff] %v1651
        %1660 = vst [vmem:[#allocation2 + $0x38] sm:$0xff] %v1652
        %v1661 = vld [vmem:[%s2 + $0x200] sm:$0xff]
        %v1662 = vld [vmem:[%s2 + $0x208] sm:$0xff]
        %v1663 = vld [vmem:[%s2 + $0x210] sm:$0xff]
        %v1664 = vld [vmem:[%s2 + $0x218] sm:$0xff]
        %v1665 = vld [vmem:[%s2 + $0x220] sm:$0xff]
        %v1666 = vld [vmem:[%s2 + $0x228] sm:$0xff]
        %v1667 = vld [vmem:[%s2 + $0x230] sm:$0xff]
        %v1668 = vld [vmem:[%s2 + $0x238] sm:$0xff]
        %v1669 = vld [vmem:[%s2 + $0x240] sm:$0xff]
        %v1670 = vld [vmem:[%s2 + $0x248] sm:$0xff]
        %v1671 = vld [vmem:[%s2 + $0x250] sm:$0xff]
        %v1672 = vld [vmem:[%s2 + $0x258] sm:$0xff]
        %v1673 = vld [vmem:[%s2 + $0x260] sm:$0xff]
        %v1674 = vld [vmem:[%s2 + $0x268] sm:$0xff]
        %v1675 = vld [vmem:[%s2 + $0x270] sm:$0xff]
        %v1676 = vld [vmem:[%s2 + $0x278] sm:$0xff]
        %v1677 = vld [vmem:[%s2 + $0x280] sm:$0xff]
        %v1678 = vld [vmem:[%s2 + $0x288] sm:$0xff]
        %v1679 = vld [vmem:[%s2 + $0x290] sm:$0xff]
        %v1680 = vld [vmem:[%s2 + $0x298] sm:$0xff]
        %v1681 = vld [vmem:[%s2 + $0x2a0] sm:$0xff]
        %v1682 = vld [vmem:[%s2 + $0x2a8] sm:$0xff]
        %v1683 = vld [vmem:[%s2 + $0x2b0] sm:$0xff]
        %v1684 = vld [vmem:[%s2 + $0x2b8] sm:$0xff]
        %v1685 = vld [vmem:[%s2 + $0x2c0] sm:$0xff]
        %v1686 = vld [vmem:[%s2 + $0x2c8] sm:$0xff]
        %v1687 = vld [vmem:[%s2 + $0x2d0] sm:$0xff]
        %v1688 = vld [vmem:[%s2 + $0x2d8] sm:$0xff]
        %v1689 = vld [vmem:[%s2 + $0x2e0] sm:$0xff]
        %v1690 = vld [vmem:[%s2 + $0x2e8] sm:$0xff]
        %v1691 = vld [vmem:[%s2 + $0x2f0] sm:$0xff]
        %v1692 = vld [vmem:[%s2 + $0x2f8] sm:$0xff]
        %v1694 = vsel %vm399, %v1661, 0
        %v1697 = vsel %vm399, %v1662, 0
        %v1700 = vsel %vm399, %v1663, 0
        %v1703 = vsel %vm399, %v1664, 0
        %v1706 = vsel %vm399, %v1665, 0
        %v1709 = vsel %vm399, %v1666, 0
        %v1712 = vsel %vm399, %v1667, 0
        %v1715 = vsel %vm399, %v1668, 0
        %v1718 = vsel %vm399, %v1669, 0
        %v1721 = vsel %vm399, %v1670, 0
        %v1724 = vsel %vm399, %v1671, 0
        %v1727 = vsel %vm399, %v1672, 0
        %v1730 = vsel %vm399, %v1673, 0
        %v1733 = vsel %vm399, %v1674, 0
        %v1736 = vsel %vm399, %v1675, 0
        %v1739 = vsel %vm399, %v1676, 0
        %v1742 = vsel %vm399, %v1677, 0
        %v1745 = vsel %vm399, %v1678, 0
        %v1748 = vsel %vm399, %v1679, 0
        %v1751 = vsel %vm399, %v1680, 0
        %v1754 = vsel %vm399, %v1681, 0
        %v1757 = vsel %vm399, %v1682, 0
        %v1760 = vsel %vm399, %v1683, 0
        %v1763 = vsel %vm399, %v1684, 0
        %v1766 = vsel %vm399, %v1685, 0
        %v1769 = vsel %vm399, %v1686, 0
        %v1772 = vsel %vm399, %v1687, 0
        %v1775 = vsel %vm399, %v1688, 0
        %v1778 = vsel %vm399, %v1689, 0
        %v1781 = vsel %vm399, %v1690, 0
        %v1784 = vsel %vm399, %v1691, 0
        %v1787 = vsel %vm399, %v1692, 0
        %1789 = vmatprep.subr.mxu0 0.0
        %1790 = vmatpush1.msra.mxu0 %v367
        %1791 = vmatprep.subr.mxu0 0.0
        %1792 = vmatpush1.msra.mxu0 %v368
        %1793 = vmatprep.subr.mxu0 0.0
        %1794 = vmatpush1.msra.mxu0 %v369
        %1795 = vmatprep.subr.mxu0 0.0
        %1796 = vmatpush1.msra.mxu0 %v370
        %1797 = vmatprep.subr.mxu0 0.0
        %1798 = vmatpush1.msra.mxu0 %v371
        %1799 = vmatprep.subr.mxu0 0.0
        %1800 = vmatpush1.msra.mxu0 %v372
        %1801 = vmatprep.subr.mxu0 0.0
        %1802 = vmatpush1.msra.mxu0 %v373
        %1803 = vmatprep.subr.mxu0 0.0
        %1804 = vmatpush1.msra.mxu0 %v374
        %1805 = vmatprep.subr.mxu0 0.0
        %1806 = vmatpush1.msra.mxu0 0.0
        %1807 = vmatprep.subr.mxu0 0.0
        %1808 = vmatpush1.msra.mxu0 0.0
        %1809 = vmatprep.subr.mxu0 0.0
        %1810 = vmatpush1.msra.mxu0 0.0
        %1811 = vmatprep.subr.mxu0 0.0
        %1812 = vmatpush1.msra.mxu0 0.0
        %1813 = vmatprep.subr.mxu0 0.0
        %1814 = vmatpush1.msra.mxu0 0.0
        %1815 = vmatprep.subr.mxu0 0.0
        %1816 = vmatpush1.msra.mxu0 0.0
        %1817 = vmatprep.subr.mxu0 0.0
        %1818 = vmatpush1.msra.mxu0 0.0
        %1819 = vmatprep.subr.mxu0 0.0
        %1820 = vmatpush1.msra.mxu0 0.0
        %1821 = vmatprep.subr.mxu0 0.0
        %1822 = vmatpush1.msra.mxu0 0.0
        %1823 = vmatprep.subr.mxu0 0.0
        %1824 = vmatpush1.msra.mxu0 0.0
        %1825 = vmatprep.subr.mxu0 0.0
        %1826 = vmatpush1.msra.mxu0 0.0
        %1827 = vmatprep.subr.mxu0 0.0
        %1828 = vmatpush1.msra.mxu0 0.0
        %1829 = vmatprep.subr.mxu0 0.0
        %1830 = vmatpush1.msra.mxu0 0.0
        %1831 = vmatprep.subr.mxu0 0.0
        %1832 = vmatpush1.msra.mxu0 0.0
        %1833 = vmatprep.subr.mxu0 0.0
        %1834 = vmatpush1.msra.mxu0 0.0
        %1835 = vmatprep.subr.mxu0 0.0
        %1836 = vmatpush1.msra.mxu0 0.0
        %1837 = vmatprep.subr.mxu0 0.0
        %1838 = vmatpush1.msra.mxu0 0.0
        %1839 = vmatprep.subr.mxu0 0.0
        %1840 = vmatpush1.msra.mxu0 0.0
        %1841 = vmatprep.subr.mxu0 0.0
        %1842 = vmatpush1.msra.mxu0 0.0
        %1843 = vmatprep.subr.mxu0 0.0
        %1844 = vmatpush1.msra.mxu0 0.0
        %1845 = vmatprep.subr.mxu0 0.0
        %1846 = vmatpush1.msra.mxu0 0.0
        %1847 = vmatprep.subr.mxu0 0.0
        %1848 = vmatpush1.msra.mxu0 0.0
        %1849 = vmatprep.subr.mxu0 0.0
        %1850 = vmatpush1.msra.mxu0 0.0
        %1851 = vmatprep.subr.mxu0 0.0
        %1852 = vmatpush1.msra.mxu0 0.0
        %1853 = vmatprep.mubr.f32.mxu0 0.0
        %1854 = vmatmul.mubr.f32.gmra.mrb[0].mxu0 %v1694
        %v1855 = vpop.f32.mrb[0].mxu0
        %v1856 = vadd.f32 0.0, %v1855
        %v1857 = vpop.f32.mrb[0].mxu0
        %1858 = vmatprep.mubr.f32.mxu0 0.0
        %1859 = vmatmul.mubr.f32.gmra.mrb[0].mxu0 %v1697
        %v1860 = vpop.f32.mrb[0].mxu0
        %v1861 = vadd.f32 0.0, %v1860
        %v1862 = vpop.f32.mrb[0].mxu0
        %1863 = vmatprep.mubr.f32.mxu0 0.0
        %1864 = vmatmul.mubr.f32.gmra.mrb[0].mxu0 %v1700
        %v1865 = vpop.f32.mrb[0].mxu0
        %v1866 = vadd.f32 0.0, %v1865
        %v1867 = vpop.f32.mrb[0].mxu0
        %1868 = vmatprep.mubr.f32.mxu0 0.0
        %1869 = vmatmul.mubr.f32.gmra.mrb[0].mxu0 %v1703
        %v1870 = vpop.f32.mrb[0].mxu0
        %v1871 = vadd.f32 0.0, %v1870
        %v1872 = vpop.f32.mrb[0].mxu0
        %1873 = vmatprep.mubr.f32.mxu0 0.0
        %1874 = vmatmul.mubr.f32.gmra.mrb[0].mxu0 %v1706
        %v1875 = vpop.f32.mrb[0].mxu0
        %v1876 = vadd.f32 0.0, %v1875
        %v1877 = vpop.f32.mrb[0].mxu0
        %1878 = vmatprep.mubr.f32.mxu0 0.0
        %1879 = vmatmul.mubr.f32.gmra.mrb[0].mxu0 %v1709
        %v1880 = vpop.f32.mrb[0].mxu0
        %v1881 = vadd.f32 0.0, %v1880
        %v1882 = vpop.f32.mrb[0].mxu0
        %1883 = vmatprep.mubr.f32.mxu0 0.0
        %1884 = vmatmul.mubr.f32.gmra.mrb[0].mxu0 %v1712
        %v1885 = vpop.f32.mrb[0].mxu0
        %v1886 = vadd.f32 0.0, %v1885
        %v1887 = vpop.f32.mrb[0].mxu0
        %1888 = vmatprep.mubr.f32.mxu0 0.0
        %1889 = vmatmul.mubr.f32.gmra.mrb[0].mxu0 %v1715
        %v1890 = vpop.f32.mrb[0].mxu0
        %v1891 = vadd.f32 0.0, %v1890
        %v1892 = vpop.f32.mrb[0].mxu0
        %1893 = vmatprep.mubr.f32.mxu0 0.0
        %1894 = vmatmul.mubr.f32.gmra.mrb[0].mxu0 %v1718
        %v1895 = vpop.f32.mrb[0].mxu0
        %v1896 = vadd.f32 0.0, %v1895
        %v1897 = vpop.f32.mrb[0].mxu0
        %1898 = vmatprep.mubr.f32.mxu0 0.0
        %1899 = vmatmul.mubr.f32.gmra.mrb[0].mxu0 %v1721
        %v1900 = vpop.f32.mrb[0].mxu0
        %v1901 = vadd.f32 0.0, %v1900
        %v1902 = vpop.f32.mrb[0].mxu0
        %1903 = vmatprep.mubr.f32.mxu0 0.0
        %1904 = vmatmul.mubr.f32.gmra.mrb[0].mxu0 %v1724
        %v1905 = vpop.f32.mrb[0].mxu0
        %v1906 = vadd.f32 0.0, %v1905
        %v1907 = vpop.f32.mrb[0].mxu0
        %1908 = vmatprep.mubr.f32.mxu0 0.0
        %1909 = vmatmul.mubr.f32.gmra.mrb[0].mxu0 %v1727
        %v1910 = vpop.f32.mrb[0].mxu0
        %v1911 = vadd.f32 0.0, %v1910
        %v1912 = vpop.f32.mrb[0].mxu0
        %1913 = vmatprep.mubr.f32.mxu0 0.0
        %1914 = vmatmul.mubr.f32.gmra.mrb[0].mxu0 %v1730
        %v1915 = vpop.f32.mrb[0].mxu0
        %v1916 = vadd.f32 0.0, %v1915
        %v1917 = vpop.f32.mrb[0].mxu0
        %1918 = vmatprep.mubr.f32.mxu0 0.0
        %1919 = vmatmul.mubr.f32.gmra.mrb[0].mxu0 %v1733
        %v1920 = vpop.f32.mrb[0].mxu0
        %v1921 = vadd.f32 0.0, %v1920
        %v1922 = vpop.f32.mrb[0].mxu0
        %1923 = vmatprep.mubr.f32.mxu0 0.0
        %1924 = vmatmul.mubr.f32.gmra.mrb[0].mxu0 %v1736
        %v1925 = vpop.f32.mrb[0].mxu0
        %v1926 = vadd.f32 0.0, %v1925
        %v1927 = vpop.f32.mrb[0].mxu0
        %1928 = vmatprep.mubr.f32.mxu0 0.0
        %1929 = vmatmul.mubr.f32.gmra.mrb[0].mxu0 %v1739
        %v1930 = vpop.f32.mrb[0].mxu0
        %v1931 = vadd.f32 0.0, %v1930
        %v1932 = vpop.f32.mrb[0].mxu0
        %1933 = vmatprep.mubr.f32.mxu0 0.0
        %1934 = vmatmul.mubr.f32.gmra.mrb[0].mxu0 %v1742
        %v1935 = vpop.f32.mrb[0].mxu0
        %v1936 = vadd.f32 0.0, %v1935
        %v1937 = vpop.f32.mrb[0].mxu0
        %1938 = vmatprep.mubr.f32.mxu0 0.0
        %1939 = vmatmul.mubr.f32.gmra.mrb[0].mxu0 %v1745
        %v1940 = vpop.f32.mrb[0].mxu0
        %v1941 = vadd.f32 0.0, %v1940
        %v1942 = vpop.f32.mrb[0].mxu0
        %1943 = vmatprep.mubr.f32.mxu0 0.0
        %1944 = vmatmul.mubr.f32.gmra.mrb[0].mxu0 %v1748
        %v1945 = vpop.f32.mrb[0].mxu0
        %v1946 = vadd.f32 0.0, %v1945
        %v1947 = vpop.f32.mrb[0].mxu0
        %1948 = vmatprep.mubr.f32.mxu0 0.0
        %1949 = vmatmul.mubr.f32.gmra.mrb[0].mxu0 %v1751
        %v1950 = vpop.f32.mrb[0].mxu0
        %v1951 = vadd.f32 0.0, %v1950
        %v1952 = vpop.f32.mrb[0].mxu0
        %1953 = vmatprep.mubr.f32.mxu0 0.0
        %1954 = vmatmul.mubr.f32.gmra.mrb[0].mxu0 %v1754
        %v1955 = vpop.f32.mrb[0].mxu0
        %v1956 = vadd.f32 0.0, %v1955
        %v1957 = vpop.f32.mrb[0].mxu0
        %1958 = vmatprep.mubr.f32.mxu0 0.0
        %1959 = vmatmul.mubr.f32.gmra.mrb[0].mxu0 %v1757
        %v1960 = vpop.f32.mrb[0].mxu0
        %v1961 = vadd.f32 0.0, %v1960
        %v1962 = vpop.f32.mrb[0].mxu0
        %1963 = vmatprep.mubr.f32.mxu0 0.0
        %1964 = vmatmul.mubr.f32.gmra.mrb[0].mxu0 %v1760
        %v1965 = vpop.f32.mrb[0].mxu0
        %v1966 = vadd.f32 0.0, %v1965
        %v1967 = vpop.f32.mrb[0].mxu0
        %1968 = vmatprep.mubr.f32.mxu0 0.0
        %1969 = vmatmul.mubr.f32.gmra.mrb[0].mxu0 %v1763
        %v1970 = vpop.f32.mrb[0].mxu0
        %v1971 = vadd.f32 0.0, %v1970
        %v1972 = vpop.f32.mrb[0].mxu0
        %1973 = vmatprep.mubr.f32.mxu0 0.0
        %1974 = vmatmul.mubr.f32.gmra.mrb[0].mxu0 %v1766
        %v1975 = vpop.f32.mrb[0].mxu0
        %v1976 = vadd.f32 0.0, %v1975
        %v1977 = vpop.f32.mrb[0].mxu0
        %1978 = vmatprep.mubr.f32.mxu0 0.0
        %1979 = vmatmul.mubr.f32.gmra.mrb[0].mxu0 %v1769
        %v1980 = vpop.f32.mrb[0].mxu0
        %v1981 = vadd.f32 0.0, %v1980
        %v1982 = vpop.f32.mrb[0].mxu0
        %1983 = vmatprep.mubr.f32.mxu0 0.0
        %1984 = vmatmul.mubr.f32.gmra.mrb[0].mxu0 %v1772
        %v1985 = vpop.f32.mrb[0].mxu0
        %v1986 = vadd.f32 0.0, %v1985
        %v1987 = vpop.f32.mrb[0].mxu0
        %1988 = vmatprep.mubr.f32.mxu0 0.0
        %1989 = vmatmul.mubr.f32.gmra.mrb[0].mxu0 %v1775
        %v1990 = vpop.f32.mrb[0].mxu0
        %v1991 = vadd.f32 0.0, %v1990
        %v1992 = vpop.f32.mrb[0].mxu0
        %1993 = vmatprep.mubr.f32.mxu0 0.0
        %1994 = vmatmul.mubr.f32.gmra.mrb[0].mxu0 %v1778
        %v1995 = vpop.f32.mrb[0].mxu0
        %v1996 = vadd.f32 0.0, %v1995
        %v1997 = vpop.f32.mrb[0].mxu0
        %1998 = vmatprep.mubr.f32.mxu0 0.0
        %1999 = vmatmul.mubr.f32.gmra.mrb[0].mxu0 %v1781
        %v2000 = vpop.f32.mrb[0].mxu0
        %v2001 = vadd.f32 0.0, %v2000
        %v2002 = vpop.f32.mrb[0].mxu0
        %2003 = vmatprep.mubr.f32.mxu0 0.0
        %2004 = vmatmul.mubr.f32.gmra.mrb[0].mxu0 %v1784
        %v2005 = vpop.f32.mrb[0].mxu0
        %v2006 = vadd.f32 0.0, %v2005
        %v2007 = vpop.f32.mrb[0].mxu0
        %2008 = vmatprep.mubr.f32.mxu0 0.0
        %2009 = vmatmul.mubr.f32.gmra.mrb[0].mxu0 %v1787
        %v2010 = vpop.f32.mrb[0].mxu0
        %v2011 = vadd.f32 0.0, %v2010
        %v2012 = vpop.f32.mrb[0].mxu0
        %2013 = vdwg.mxu0
        %v2014 = vmul.f32 %v1856, %v535
        %v2015 = vmul.f32 %v1861, %v540
        %v2016 = vmul.f32 %v1866, %v535
        %v2017 = vmul.f32 %v1871, %v540
        %v2018 = vmul.f32 %v1876, %v535
        %v2019 = vmul.f32 %v1881, %v540
        %v2020 = vmul.f32 %v1886, %v535
        %v2021 = vmul.f32 %v1891, %v540
        %v2022 = vmul.f32 %v1896, %v535
        %v2023 = vmul.f32 %v1901, %v540
        %v2024 = vmul.f32 %v1906, %v535
        %v2025 = vmul.f32 %v1911, %v540
        %v2026 = vmul.f32 %v1916, %v535
        %v2027 = vmul.f32 %v1921, %v540
        %v2028 = vmul.f32 %v1926, %v535
        %v2029 = vmul.f32 %v1931, %v540
        %v2030 = vmul.f32 %v1936, %v535
        %v2031 = vmul.f32 %v1941, %v540
        %v2032 = vmul.f32 %v1946, %v535
        %v2033 = vmul.f32 %v1951, %v540
        %v2034 = vmul.f32 %v1956, %v535
        %v2035 = vmul.f32 %v1961, %v540
        %v2036 = vmul.f32 %v1966, %v535
        %v2037 = vmul.f32 %v1971, %v540
        %v2038 = vmul.f32 %v1976, %v535
        %v2039 = vmul.f32 %v1981, %v540
        %v2040 = vmul.f32 %v1986, %v535
        %v2041 = vmul.f32 %v1991, %v540
        %v2042 = vmul.f32 %v1996, %v535
        %v2043 = vmul.f32 %v2001, %v540
        %v2044 = vmul.f32 %v2006, %v535
        %v2045 = vmul.f32 %v2011, %v540
        %v2046 = vld [vmem:[#allocation2] sm:$0xff]
        %v2047 = vld [vmem:[#allocation2 + $0x8] sm:$0xff]
        %v2048 = vld [vmem:[#allocation2 + $0x10] sm:$0xff]
        %v2049 = vld [vmem:[#allocation2 + $0x18] sm:$0xff]
        %v2050 = vld [vmem:[#allocation2 + $0x20] sm:$0xff]
        %v2051 = vld [vmem:[#allocation2 + $0x28] sm:$0xff]
        %v2052 = vld [vmem:[#allocation2 + $0x30] sm:$0xff]
        %v2053 = vld [vmem:[#allocation2 + $0x38] sm:$0xff]
        %v2054 = vld [vmem:[%s4 + $0x20] sm:$0xff]
        %v2055 = vld [vmem:[%s4 + $0x28] sm:$0xff]
        %v2056 = vld [vmem:[%s4 + $0xa0] sm:$0xff]
        %v2057 = vld [vmem:[%s4 + $0xa8] sm:$0xff]
        %v2058 = vld [vmem:[%s4 + $0x120] sm:$0xff]
        %v2059 = vld [vmem:[%s4 + $0x128] sm:$0xff]
        %v2060 = vld [vmem:[%s4 + $0x1a0] sm:$0xff]
        %v2061 = vld [vmem:[%s4 + $0x1a8] sm:$0xff]
        %v2062 = vld [vmem:[%s4 + $0x220] sm:$0xff]
        %v2063 = vld [vmem:[%s4 + $0x228] sm:$0xff]
        %v2064 = vld [vmem:[%s4 + $0x2a0] sm:$0xff]
        %v2065 = vld [vmem:[%s4 + $0x2a8] sm:$0xff]
        %v2066 = vld [vmem:[%s4 + $0x320] sm:$0xff]
        %v2067 = vld [vmem:[%s4 + $0x328] sm:$0xff]
        %v2068 = vld [vmem:[%s4 + $0x3a0] sm:$0xff]
        %v2069 = vld [vmem:[%s4 + $0x3a8] sm:$0xff]
        %2070 = vmatprep.subr.mxu0 0.0
        %2071 = vmatpush1.msra.mxu0 %v2014
        %2072 = vmatprep.subr.mxu0 0.0
        %2073 = vmatpush1.msra.mxu0 %v2015
        %2074 = vmatprep.subr.mxu0 0.0
        %2075 = vmatpush1.msra.mxu0 %v2016
        %2076 = vmatprep.subr.mxu0 0.0
        %2077 = vmatpush1.msra.mxu0 %v2017
        %2078 = vmatprep.subr.mxu0 0.0
        %2079 = vmatpush1.msra.mxu0 %v2018
        %2080 = vmatprep.subr.mxu0 0.0
        %2081 = vmatpush1.msra.mxu0 %v2019
        %2082 = vmatprep.subr.mxu0 0.0
        %2083 = vmatpush1.msra.mxu0 %v2020
        %2084 = vmatprep.subr.mxu0 0.0
        %2085 = vmatpush1.msra.mxu0 %v2021
        %2086 = vmatprep.subr.mxu0 0.0
        %2087 = vmatpush1.msra.mxu0 %v2022
        %2088 = vmatprep.subr.mxu0 0.0
        %2089 = vmatpush1.msra.mxu0 %v2023
        %2090 = vmatprep.subr.mxu0 0.0
        %2091 = vmatpush1.msra.mxu0 %v2024
        %2092 = vmatprep.subr.mxu0 0.0
        %2093 = vmatpush1.msra.mxu0 %v2025
        %2094 = vmatprep.subr.mxu0 0.0
        %2095 = vmatpush1.msra.mxu0 %v2026
        %2096 = vmatprep.subr.mxu0 0.0
        %2097 = vmatpush1.msra.mxu0 %v2027
        %2098 = vmatprep.subr.mxu0 0.0
        %2099 = vmatpush1.msra.mxu0 %v2028
        %2100 = vmatprep.subr.mxu0 0.0
        %2101 = vmatpush1.msra.mxu0 %v2029
        %2102 = vmatprep.subr.mxu0 0.0
        %2103 = vmatpush1.msra.mxu0 %v2030
        %2104 = vmatprep.subr.mxu0 0.0
        %2105 = vmatpush1.msra.mxu0 %v2031
        %2106 = vmatprep.subr.mxu0 0.0
        %2107 = vmatpush1.msra.mxu0 %v2032
        %2108 = vmatprep.subr.mxu0 0.0
        %2109 = vmatpush1.msra.mxu0 %v2033
        %2110 = vmatprep.subr.mxu0 0.0
        %2111 = vmatpush1.msra.mxu0 %v2034
        %2112 = vmatprep.subr.mxu0 0.0
        %2113 = vmatpush1.msra.mxu0 %v2035
        %2114 = vmatprep.subr.mxu0 0.0
        %2115 = vmatpush1.msra.mxu0 %v2036
        %2116 = vmatprep.subr.mxu0 0.0
        %2117 = vmatpush1.msra.mxu0 %v2037
        %2118 = vmatprep.subr.mxu0 0.0
        %2119 = vmatpush1.msra.mxu0 %v2038
        %2120 = vmatprep.subr.mxu0 0.0
        %2121 = vmatpush1.msra.mxu0 %v2039
        %2122 = vmatprep.subr.mxu0 0.0
        %2123 = vmatpush1.msra.mxu0 %v2040
        %2124 = vmatprep.subr.mxu0 0.0
        %2125 = vmatpush1.msra.mxu0 %v2041
        %2126 = vmatprep.subr.mxu0 0.0
        %2127 = vmatpush1.msra.mxu0 %v2042
        %2128 = vmatprep.subr.mxu0 0.0
        %2129 = vmatpush1.msra.mxu0 %v2043
        %2130 = vmatprep.subr.mxu0 0.0
        %2131 = vmatpush1.msra.mxu0 %v2044
        %2132 = vmatprep.subr.mxu0 0.0
        %2133 = vmatpush1.msra.mxu0 %v2045
        %2134 = vmatprep.mubr.f32.mxu0 %v2055
        %2135 = vmatmul.mubr.f32.gmra.mrb[0].mxu0 %v2054
        %v2136 = vpop.f32.mrb[0].mxu0
        %v2137 = vadd.f32 0.0, %v2136
        %v2138 = vpop.f32.mrb[0].mxu0
        %2139 = vmatprep.mubr.f32.mxu0 %v2057
        %2140 = vmatmul.mubr.f32.gmra.mrb[0].mxu0 %v2056
        %v2141 = vpop.f32.mrb[0].mxu0
        %v2142 = vadd.f32 0.0, %v2141
        %v2143 = vpop.f32.mrb[0].mxu0
        %2144 = vmatprep.mubr.f32.mxu0 %v2059
        %2145 = vmatmul.mubr.f32.gmra.mrb[0].mxu0 %v2058
        %v2146 = vpop.f32.mrb[0].mxu0
        %v2147 = vadd.f32 0.0, %v2146
        %v2148 = vpop.f32.mrb[0].mxu0
        %2149 = vmatprep.mubr.f32.mxu0 %v2061
        %2150 = vmatmul.mubr.f32.gmra.mrb[0].mxu0 %v2060
        %v2151 = vpop.f32.mrb[0].mxu0
        %v2152 = vadd.f32 0.0, %v2151
        %v2153 = vpop.f32.mrb[0].mxu0
        %2154 = vmatprep.mubr.f32.mxu0 %v2063
        %2155 = vmatmul.mubr.f32.gmra.mrb[0].mxu0 %v2062
        %v2156 = vpop.f32.mrb[0].mxu0
        %v2157 = vadd.f32 0.0, %v2156
        %v2158 = vpop.f32.mrb[0].mxu0
        %2159 = vmatprep.mubr.f32.mxu0 %v2065
        %2160 = vmatmul.mubr.f32.gmra.mrb[0].mxu0 %v2064
        %v2161 = vpop.f32.mrb[0].mxu0
        %v2162 = vadd.f32 0.0, %v2161
        %v2163 = vpop.f32.mrb[0].mxu0
        %2164 = vmatprep.mubr.f32.mxu0 %v2067
        %2165 = vmatmul.mubr.f32.gmra.mrb[0].mxu0 %v2066
        %v2166 = vpop.f32.mrb[0].mxu0
        %v2167 = vadd.f32 0.0, %v2166
        %v2168 = vpop.f32.mrb[0].mxu0
        %2169 = vmatprep.mubr.f32.mxu0 %v2069
        %2170 = vmatmul.mubr.f32.gmra.mrb[0].mxu0 %v2068
        %v2171 = vpop.f32.mrb[0].mxu0
        %v2172 = vadd.f32 0.0, %v2171
        %v2173 = vpop.f32.mrb[0].mxu0
        %2174 = vdwg.mxu0
        %v2175 = vadd.f32 %v2046, %v2137
        %v2176 = vadd.f32 %v2047, %v2142
        %v2177 = vadd.f32 %v2048, %v2147
        %v2178 = vadd.f32 %v2049, %v2152
        %v2179 = vadd.f32 %v2050, %v2157
        %v2180 = vadd.f32 %v2051, %v2162
        %v2181 = vadd.f32 %v2052, %v2167
        %v2182 = vadd.f32 %v2053, %v2172
        %2183 = vst [vmem:[#allocation2] sm:$0xff] %v2175
        %2184 = vst [vmem:[#allocation2 + $0x8] sm:$0xff] %v2176
        %2185 = vst [vmem:[#allocation2 + $0x10] sm:$0xff] %v2177
        %2186 = vst [vmem:[#allocation2 + $0x18] sm:$0xff] %v2178
        %2187 = vst [vmem:[#allocation2 + $0x20] sm:$0xff] %v2179
        %2188 = vst [vmem:[#allocation2 + $0x28] sm:$0xff] %v2180
        %2189 = vst [vmem:[#allocation2 + $0x30] sm:$0xff] %v2181
        %2190 = vst [vmem:[#allocation2 + $0x38] sm:$0xff] %v2182
        %v2191 = vld [vmem:[%s2 + $0x300] sm:$0xff]
        %v2192 = vld [vmem:[%s2 + $0x308] sm:$0xff]
        %v2193 = vld [vmem:[%s2 + $0x310] sm:$0xff]
        %v2194 = vld [vmem:[%s2 + $0x318] sm:$0xff]
        %v2195 = vld [vmem:[%s2 + $0x320] sm:$0xff]
        %v2196 = vld [vmem:[%s2 + $0x328] sm:$0xff]
        %v2197 = vld [vmem:[%s2 + $0x330] sm:$0xff]
        %v2198 = vld [vmem:[%s2 + $0x338] sm:$0xff]
        %v2199 = vld [vmem:[%s2 + $0x340] sm:$0xff]
        %v2200 = vld [vmem:[%s2 + $0x348] sm:$0xff]
        %v2201 = vld [vmem:[%s2 + $0x350] sm:$0xff]
        %v2202 = vld [vmem:[%s2 + $0x358] sm:$0xff]
        %v2203 = vld [vmem:[%s2 + $0x360] sm:$0xff]
        %v2204 = vld [vmem:[%s2 + $0x368] sm:$0xff]
        %v2205 = vld [vmem:[%s2 + $0x370] sm:$0xff]
        %v2206 = vld [vmem:[%s2 + $0x378] sm:$0xff]
        %v2207 = vld [vmem:[%s2 + $0x380] sm:$0xff]
        %v2208 = vld [vmem:[%s2 + $0x388] sm:$0xff]
        %v2209 = vld [vmem:[%s2 + $0x390] sm:$0xff]
        %v2210 = vld [vmem:[%s2 + $0x398] sm:$0xff]
        %v2211 = vld [vmem:[%s2 + $0x3a0] sm:$0xff]
        %v2212 = vld [vmem:[%s2 + $0x3a8] sm:$0xff]
        %v2213 = vld [vmem:[%s2 + $0x3b0] sm:$0xff]
        %v2214 = vld [vmem:[%s2 + $0x3b8] sm:$0xff]
        %v2215 = vld [vmem:[%s2 + $0x3c0] sm:$0xff]
        %v2216 = vld [vmem:[%s2 + $0x3c8] sm:$0xff]
        %v2217 = vld [vmem:[%s2 + $0x3d0] sm:$0xff]
        %v2218 = vld [vmem:[%s2 + $0x3d8] sm:$0xff]
        %v2219 = vld [vmem:[%s2 + $0x3e0] sm:$0xff]
        %v2220 = vld [vmem:[%s2 + $0x3e8] sm:$0xff]
        %v2221 = vld [vmem:[%s2 + $0x3f0] sm:$0xff]
        %v2222 = vld [vmem:[%s2 + $0x3f8] sm:$0xff]
        %v2224 = vsel %vm399, %v2191, 0
        %v2227 = vsel %vm399, %v2192, 0
        %v2230 = vsel %vm399, %v2193, 0
        %v2233 = vsel %vm399, %v2194, 0
        %v2236 = vsel %vm399, %v2195, 0
        %v2239 = vsel %vm399, %v2196, 0
        %v2242 = vsel %vm399, %v2197, 0
        %v2245 = vsel %vm399, %v2198, 0
        %v2248 = vsel %vm399, %v2199, 0
        %v2251 = vsel %vm399, %v2200, 0
        %v2254 = vsel %vm399, %v2201, 0
        %v2257 = vsel %vm399, %v2202, 0
        %v2260 = vsel %vm399, %v2203, 0
        %v2263 = vsel %vm399, %v2204, 0
        %v2266 = vsel %vm399, %v2205, 0
        %v2269 = vsel %vm399, %v2206, 0
        %v2272 = vsel %vm399, %v2207, 0
        %v2275 = vsel %vm399, %v2208, 0
        %v2278 = vsel %vm399, %v2209, 0
        %v2281 = vsel %vm399, %v2210, 0
        %v2284 = vsel %vm399, %v2211, 0
        %v2287 = vsel %vm399, %v2212, 0
        %v2290 = vsel %vm399, %v2213, 0
        %v2293 = vsel %vm399, %v2214, 0
        %v2296 = vsel %vm399, %v2215, 0
        %v2299 = vsel %vm399, %v2216, 0
        %v2302 = vsel %vm399, %v2217, 0
        %v2305 = vsel %vm399, %v2218, 0
        %v2308 = vsel %vm399, %v2219, 0
        %v2311 = vsel %vm399, %v2220, 0
        %v2314 = vsel %vm399, %v2221, 0
        %v2317 = vsel %vm399, %v2222, 0
        %2319 = vmatprep.subr.mxu0 0.0
        %2320 = vmatpush1.msra.mxu0 %v367
        %2321 = vmatprep.subr.mxu0 0.0
        %2322 = vmatpush1.msra.mxu0 %v368
        %2323 = vmatprep.subr.mxu0 0.0
        %2324 = vmatpush1.msra.mxu0 %v369
        %2325 = vmatprep.subr.mxu0 0.0
        %2326 = vmatpush1.msra.mxu0 %v370
        %2327 = vmatprep.subr.mxu0 0.0
        %2328 = vmatpush1.msra.mxu0 %v371
        %2329 = vmatprep.subr.mxu0 0.0
        %2330 = vmatpush1.msra.mxu0 %v372
        %2331 = vmatprep.subr.mxu0 0.0
        %2332 = vmatpush1.msra.mxu0 %v373
        %2333 = vmatprep.subr.mxu0 0.0
        %2334 = vmatpush1.msra.mxu0 %v374
        %2335 = vmatprep.subr.mxu0 0.0
        %2336 = vmatpush1.msra.mxu0 0.0
        %2337 = vmatprep.subr.mxu0 0.0
        %2338 = vmatpush1.msra.mxu0 0.0
        %2339 = vmatprep.subr.mxu0 0.0
        %2340 = vmatpush1.msra.mxu0 0.0
        %2341 = vmatprep.subr.mxu0 0.0
        %2342 = vmatpush1.msra.mxu0 0.0
        %2343 = vmatprep.subr.mxu0 0.0
        %2344 = vmatpush1.msra.mxu0 0.0
        %2345 = vmatprep.subr.mxu0 0.0
        %2346 = vmatpush1.msra.mxu0 0.0
        %2347 = vmatprep.subr.mxu0 0.0
        %2348 = vmatpush1.msra.mxu0 0.0
        %2349 = vmatprep.subr.mxu0 0.0
        %2350 = vmatpush1.msra.mxu0 0.0
        %2351 = vmatprep.subr.mxu0 0.0
        %2352 = vmatpush1.msra.mxu0 0.0
        %2353 = vmatprep.subr.mxu0 0.0
        %2354 = vmatpush1.msra.mxu0 0.0
        %2355 = vmatprep.subr.mxu0 0.0
        %2356 = vmatpush1.msra.mxu0 0.0
        %2357 = vmatprep.subr.mxu0 0.0
        %2358 = vmatpush1.msra.mxu0 0.0
        %2359 = vmatprep.subr.mxu0 0.0
        %2360 = vmatpush1.msra.mxu0 0.0
        %2361 = vmatprep.subr.mxu0 0.0
        %2362 = vmatpush1.msra.mxu0 0.0
        %2363 = vmatprep.subr.mxu0 0.0
        %2364 = vmatpush1.msra.mxu0 0.0
        %2365 = vmatprep.subr.mxu0 0.0
        %2366 = vmatpush1.msra.mxu0 0.0
        %2367 = vmatprep.subr.mxu0 0.0
        %2368 = vmatpush1.msra.mxu0 0.0
        %2369 = vmatprep.subr.mxu0 0.0
        %2370 = vmatpush1.msra.mxu0 0.0
        %2371 = vmatprep.subr.mxu0 0.0
        %2372 = vmatpush1.msra.mxu0 0.0
        %2373 = vmatprep.subr.mxu0 0.0
        %2374 = vmatpush1.msra.mxu0 0.0
        %2375 = vmatprep.subr.mxu0 0.0
        %2376 = vmatpush1.msra.mxu0 0.0
        %2377 = vmatprep.subr.mxu0 0.0
        %2378 = vmatpush1.msra.mxu0 0.0
        %2379 = vmatprep.subr.mxu0 0.0
        %2380 = vmatpush1.msra.mxu0 0.0
        %2381 = vmatprep.subr.mxu0 0.0
        %2382 = vmatpush1.msra.mxu0 0.0
        %2383 = vmatprep.mubr.f32.mxu0 0.0
        %2384 = vmatmul.mubr.f32.gmra.mrb[0].mxu0 %v2224
        %v2385 = vpop.f32.mrb[0].mxu0
        %v2386 = vadd.f32 0.0, %v2385
        %v2387 = vpop.f32.mrb[0].mxu0
        %2388 = vmatprep.mubr.f32.mxu0 0.0
        %2389 = vmatmul.mubr.f32.gmra.mrb[0].mxu0 %v2227
        %v2390 = vpop.f32.mrb[0].mxu0
        %v2391 = vadd.f32 0.0, %v2390
        %v2392 = vpop.f32.mrb[0].mxu0
        %2393 = vmatprep.mubr.f32.mxu0 0.0
        %2394 = vmatmul.mubr.f32.gmra.mrb[0].mxu0 %v2230
        %v2395 = vpop.f32.mrb[0].mxu0
        %v2396 = vadd.f32 0.0, %v2395
        %v2397 = vpop.f32.mrb[0].mxu0
        %2398 = vmatprep.mubr.f32.mxu0 0.0
        %2399 = vmatmul.mubr.f32.gmra.mrb[0].mxu0 %v2233
        %v2400 = vpop.f32.mrb[0].mxu0
        %v2401 = vadd.f32 0.0, %v2400
        %v2402 = vpop.f32.mrb[0].mxu0
        %2403 = vmatprep.mubr.f32.mxu0 0.0
        %2404 = vmatmul.mubr.f32.gmra.mrb[0].mxu0 %v2236
        %v2405 = vpop.f32.mrb[0].mxu0
        %v2406 = vadd.f32 0.0, %v2405
        %v2407 = vpop.f32.mrb[0].mxu0
        %2408 = vmatprep.mubr.f32.mxu0 0.0
        %2409 = vmatmul.mubr.f32.gmra.mrb[0].mxu0 %v2239
        %v2410 = vpop.f32.mrb[0].mxu0
        %v2411 = vadd.f32 0.0, %v2410
        %v2412 = vpop.f32.mrb[0].mxu0
        %2413 = vmatprep.mubr.f32.mxu0 0.0
        %2414 = vmatmul.mubr.f32.gmra.mrb[0].mxu0 %v2242
        %v2415 = vpop.f32.mrb[0].mxu0
        %v2416 = vadd.f32 0.0, %v2415
        %v2417 = vpop.f32.mrb[0].mxu0
        %2418 = vmatprep.mubr.f32.mxu0 0.0
        %2419 = vmatmul.mubr.f32.gmra.mrb[0].mxu0 %v2245
        %v2420 = vpop.f32.mrb[0].mxu0
        %v2421 = vadd.f32 0.0, %v2420
        %v2422 = vpop.f32.mrb[0].mxu0
        %2423 = vmatprep.mubr.f32.mxu0 0.0
        %2424 = vmatmul.mubr.f32.gmra.mrb[0].mxu0 %v2248
        %v2425 = vpop.f32.mrb[0].mxu0
        %v2426 = vadd.f32 0.0, %v2425
        %v2427 = vpop.f32.mrb[0].mxu0
        %2428 = vmatprep.mubr.f32.mxu0 0.0
        %2429 = vmatmul.mubr.f32.gmra.mrb[0].mxu0 %v2251
        %v2430 = vpop.f32.mrb[0].mxu0
        %v2431 = vadd.f32 0.0, %v2430
        %v2432 = vpop.f32.mrb[0].mxu0
        %2433 = vmatprep.mubr.f32.mxu0 0.0
        %2434 = vmatmul.mubr.f32.gmra.mrb[0].mxu0 %v2254
        %v2435 = vpop.f32.mrb[0].mxu0
        %v2436 = vadd.f32 0.0, %v2435
        %v2437 = vpop.f32.mrb[0].mxu0
        %2438 = vmatprep.mubr.f32.mxu0 0.0
        %2439 = vmatmul.mubr.f32.gmra.mrb[0].mxu0 %v2257
        %v2440 = vpop.f32.mrb[0].mxu0
        %v2441 = vadd.f32 0.0, %v2440
        %v2442 = vpop.f32.mrb[0].mxu0
        %2443 = vmatprep.mubr.f32.mxu0 0.0
        %2444 = vmatmul.mubr.f32.gmra.mrb[0].mxu0 %v2260
        %v2445 = vpop.f32.mrb[0].mxu0
        %v2446 = vadd.f32 0.0, %v2445
        %v2447 = vpop.f32.mrb[0].mxu0
        %2448 = vmatprep.mubr.f32.mxu0 0.0
        %2449 = vmatmul.mubr.f32.gmra.mrb[0].mxu0 %v2263
        %v2450 = vpop.f32.mrb[0].mxu0
        %v2451 = vadd.f32 0.0, %v2450
        %v2452 = vpop.f32.mrb[0].mxu0
        %2453 = vmatprep.mubr.f32.mxu0 0.0
        %2454 = vmatmul.mubr.f32.gmra.mrb[0].mxu0 %v2266
        %v2455 = vpop.f32.mrb[0].mxu0
        %v2456 = vadd.f32 0.0, %v2455
        %v2457 = vpop.f32.mrb[0].mxu0
        %2458 = vmatprep.mubr.f32.mxu0 0.0
        %2459 = vmatmul.mubr.f32.gmra.mrb[0].mxu0 %v2269
        %v2460 = vpop.f32.mrb[0].mxu0
        %v2461 = vadd.f32 0.0, %v2460
        %v2462 = vpop.f32.mrb[0].mxu0
        %2463 = vmatprep.mubr.f32.mxu0 0.0
        %2464 = vmatmul.mubr.f32.gmra.mrb[0].mxu0 %v2272
        %v2465 = vpop.f32.mrb[0].mxu0
        %v2466 = vadd.f32 0.0, %v2465
        %v2467 = vpop.f32.mrb[0].mxu0
        %2468 = vmatprep.mubr.f32.mxu0 0.0
        %2469 = vmatmul.mubr.f32.gmra.mrb[0].mxu0 %v2275
        %v2470 = vpop.f32.mrb[0].mxu0
        %v2471 = vadd.f32 0.0, %v2470
        %v2472 = vpop.f32.mrb[0].mxu0
        %2473 = vmatprep.mubr.f32.mxu0 0.0
        %2474 = vmatmul.mubr.f32.gmra.mrb[0].mxu0 %v2278
        %v2475 = vpop.f32.mrb[0].mxu0
        %v2476 = vadd.f32 0.0, %v2475
        %v2477 = vpop.f32.mrb[0].mxu0
        %2478 = vmatprep.mubr.f32.mxu0 0.0
        %2479 = vmatmul.mubr.f32.gmra.mrb[0].mxu0 %v2281
        %v2480 = vpop.f32.mrb[0].mxu0
        %v2481 = vadd.f32 0.0, %v2480
        %v2482 = vpop.f32.mrb[0].mxu0
        %2483 = vmatprep.mubr.f32.mxu0 0.0
        %2484 = vmatmul.mubr.f32.gmra.mrb[0].mxu0 %v2284
        %v2485 = vpop.f32.mrb[0].mxu0
        %v2486 = vadd.f32 0.0, %v2485
        %v2487 = vpop.f32.mrb[0].mxu0
        %2488 = vmatprep.mubr.f32.mxu0 0.0
        %2489 = vmatmul.mubr.f32.gmra.mrb[0].mxu0 %v2287
        %v2490 = vpop.f32.mrb[0].mxu0
        %v2491 = vadd.f32 0.0, %v2490
        %v2492 = vpop.f32.mrb[0].mxu0
        %2493 = vmatprep.mubr.f32.mxu0 0.0
        %2494 = vmatmul.mubr.f32.gmra.mrb[0].mxu0 %v2290
        %v2495 = vpop.f32.mrb[0].mxu0
        %v2496 = vadd.f32 0.0, %v2495
        %v2497 = vpop.f32.mrb[0].mxu0
        %2498 = vmatprep.mubr.f32.mxu0 0.0
        %2499 = vmatmul.mubr.f32.gmra.mrb[0].mxu0 %v2293
        %v2500 = vpop.f32.mrb[0].mxu0
        %v2501 = vadd.f32 0.0, %v2500
        %v2502 = vpop.f32.mrb[0].mxu0
        %2503 = vmatprep.mubr.f32.mxu0 0.0
        %2504 = vmatmul.mubr.f32.gmra.mrb[0].mxu0 %v2296
        %v2505 = vpop.f32.mrb[0].mxu0
        %v2506 = vadd.f32 0.0, %v2505
        %v2507 = vpop.f32.mrb[0].mxu0
        %2508 = vmatprep.mubr.f32.mxu0 0.0
        %2509 = vmatmul.mubr.f32.gmra.mrb[0].mxu0 %v2299
        %v2510 = vpop.f32.mrb[0].mxu0
        %v2511 = vadd.f32 0.0, %v2510
        %v2512 = vpop.f32.mrb[0].mxu0
        %2513 = vmatprep.mubr.f32.mxu0 0.0
        %2514 = vmatmul.mubr.f32.gmra.mrb[0].mxu0 %v2302
        %v2515 = vpop.f32.mrb[0].mxu0
        %v2516 = vadd.f32 0.0, %v2515
        %v2517 = vpop.f32.mrb[0].mxu0
        %2518 = vmatprep.mubr.f32.mxu0 0.0
        %2519 = vmatmul.mubr.f32.gmra.mrb[0].mxu0 %v2305
        %v2520 = vpop.f32.mrb[0].mxu0
        %v2521 = vadd.f32 0.0, %v2520
        %v2522 = vpop.f32.mrb[0].mxu0
        %2523 = vmatprep.mubr.f32.mxu0 0.0
        %2524 = vmatmul.mubr.f32.gmra.mrb[0].mxu0 %v2308
        %v2525 = vpop.f32.mrb[0].mxu0
        %v2526 = vadd.f32 0.0, %v2525
        %v2527 = vpop.f32.mrb[0].mxu0
        %2528 = vmatprep.mubr.f32.mxu0 0.0
        %2529 = vmatmul.mubr.f32.gmra.mrb[0].mxu0 %v2311
        %v2530 = vpop.f32.mrb[0].mxu0
        %v2531 = vadd.f32 0.0, %v2530
        %v2532 = vpop.f32.mrb[0].mxu0
        %2533 = vmatprep.mubr.f32.mxu0 0.0
        %2534 = vmatmul.mubr.f32.gmra.mrb[0].mxu0 %v2314
        %v2535 = vpop.f32.mrb[0].mxu0
        %v2536 = vadd.f32 0.0, %v2535
        %v2537 = vpop.f32.mrb[0].mxu0
        %2538 = vmatprep.mubr.f32.mxu0 0.0
        %2539 = vmatmul.mubr.f32.gmra.mrb[0].mxu0 %v2317
        %v2540 = vpop.f32.mrb[0].mxu0
        %v2541 = vadd.f32 0.0, %v2540
        %v2542 = vpop.f32.mrb[0].mxu0
        %2543 = vdwg.mxu0
        %v2544 = vmul.f32 %v2386, %v545
        %v2545 = vmul.f32 %v2391, %v550
        %v2546 = vmul.f32 %v2396, %v545
        %v2547 = vmul.f32 %v2401, %v550
        %v2548 = vmul.f32 %v2406, %v545
        %v2549 = vmul.f32 %v2411, %v550
        %v2550 = vmul.f32 %v2416, %v545
        %v2551 = vmul.f32 %v2421, %v550
        %v2552 = vmul.f32 %v2426, %v545
        %v2553 = vmul.f32 %v2431, %v550
        %v2554 = vmul.f32 %v2436, %v545
        %v2555 = vmul.f32 %v2441, %v550
        %v2556 = vmul.f32 %v2446, %v545
        %v2557 = vmul.f32 %v2451, %v550
        %v2558 = vmul.f32 %v2456, %v545
        %v2559 = vmul.f32 %v2461, %v550
        %v2560 = vmul.f32 %v2466, %v545
        %v2561 = vmul.f32 %v2471, %v550
        %v2562 = vmul.f32 %v2476, %v545
        %v2563 = vmul.f32 %v2481, %v550
        %v2564 = vmul.f32 %v2486, %v545
        %v2565 = vmul.f32 %v2491, %v550
        %v2566 = vmul.f32 %v2496, %v545
        %v2567 = vmul.f32 %v2501, %v550
        %v2568 = vmul.f32 %v2506, %v545
        %v2569 = vmul.f32 %v2511, %v550
        %v2570 = vmul.f32 %v2516, %v545
        %v2571 = vmul.f32 %v2521, %v550
        %v2572 = vmul.f32 %v2526, %v545
        %v2573 = vmul.f32 %v2531, %v550
        %v2574 = vmul.f32 %v2536, %v545
        %v2575 = vmul.f32 %v2541, %v550
        %v2576 = vld [vmem:[#allocation2] sm:$0xff]
        %v2577 = vld [vmem:[#allocation2 + $0x8] sm:$0xff]
        %v2578 = vld [vmem:[#allocation2 + $0x10] sm:$0xff]
        %v2579 = vld [vmem:[#allocation2 + $0x18] sm:$0xff]
        %v2580 = vld [vmem:[#allocation2 + $0x20] sm:$0xff]
        %v2581 = vld [vmem:[#allocation2 + $0x28] sm:$0xff]
        %v2582 = vld [vmem:[#allocation2 + $0x30] sm:$0xff]
        %v2583 = vld [vmem:[#allocation2 + $0x38] sm:$0xff]
        %v2584 = vld [vmem:[%s4 + $0x30] sm:$0xff]
        %v2585 = vld [vmem:[%s4 + $0x38] sm:$0xff]
        %v2586 = vld [vmem:[%s4 + $0xb0] sm:$0xff]
        %v2587 = vld [vmem:[%s4 + $0xb8] sm:$0xff]
        %v2588 = vld [vmem:[%s4 + $0x130] sm:$0xff]
        %v2589 = vld [vmem:[%s4 + $0x138] sm:$0xff]
        %v2590 = vld [vmem:[%s4 + $0x1b0] sm:$0xff]
        %v2591 = vld [vmem:[%s4 + $0x1b8] sm:$0xff]
        %v2592 = vld [vmem:[%s4 + $0x230] sm:$0xff]
        %v2593 = vld [vmem:[%s4 + $0x238] sm:$0xff]
        %v2594 = vld [vmem:[%s4 + $0x2b0] sm:$0xff]
        %v2595 = vld [vmem:[%s4 + $0x2b8] sm:$0xff]
        %v2596 = vld [vmem:[%s4 + $0x330] sm:$0xff]
        %v2597 = vld [vmem:[%s4 + $0x338] sm:$0xff]
        %v2598 = vld [vmem:[%s4 + $0x3b0] sm:$0xff]
        %v2599 = vld [vmem:[%s4 + $0x3b8] sm:$0xff]
        %2600 = vmatprep.subr.mxu0 0.0
        %2601 = vmatpush1.msra.mxu0 %v2544
        %2602 = vmatprep.subr.mxu0 0.0
        %2603 = vmatpush1.msra.mxu0 %v2545
        %2604 = vmatprep.subr.mxu0 0.0
        %2605 = vmatpush1.msra.mxu0 %v2546
        %2606 = vmatprep.subr.mxu0 0.0
        %2607 = vmatpush1.msra.mxu0 %v2547
        %2608 = vmatprep.subr.mxu0 0.0
        %2609 = vmatpush1.msra.mxu0 %v2548
        %2610 = vmatprep.subr.mxu0 0.0
        %2611 = vmatpush1.msra.mxu0 %v2549
        %2612 = vmatprep.subr.mxu0 0.0
        %2613 = vmatpush1.msra.mxu0 %v2550
        %2614 = vmatprep.subr.mxu0 0.0
        %2615 = vmatpush1.msra.mxu0 %v2551
        %2616 = vmatprep.subr.mxu0 0.0
        %2617 = vmatpush1.msra.mxu0 %v2552
        %2618 = vmatprep.subr.mxu0 0.0
        %2619 = vmatpush1.msra.mxu0 %v2553
        %2620 = vmatprep.subr.mxu0 0.0
        %2621 = vmatpush1.msra.mxu0 %v2554
        %2622 = vmatprep.subr.mxu0 0.0
        %2623 = vmatpush1.msra.mxu0 %v2555
        %2624 = vmatprep.subr.mxu0 0.0
        %2625 = vmatpush1.msra.mxu0 %v2556
        %2626 = vmatprep.subr.mxu0 0.0
        %2627 = vmatpush1.msra.mxu0 %v2557
        %2628 = vmatprep.subr.mxu0 0.0
        %2629 = vmatpush1.msra.mxu0 %v2558
        %2630 = vmatprep.subr.mxu0 0.0
        %2631 = vmatpush1.msra.mxu0 %v2559
        %2632 = vmatprep.subr.mxu0 0.0
        %2633 = vmatpush1.msra.mxu0 %v2560
        %2634 = vmatprep.subr.mxu0 0.0
        %2635 = vmatpush1.msra.mxu0 %v2561
        %2636 = vmatprep.subr.mxu0 0.0
        %2637 = vmatpush1.msra.mxu0 %v2562
        %2638 = vmatprep.subr.mxu0 0.0
        %2639 = vmatpush1.msra.mxu0 %v2563
        %2640 = vmatprep.subr.mxu0 0.0
        %2641 = vmatpush1.msra.mxu0 %v2564
        %2642 = vmatprep.subr.mxu0 0.0
        %2643 = vmatpush1.msra.mxu0 %v2565
        %2644 = vmatprep.subr.mxu0 0.0
        %2645 = vmatpush1.msra.mxu0 %v2566
        %2646 = vmatprep.subr.mxu0 0.0
        %2647 = vmatpush1.msra.mxu0 %v2567
        %2648 = vmatprep.subr.mxu0 0.0
        %2649 = vmatpush1.msra.mxu0 %v2568
        %2650 = vmatprep.subr.mxu0 0.0
        %2651 = vmatpush1.msra.mxu0 %v2569
        %2652 = vmatprep.subr.mxu0 0.0
        %2653 = vmatpush1.msra.mxu0 %v2570
        %2654 = vmatprep.subr.mxu0 0.0
        %2655 = vmatpush1.msra.mxu0 %v2571
        %2656 = vmatprep.subr.mxu0 0.0
        %2657 = vmatpush1.msra.mxu0 %v2572
        %2658 = vmatprep.subr.mxu0 0.0
        %2659 = vmatpush1.msra.mxu0 %v2573
        %2660 = vmatprep.subr.mxu0 0.0
        %2661 = vmatpush1.msra.mxu0 %v2574
        %2662 = vmatprep.subr.mxu0 0.0
        %2663 = vmatpush1.msra.mxu0 %v2575
        %2664 = vmatprep.mubr.f32.mxu0 %v2585
        %2665 = vmatmul.mubr.f32.gmra.mrb[0].mxu0 %v2584
        %v2666 = vpop.f32.mrb[0].mxu0
        %v2667 = vadd.f32 0.0, %v2666
        %v2668 = vpop.f32.mrb[0].mxu0
        %2669 = vmatprep.mubr.f32.mxu0 %v2587
        %2670 = vmatmul.mubr.f32.gmra.mrb[0].mxu0 %v2586
        %v2671 = vpop.f32.mrb[0].mxu0
        %v2672 = vadd.f32 0.0, %v2671
        %v2673 = vpop.f32.mrb[0].mxu0
        %2674 = vmatprep.mubr.f32.mxu0 %v2589
        %2675 = vmatmul.mubr.f32.gmra.mrb[0].mxu0 %v2588
        %v2676 = vpop.f32.mrb[0].mxu0
        %v2677 = vadd.f32 0.0, %v2676
        %v2678 = vpop.f32.mrb[0].mxu0
        %2679 = vmatprep.mubr.f32.mxu0 %v2591
        %2680 = vmatmul.mubr.f32.gmra.mrb[0].mxu0 %v2590
        %v2681 = vpop.f32.mrb[0].mxu0
        %v2682 = vadd.f32 0.0, %v2681
        %v2683 = vpop.f32.mrb[0].mxu0
        %2684 = vmatprep.mubr.f32.mxu0 %v2593
        %2685 = vmatmul.mubr.f32.gmra.mrb[0].mxu0 %v2592
        %v2686 = vpop.f32.mrb[0].mxu0
        %v2687 = vadd.f32 0.0, %v2686
        %v2688 = vpop.f32.mrb[0].mxu0
        %2689 = vmatprep.mubr.f32.mxu0 %v2595
        %2690 = vmatmul.mubr.f32.gmra.mrb[0].mxu0 %v2594
        %v2691 = vpop.f32.mrb[0].mxu0
        %v2692 = vadd.f32 0.0, %v2691
        %v2693 = vpop.f32.mrb[0].mxu0
        %2694 = vmatprep.mubr.f32.mxu0 %v2597
        %2695 = vmatmul.mubr.f32.gmra.mrb[0].mxu0 %v2596
        %v2696 = vpop.f32.mrb[0].mxu0
        %v2697 = vadd.f32 0.0, %v2696
        %v2698 = vpop.f32.mrb[0].mxu0
        %2699 = vmatprep.mubr.f32.mxu0 %v2599
        %2700 = vmatmul.mubr.f32.gmra.mrb[0].mxu0 %v2598
        %v2701 = vpop.f32.mrb[0].mxu0
        %v2702 = vadd.f32 0.0, %v2701
        %v2703 = vpop.f32.mrb[0].mxu0
        %2704 = vdwg.mxu0
        %v2705 = vadd.f32 %v2576, %v2667
        %v2706 = vadd.f32 %v2577, %v2672
        %v2707 = vadd.f32 %v2578, %v2677
        %v2708 = vadd.f32 %v2579, %v2682
        %v2709 = vadd.f32 %v2580, %v2687
        %v2710 = vadd.f32 %v2581, %v2692
        %v2711 = vadd.f32 %v2582, %v2697
        %v2712 = vadd.f32 %v2583, %v2702
        %2713 = vst [vmem:[#allocation2] sm:$0xff] %v2705
        %2714 = vst [vmem:[#allocation2 + $0x8] sm:$0xff] %v2706
        %2715 = vst [vmem:[#allocation2 + $0x10] sm:$0xff] %v2707
        %2716 = vst [vmem:[#allocation2 + $0x18] sm:$0xff] %v2708
        %2717 = vst [vmem:[#allocation2 + $0x20] sm:$0xff] %v2709
        %2718 = vst [vmem:[#allocation2 + $0x28] sm:$0xff] %v2710
        %2719 = vst [vmem:[#allocation2 + $0x30] sm:$0xff] %v2711
        %2720 = vst [vmem:[#allocation2 + $0x38] sm:$0xff] %v2712
        %v2721 = vld [vmem:[%s2 + $0x400] sm:$0xff]
        %v2722 = vld [vmem:[%s2 + $0x408] sm:$0xff]
        %v2723 = vld [vmem:[%s2 + $0x410] sm:$0xff]
        %v2724 = vld [vmem:[%s2 + $0x418] sm:$0xff]
        %v2725 = vld [vmem:[%s2 + $0x420] sm:$0xff]
        %v2726 = vld [vmem:[%s2 + $0x428] sm:$0xff]
        %v2727 = vld [vmem:[%s2 + $0x430] sm:$0xff]
        %v2728 = vld [vmem:[%s2 + $0x438] sm:$0xff]
        %v2729 = vld [vmem:[%s2 + $0x440] sm:$0xff]
        %v2730 = vld [vmem:[%s2 + $0x448] sm:$0xff]
        %v2731 = vld [vmem:[%s2 + $0x450] sm:$0xff]
        %v2732 = vld [vmem:[%s2 + $0x458] sm:$0xff]
        %v2733 = vld [vmem:[%s2 + $0x460] sm:$0xff]
        %v2734 = vld [vmem:[%s2 + $0x468] sm:$0xff]
        %v2735 = vld [vmem:[%s2 + $0x470] sm:$0xff]
        %v2736 = vld [vmem:[%s2 + $0x478] sm:$0xff]
        %v2737 = vld [vmem:[%s2 + $0x480] sm:$0xff]
        %v2738 = vld [vmem:[%s2 + $0x488] sm:$0xff]
        %v2739 = vld [vmem:[%s2 + $0x490] sm:$0xff]
        %v2740 = vld [vmem:[%s2 + $0x498] sm:$0xff]
        %v2741 = vld [vmem:[%s2 + $0x4a0] sm:$0xff]
        %v2742 = vld [vmem:[%s2 + $0x4a8] sm:$0xff]
        %v2743 = vld [vmem:[%s2 + $0x4b0] sm:$0xff]
        %v2744 = vld [vmem:[%s2 + $0x4b8] sm:$0xff]
        %v2745 = vld [vmem:[%s2 + $0x4c0] sm:$0xff]
        %v2746 = vld [vmem:[%s2 + $0x4c8] sm:$0xff]
        %v2747 = vld [vmem:[%s2 + $0x4d0] sm:$0xff]
        %v2748 = vld [vmem:[%s2 + $0x4d8] sm:$0xff]
        %v2749 = vld [vmem:[%s2 + $0x4e0] sm:$0xff]
        %v2750 = vld [vmem:[%s2 + $0x4e8] sm:$0xff]
        %v2751 = vld [vmem:[%s2 + $0x4f0] sm:$0xff]
        %v2752 = vld [vmem:[%s2 + $0x4f8] sm:$0xff]
        %v2754 = vsel %vm399, %v2721, 0
        %v2757 = vsel %vm399, %v2722, 0
        %v2760 = vsel %vm399, %v2723, 0
        %v2763 = vsel %vm399, %v2724, 0
        %v2766 = vsel %vm399, %v2725, 0
        %v2769 = vsel %vm399, %v2726, 0
        %v2772 = vsel %vm399, %v2727, 0
        %v2775 = vsel %vm399, %v2728, 0
        %v2778 = vsel %vm399, %v2729, 0
        %v2781 = vsel %vm399, %v2730, 0
        %v2784 = vsel %vm399, %v2731, 0
        %v2787 = vsel %vm399, %v2732, 0
        %v2790 = vsel %vm399, %v2733, 0
        %v2793 = vsel %vm399, %v2734, 0
        %v2796 = vsel %vm399, %v2735, 0
        %v2799 = vsel %vm399, %v2736, 0
        %v2802 = vsel %vm399, %v2737, 0
        %v2805 = vsel %vm399, %v2738, 0
        %v2808 = vsel %vm399, %v2739, 0
        %v2811 = vsel %vm399, %v2740, 0
        %v2814 = vsel %vm399, %v2741, 0
        %v2817 = vsel %vm399, %v2742, 0
        %v2820 = vsel %vm399, %v2743, 0
        %v2823 = vsel %vm399, %v2744, 0
        %v2826 = vsel %vm399, %v2745, 0
        %v2829 = vsel %vm399, %v2746, 0
        %v2832 = vsel %vm399, %v2747, 0
        %v2835 = vsel %vm399, %v2748, 0
        %v2838 = vsel %vm399, %v2749, 0
        %v2841 = vsel %vm399, %v2750, 0
        %v2844 = vsel %vm399, %v2751, 0
        %v2847 = vsel %vm399, %v2752, 0
        %2849 = vmatprep.subr.mxu0 0.0
        %2850 = vmatpush1.msra.mxu0 %v367
        %2851 = vmatprep.subr.mxu0 0.0
        %2852 = vmatpush1.msra.mxu0 %v368
        %2853 = vmatprep.subr.mxu0 0.0
        %2854 = vmatpush1.msra.mxu0 %v369
        %2855 = vmatprep.subr.mxu0 0.0
        %2856 = vmatpush1.msra.mxu0 %v370
        %2857 = vmatprep.subr.mxu0 0.0
        %2858 = vmatpush1.msra.mxu0 %v371
        %2859 = vmatprep.subr.mxu0 0.0
        %2860 = vmatpush1.msra.mxu0 %v372
        %2861 = vmatprep.subr.mxu0 0.0
        %2862 = vmatpush1.msra.mxu0 %v373
        %2863 = vmatprep.subr.mxu0 0.0
        %2864 = vmatpush1.msra.mxu0 %v374
        %2865 = vmatprep.subr.mxu0 0.0
        %2866 = vmatpush1.msra.mxu0 0.0
        %2867 = vmatprep.subr.mxu0 0.0
        %2868 = vmatpush1.msra.mxu0 0.0
        %2869 = vmatprep.subr.mxu0 0.0
        %2870 = vmatpush1.msra.mxu0 0.0
        %2871 = vmatprep.subr.mxu0 0.0
        %2872 = vmatpush1.msra.mxu0 0.0
        %2873 = vmatprep.subr.mxu0 0.0
        %2874 = vmatpush1.msra.mxu0 0.0
        %2875 = vmatprep.subr.mxu0 0.0
        %2876 = vmatpush1.msra.mxu0 0.0
        %2877 = vmatprep.subr.mxu0 0.0
        %2878 = vmatpush1.msra.mxu0 0.0
        %2879 = vmatprep.subr.mxu0 0.0
        %2880 = vmatpush1.msra.mxu0 0.0
        %2881 = vmatprep.subr.mxu0 0.0
        %2882 = vmatpush1.msra.mxu0 0.0
        %2883 = vmatprep.subr.mxu0 0.0
        %2884 = vmatpush1.msra.mxu0 0.0
        %2885 = vmatprep.subr.mxu0 0.0
        %2886 = vmatpush1.msra.mxu0 0.0
        %2887 = vmatprep.subr.mxu0 0.0
        %2888 = vmatpush1.msra.mxu0 0.0
        %2889 = vmatprep.subr.mxu0 0.0
        %2890 = vmatpush1.msra.mxu0 0.0
        %2891 = vmatprep.subr.mxu0 0.0
        %2892 = vmatpush1.msra.mxu0 0.0
        %2893 = vmatprep.subr.mxu0 0.0
        %2894 = vmatpush1.msra.mxu0 0.0
        %2895 = vmatprep.subr.mxu0 0.0
        %2896 = vmatpush1.msra.mxu0 0.0
        %2897 = vmatprep.subr.mxu0 0.0
        %2898 = vmatpush1.msra.mxu0 0.0
        %2899 = vmatprep.subr.mxu0 0.0
        %2900 = vmatpush1.msra.mxu0 0.0
        %2901 = vmatprep.subr.mxu0 0.0
        %2902 = vmatpush1.msra.mxu0 0.0
        %2903 = vmatprep.subr.mxu0 0.0
        %2904 = vmatpush1.msra.mxu0 0.0
        %2905 = vmatprep.subr.mxu0 0.0
        %2906 = vmatpush1.msra.mxu0 0.0
        %2907 = vmatprep.subr.mxu0 0.0
        %2908 = vmatpush1.msra.mxu0 0.0
        %2909 = vmatprep.subr.mxu0 0.0
        %2910 = vmatpush1.msra.mxu0 0.0
        %2911 = vmatprep.subr.mxu0 0.0
        %2912 = vmatpush1.msra.mxu0 0.0
        %2913 = vmatprep.mubr.f32.mxu0 0.0
        %2914 = vmatmul.mubr.f32.gmra.mrb[0].mxu0 %v2754
        %v2915 = vpop.f32.mrb[0].mxu0
        %v2916 = vadd.f32 0.0, %v2915
        %v2917 = vpop.f32.mrb[0].mxu0
        %2918 = vmatprep.mubr.f32.mxu0 0.0
        %2919 = vmatmul.mubr.f32.gmra.mrb[0].mxu0 %v2757
        %v2920 = vpop.f32.mrb[0].mxu0
        %v2921 = vadd.f32 0.0, %v2920
        %v2922 = vpop.f32.mrb[0].mxu0
        %2923 = vmatprep.mubr.f32.mxu0 0.0
        %2924 = vmatmul.mubr.f32.gmra.mrb[0].mxu0 %v2760
        %v2925 = vpop.f32.mrb[0].mxu0
        %v2926 = vadd.f32 0.0, %v2925
        %v2927 = vpop.f32.mrb[0].mxu0
        %2928 = vmatprep.mubr.f32.mxu0 0.0
        %2929 = vmatmul.mubr.f32.gmra.mrb[0].mxu0 %v2763
        %v2930 = vpop.f32.mrb[0].mxu0
        %v2931 = vadd.f32 0.0, %v2930
        %v2932 = vpop.f32.mrb[0].mxu0
        %2933 = vmatprep.mubr.f32.mxu0 0.0
        %2934 = vmatmul.mubr.f32.gmra.mrb[0].mxu0 %v2766
        %v2935 = vpop.f32.mrb[0].mxu0
        %v2936 = vadd.f32 0.0, %v2935
        %v2937 = vpop.f32.mrb[0].mxu0
        %2938 = vmatprep.mubr.f32.mxu0 0.0
        %2939 = vmatmul.mubr.f32.gmra.mrb[0].mxu0 %v2769
        %v2940 = vpop.f32.mrb[0].mxu0
        %v2941 = vadd.f32 0.0, %v2940
        %v2942 = vpop.f32.mrb[0].mxu0
        %2943 = vmatprep.mubr.f32.mxu0 0.0
        %2944 = vmatmul.mubr.f32.gmra.mrb[0].mxu0 %v2772
        %v2945 = vpop.f32.mrb[0].mxu0
        %v2946 = vadd.f32 0.0, %v2945
        %v2947 = vpop.f32.mrb[0].mxu0
        %2948 = vmatprep.mubr.f32.mxu0 0.0
        %2949 = vmatmul.mubr.f32.gmra.mrb[0].mxu0 %v2775
        %v2950 = vpop.f32.mrb[0].mxu0
        %v2951 = vadd.f32 0.0, %v2950
        %v2952 = vpop.f32.mrb[0].mxu0
        %2953 = vmatprep.mubr.f32.mxu0 0.0
        %2954 = vmatmul.mubr.f32.gmra.mrb[0].mxu0 %v2778
        %v2955 = vpop.f32.mrb[0].mxu0
        %v2956 = vadd.f32 0.0, %v2955
        %v2957 = vpop.f32.mrb[0].mxu0
        %2958 = vmatprep.mubr.f32.mxu0 0.0
        %2959 = vmatmul.mubr.f32.gmra.mrb[0].mxu0 %v2781
        %v2960 = vpop.f32.mrb[0].mxu0
        %v2961 = vadd.f32 0.0, %v2960
        %v2962 = vpop.f32.mrb[0].mxu0
        %2963 = vmatprep.mubr.f32.mxu0 0.0
        %2964 = vmatmul.mubr.f32.gmra.mrb[0].mxu0 %v2784
        %v2965 = vpop.f32.mrb[0].mxu0
        %v2966 = vadd.f32 0.0, %v2965
        %v2967 = vpop.f32.mrb[0].mxu0
        %2968 = vmatprep.mubr.f32.mxu0 0.0
        %2969 = vmatmul.mubr.f32.gmra.mrb[0].mxu0 %v2787
        %v2970 = vpop.f32.mrb[0].mxu0
        %v2971 = vadd.f32 0.0, %v2970
        %v2972 = vpop.f32.mrb[0].mxu0
        %2973 = vmatprep.mubr.f32.mxu0 0.0
        %2974 = vmatmul.mubr.f32.gmra.mrb[0].mxu0 %v2790
        %v2975 = vpop.f32.mrb[0].mxu0
        %v2976 = vadd.f32 0.0, %v2975
        %v2977 = vpop.f32.mrb[0].mxu0
        %2978 = vmatprep.mubr.f32.mxu0 0.0
        %2979 = vmatmul.mubr.f32.gmra.mrb[0].mxu0 %v2793
        %v2980 = vpop.f32.mrb[0].mxu0
        %v2981 = vadd.f32 0.0, %v2980
        %v2982 = vpop.f32.mrb[0].mxu0
        %2983 = vmatprep.mubr.f32.mxu0 0.0
        %2984 = vmatmul.mubr.f32.gmra.mrb[0].mxu0 %v2796
        %v2985 = vpop.f32.mrb[0].mxu0
        %v2986 = vadd.f32 0.0, %v2985
        %v2987 = vpop.f32.mrb[0].mxu0
        %2988 = vmatprep.mubr.f32.mxu0 0.0
        %2989 = vmatmul.mubr.f32.gmra.mrb[0].mxu0 %v2799
        %v2990 = vpop.f32.mrb[0].mxu0
        %v2991 = vadd.f32 0.0, %v2990
        %v2992 = vpop.f32.mrb[0].mxu0
        %2993 = vmatprep.mubr.f32.mxu0 0.0
        %2994 = vmatmul.mubr.f32.gmra.mrb[0].mxu0 %v2802
        %v2995 = vpop.f32.mrb[0].mxu0
        %v2996 = vadd.f32 0.0, %v2995
        %v2997 = vpop.f32.mrb[0].mxu0
        %2998 = vmatprep.mubr.f32.mxu0 0.0
        %2999 = vmatmul.mubr.f32.gmra.mrb[0].mxu0 %v2805
        %v3000 = vpop.f32.mrb[0].mxu0
        %v3001 = vadd.f32 0.0, %v3000
        %v3002 = vpop.f32.mrb[0].mxu0
        %3003 = vmatprep.mubr.f32.mxu0 0.0
        %3004 = vmatmul.mubr.f32.gmra.mrb[0].mxu0 %v2808
        %v3005 = vpop.f32.mrb[0].mxu0
        %v3006 = vadd.f32 0.0, %v3005
        %v3007 = vpop.f32.mrb[0].mxu0
        %3008 = vmatprep.mubr.f32.mxu0 0.0
        %3009 = vmatmul.mubr.f32.gmra.mrb[0].mxu0 %v2811
        %v3010 = vpop.f32.mrb[0].mxu0
        %v3011 = vadd.f32 0.0, %v3010
        %v3012 = vpop.f32.mrb[0].mxu0
        %3013 = vmatprep.mubr.f32.mxu0 0.0
        %3014 = vmatmul.mubr.f32.gmra.mrb[0].mxu0 %v2814
        %v3015 = vpop.f32.mrb[0].mxu0
        %v3016 = vadd.f32 0.0, %v3015
        %v3017 = vpop.f32.mrb[0].mxu0
        %3018 = vmatprep.mubr.f32.mxu0 0.0
        %3019 = vmatmul.mubr.f32.gmra.mrb[0].mxu0 %v2817
        %v3020 = vpop.f32.mrb[0].mxu0
        %v3021 = vadd.f32 0.0, %v3020
        %v3022 = vpop.f32.mrb[0].mxu0
        %3023 = vmatprep.mubr.f32.mxu0 0.0
        %3024 = vmatmul.mubr.f32.gmra.mrb[0].mxu0 %v2820
        %v3025 = vpop.f32.mrb[0].mxu0
        %v3026 = vadd.f32 0.0, %v3025
        %v3027 = vpop.f32.mrb[0].mxu0
        %3028 = vmatprep.mubr.f32.mxu0 0.0
        %3029 = vmatmul.mubr.f32.gmra.mrb[0].mxu0 %v2823
        %v3030 = vpop.f32.mrb[0].mxu0
        %v3031 = vadd.f32 0.0, %v3030
        %v3032 = vpop.f32.mrb[0].mxu0
        %3033 = vmatprep.mubr.f32.mxu0 0.0
        %3034 = vmatmul.mubr.f32.gmra.mrb[0].mxu0 %v2826
        %v3035 = vpop.f32.mrb[0].mxu0
        %v3036 = vadd.f32 0.0, %v3035
        %v3037 = vpop.f32.mrb[0].mxu0
        %3038 = vmatprep.mubr.f32.mxu0 0.0
        %3039 = vmatmul.mubr.f32.gmra.mrb[0].mxu0 %v2829
        %v3040 = vpop.f32.mrb[0].mxu0
        %v3041 = vadd.f32 0.0, %v3040
        %v3042 = vpop.f32.mrb[0].mxu0
        %3043 = vmatprep.mubr.f32.mxu0 0.0
        %3044 = vmatmul.mubr.f32.gmra.mrb[0].mxu0 %v2832
        %v3045 = vpop.f32.mrb[0].mxu0
        %v3046 = vadd.f32 0.0, %v3045
        %v3047 = vpop.f32.mrb[0].mxu0
        %3048 = vmatprep.mubr.f32.mxu0 0.0
        %3049 = vmatmul.mubr.f32.gmra.mrb[0].mxu0 %v2835
        %v3050 = vpop.f32.mrb[0].mxu0
        %v3051 = vadd.f32 0.0, %v3050
        %v3052 = vpop.f32.mrb[0].mxu0
        %3053 = vmatprep.mubr.f32.mxu0 0.0
        %3054 = vmatmul.mubr.f32.gmra.mrb[0].mxu0 %v2838
        %v3055 = vpop.f32.mrb[0].mxu0
        %v3056 = vadd.f32 0.0, %v3055
        %v3057 = vpop.f32.mrb[0].mxu0
        %3058 = vmatprep.mubr.f32.mxu0 0.0
        %3059 = vmatmul.mubr.f32.gmra.mrb[0].mxu0 %v2841
        %v3060 = vpop.f32.mrb[0].mxu0
        %v3061 = vadd.f32 0.0, %v3060
        %v3062 = vpop.f32.mrb[0].mxu0
        %3063 = vmatprep.mubr.f32.mxu0 0.0
        %3064 = vmatmul.mubr.f32.gmra.mrb[0].mxu0 %v2844
        %v3065 = vpop.f32.mrb[0].mxu0
        %v3066 = vadd.f32 0.0, %v3065
        %v3067 = vpop.f32.mrb[0].mxu0
        %3068 = vmatprep.mubr.f32.mxu0 0.0
        %3069 = vmatmul.mubr.f32.gmra.mrb[0].mxu0 %v2847
        %v3070 = vpop.f32.mrb[0].mxu0
        %v3071 = vadd.f32 0.0, %v3070
        %v3072 = vpop.f32.mrb[0].mxu0
        %3073 = vdwg.mxu0
        %v3074 = vmul.f32 %v2916, %v555
        %v3075 = vmul.f32 %v2921, %v560
        %v3076 = vmul.f32 %v2926, %v555
        %v3077 = vmul.f32 %v2931, %v560
        %v3078 = vmul.f32 %v2936, %v555
        %v3079 = vmul.f32 %v2941, %v560
        %v3080 = vmul.f32 %v2946, %v555
        %v3081 = vmul.f32 %v2951, %v560
        %v3082 = vmul.f32 %v2956, %v555
        %v3083 = vmul.f32 %v2961, %v560
        %v3084 = vmul.f32 %v2966, %v555
        %v3085 = vmul.f32 %v2971, %v560
        %v3086 = vmul.f32 %v2976, %v555
        %v3087 = vmul.f32 %v2981, %v560
        %v3088 = vmul.f32 %v2986, %v555
        %v3089 = vmul.f32 %v2991, %v560
        %v3090 = vmul.f32 %v2996, %v555
        %v3091 = vmul.f32 %v3001, %v560
        %v3092 = vmul.f32 %v3006, %v555
        %v3093 = vmul.f32 %v3011, %v560
        %v3094 = vmul.f32 %v3016, %v555
        %v3095 = vmul.f32 %v3021, %v560
        %v3096 = vmul.f32 %v3026, %v555
        %v3097 = vmul.f32 %v3031, %v560
        %v3098 = vmul.f32 %v3036, %v555
        %v3099 = vmul.f32 %v3041, %v560
        %v3100 = vmul.f32 %v3046, %v555
        %v3101 = vmul.f32 %v3051, %v560
        %v3102 = vmul.f32 %v3056, %v555
        %v3103 = vmul.f32 %v3061, %v560
        %v3104 = vmul.f32 %v3066, %v555
        %v3105 = vmul.f32 %v3071, %v560
        %v3106 = vld [vmem:[#allocation2] sm:$0xff]
        %v3107 = vld [vmem:[#allocation2 + $0x8] sm:$0xff]
        %v3108 = vld [vmem:[#allocation2 + $0x10] sm:$0xff]
        %v3109 = vld [vmem:[#allocation2 + $0x18] sm:$0xff]
        %v3110 = vld [vmem:[#allocation2 + $0x20] sm:$0xff]
        %v3111 = vld [vmem:[#allocation2 + $0x28] sm:$0xff]
        %v3112 = vld [vmem:[#allocation2 + $0x30] sm:$0xff]
        %v3113 = vld [vmem:[#allocation2 + $0x38] sm:$0xff]
        %v3114 = vld [vmem:[%s4 + $0x40] sm:$0xff]
        %v3115 = vld [vmem:[%s4 + $0x48] sm:$0xff]
        %v3116 = vld [vmem:[%s4 + $0xc0] sm:$0xff]
        %v3117 = vld [vmem:[%s4 + $0xc8] sm:$0xff]
        %v3118 = vld [vmem:[%s4 + $0x140] sm:$0xff]
        %v3119 = vld [vmem:[%s4 + $0x148] sm:$0xff]
        %v3120 = vld [vmem:[%s4 + $0x1c0] sm:$0xff]
        %v3121 = vld [vmem:[%s4 + $0x1c8] sm:$0xff]
        %v3122 = vld [vmem:[%s4 + $0x240] sm:$0xff]
        %v3123 = vld [vmem:[%s4 + $0x248] sm:$0xff]
        %v3124 = vld [vmem:[%s4 + $0x2c0] sm:$0xff]
        %v3125 = vld [vmem:[%s4 + $0x2c8] sm:$0xff]
        %v3126 = vld [vmem:[%s4 + $0x340] sm:$0xff]
        %v3127 = vld [vmem:[%s4 + $0x348] sm:$0xff]
        %v3128 = vld [vmem:[%s4 + $0x3c0] sm:$0xff]
        %v3129 = vld [vmem:[%s4 + $0x3c8] sm:$0xff]
        %3130 = vmatprep.subr.mxu0 0.0
        %3131 = vmatpush1.msra.mxu0 %v3074
        %3132 = vmatprep.subr.mxu0 0.0
        %3133 = vmatpush1.msra.mxu0 %v3075
        %3134 = vmatprep.subr.mxu0 0.0
        %3135 = vmatpush1.msra.mxu0 %v3076
        %3136 = vmatprep.subr.mxu0 0.0
        %3137 = vmatpush1.msra.mxu0 %v3077
        %3138 = vmatprep.subr.mxu0 0.0
        %3139 = vmatpush1.msra.mxu0 %v3078
        %3140 = vmatprep.subr.mxu0 0.0
        %3141 = vmatpush1.msra.mxu0 %v3079
        %3142 = vmatprep.subr.mxu0 0.0
        %3143 = vmatpush1.msra.mxu0 %v3080
        %3144 = vmatprep.subr.mxu0 0.0
        %3145 = vmatpush1.msra.mxu0 %v3081
        %3146 = vmatprep.subr.mxu0 0.0
        %3147 = vmatpush1.msra.mxu0 %v3082
        %3148 = vmatprep.subr.mxu0 0.0
        %3149 = vmatpush1.msra.mxu0 %v3083
        %3150 = vmatprep.subr.mxu0 0.0
        %3151 = vmatpush1.msra.mxu0 %v3084
        %3152 = vmatprep.subr.mxu0 0.0
        %3153 = vmatpush1.msra.mxu0 %v3085
        %3154 = vmatprep.subr.mxu0 0.0
        %3155 = vmatpush1.msra.mxu0 %v3086
        %3156 = vmatprep.subr.mxu0 0.0
        %3157 = vmatpush1.msra.mxu0 %v3087
        %3158 = vmatprep.subr.mxu0 0.0
        %3159 = vmatpush1.msra.mxu0 %v3088
        %3160 = vmatprep.subr.mxu0 0.0
        %3161 = vmatpush1.msra.mxu0 %v3089
        %3162 = vmatprep.subr.mxu0 0.0
        %3163 = vmatpush1.msra.mxu0 %v3090
        %3164 = vmatprep.subr.mxu0 0.0
        %3165 = vmatpush1.msra.mxu0 %v3091
        %3166 = vmatprep.subr.mxu0 0.0
        %3167 = vmatpush1.msra.mxu0 %v3092
        %3168 = vmatprep.subr.mxu0 0.0
        %3169 = vmatpush1.msra.mxu0 %v3093
        %3170 = vmatprep.subr.mxu0 0.0
        %3171 = vmatpush1.msra.mxu0 %v3094
        %3172 = vmatprep.subr.mxu0 0.0
        %3173 = vmatpush1.msra.mxu0 %v3095
        %3174 = vmatprep.subr.mxu0 0.0
        %3175 = vmatpush1.msra.mxu0 %v3096
        %3176 = vmatprep.subr.mxu0 0.0
        %3177 = vmatpush1.msra.mxu0 %v3097
        %3178 = vmatprep.subr.mxu0 0.0
        %3179 = vmatpush1.msra.mxu0 %v3098
        %3180 = vmatprep.subr.mxu0 0.0
        %3181 = vmatpush1.msra.mxu0 %v3099
        %3182 = vmatprep.subr.mxu0 0.0
        %3183 = vmatpush1.msra.mxu0 %v3100
        %3184 = vmatprep.subr.mxu0 0.0
        %3185 = vmatpush1.msra.mxu0 %v3101
        %3186 = vmatprep.subr.mxu0 0.0
        %3187 = vmatpush1.msra.mxu0 %v3102
        %3188 = vmatprep.subr.mxu0 0.0
        %3189 = vmatpush1.msra.mxu0 %v3103
        %3190 = vmatprep.subr.mxu0 0.0
        %3191 = vmatpush1.msra.mxu0 %v3104
        %3192 = vmatprep.subr.mxu0 0.0
        %3193 = vmatpush1.msra.mxu0 %v3105
        %3194 = vmatprep.mubr.f32.mxu0 %v3115
        %3195 = vmatmul.mubr.f32.gmra.mrb[0].mxu0 %v3114
        %v3196 = vpop.f32.mrb[0].mxu0
        %v3197 = vadd.f32 0.0, %v3196
        %v3198 = vpop.f32.mrb[0].mxu0
        %3199 = vmatprep.mubr.f32.mxu0 %v3117
        %3200 = vmatmul.mubr.f32.gmra.mrb[0].mxu0 %v3116
        %v3201 = vpop.f32.mrb[0].mxu0
        %v3202 = vadd.f32 0.0, %v3201
        %v3203 = vpop.f32.mrb[0].mxu0
        %3204 = vmatprep.mubr.f32.mxu0 %v3119
        %3205 = vmatmul.mubr.f32.gmra.mrb[0].mxu0 %v3118
        %v3206 = vpop.f32.mrb[0].mxu0
        %v3207 = vadd.f32 0.0, %v3206
        %v3208 = vpop.f32.mrb[0].mxu0
        %3209 = vmatprep.mubr.f32.mxu0 %v3121
        %3210 = vmatmul.mubr.f32.gmra.mrb[0].mxu0 %v3120
        %v3211 = vpop.f32.mrb[0].mxu0
        %v3212 = vadd.f32 0.0, %v3211
        %v3213 = vpop.f32.mrb[0].mxu0
        %3214 = vmatprep.mubr.f32.mxu0 %v3123
        %3215 = vmatmul.mubr.f32.gmra.mrb[0].mxu0 %v3122
        %v3216 = vpop.f32.mrb[0].mxu0
        %v3217 = vadd.f32 0.0, %v3216
        %v3218 = vpop.f32.mrb[0].mxu0
        %3219 = vmatprep.mubr.f32.mxu0 %v3125
        %3220 = vmatmul.mubr.f32.gmra.mrb[0].mxu0 %v3124
        %v3221 = vpop.f32.mrb[0].mxu0
        %v3222 = vadd.f32 0.0, %v3221
        %v3223 = vpop.f32.mrb[0].mxu0
        %3224 = vmatprep.mubr.f32.mxu0 %v3127
        %3225 = vmatmul.mubr.f32.gmra.mrb[0].mxu0 %v3126
        %v3226 = vpop.f32.mrb[0].mxu0
        %v3227 = vadd.f32 0.0, %v3226
        %v3228 = vpop.f32.mrb[0].mxu0
        %3229 = vmatprep.mubr.f32.mxu0 %v3129
        %3230 = vmatmul.mubr.f32.gmra.mrb[0].mxu0 %v3128
        %v3231 = vpop.f32.mrb[0].mxu0
        %v3232 = vadd.f32 0.0, %v3231
        %v3233 = vpop.f32.mrb[0].mxu0
        %3234 = vdwg.mxu0
        %v3235 = vadd.f32 %v3106, %v3197
        %v3236 = vadd.f32 %v3107, %v3202
        %v3237 = vadd.f32 %v3108, %v3207
        %v3238 = vadd.f32 %v3109, %v3212
        %v3239 = vadd.f32 %v3110, %v3217
        %v3240 = vadd.f32 %v3111, %v3222
        %v3241 = vadd.f32 %v3112, %v3227
        %v3242 = vadd.f32 %v3113, %v3232
        %3243 = vst [vmem:[#allocation2] sm:$0xff] %v3235
        %3244 = vst [vmem:[#allocation2 + $0x8] sm:$0xff] %v3236
        %3245 = vst [vmem:[#allocation2 + $0x10] sm:$0xff] %v3237
        %3246 = vst [vmem:[#allocation2 + $0x18] sm:$0xff] %v3238
        %3247 = vst [vmem:[#allocation2 + $0x20] sm:$0xff] %v3239
        %3248 = vst [vmem:[#allocation2 + $0x28] sm:$0xff] %v3240
        %3249 = vst [vmem:[#allocation2 + $0x30] sm:$0xff] %v3241
        %3250 = vst [vmem:[#allocation2 + $0x38] sm:$0xff] %v3242
        %v3251 = vld [vmem:[%s2 + $0x500] sm:$0xff]
        %v3252 = vld [vmem:[%s2 + $0x508] sm:$0xff]
        %v3253 = vld [vmem:[%s2 + $0x510] sm:$0xff]
        %v3254 = vld [vmem:[%s2 + $0x518] sm:$0xff]
        %v3255 = vld [vmem:[%s2 + $0x520] sm:$0xff]
        %v3256 = vld [vmem:[%s2 + $0x528] sm:$0xff]
        %v3257 = vld [vmem:[%s2 + $0x530] sm:$0xff]
        %v3258 = vld [vmem:[%s2 + $0x538] sm:$0xff]
        %v3259 = vld [vmem:[%s2 + $0x540] sm:$0xff]
        %v3260 = vld [vmem:[%s2 + $0x548] sm:$0xff]
        %v3261 = vld [vmem:[%s2 + $0x550] sm:$0xff]
        %v3262 = vld [vmem:[%s2 + $0x558] sm:$0xff]
        %v3263 = vld [vmem:[%s2 + $0x560] sm:$0xff]
        %v3264 = vld [vmem:[%s2 + $0x568] sm:$0xff]
        %v3265 = vld [vmem:[%s2 + $0x570] sm:$0xff]
        %v3266 = vld [vmem:[%s2 + $0x578] sm:$0xff]
        %v3267 = vld [vmem:[%s2 + $0x580] sm:$0xff]
        %v3268 = vld [vmem:[%s2 + $0x588] sm:$0xff]
        %v3269 = vld [vmem:[%s2 + $0x590] sm:$0xff]
        %v3270 = vld [vmem:[%s2 + $0x598] sm:$0xff]
        %v3271 = vld [vmem:[%s2 + $0x5a0] sm:$0xff]
        %v3272 = vld [vmem:[%s2 + $0x5a8] sm:$0xff]
        %v3273 = vld [vmem:[%s2 + $0x5b0] sm:$0xff]
        %v3274 = vld [vmem:[%s2 + $0x5b8] sm:$0xff]
        %v3275 = vld [vmem:[%s2 + $0x5c0] sm:$0xff]
        %v3276 = vld [vmem:[%s2 + $0x5c8] sm:$0xff]
        %v3277 = vld [vmem:[%s2 + $0x5d0] sm:$0xff]
        %v3278 = vld [vmem:[%s2 + $0x5d8] sm:$0xff]
        %v3279 = vld [vmem:[%s2 + $0x5e0] sm:$0xff]
        %v3280 = vld [vmem:[%s2 + $0x5e8] sm:$0xff]
        %v3281 = vld [vmem:[%s2 + $0x5f0] sm:$0xff]
        %v3282 = vld [vmem:[%s2 + $0x5f8] sm:$0xff]
        %v3284 = vsel %vm399, %v3251, 0
        %v3287 = vsel %vm399, %v3252, 0
        %v3290 = vsel %vm399, %v3253, 0
        %v3293 = vsel %vm399, %v3254, 0
        %v3296 = vsel %vm399, %v3255, 0
        %v3299 = vsel %vm399, %v3256, 0
        %v3302 = vsel %vm399, %v3257, 0
        %v3305 = vsel %vm399, %v3258, 0
        %v3308 = vsel %vm399, %v3259, 0
        %v3311 = vsel %vm399, %v3260, 0
        %v3314 = vsel %vm399, %v3261, 0
        %v3317 = vsel %vm399, %v3262, 0
        %v3320 = vsel %vm399, %v3263, 0
        %v3323 = vsel %vm399, %v3264, 0
        %v3326 = vsel %vm399, %v3265, 0
        %v3329 = vsel %vm399, %v3266, 0
        %v3332 = vsel %vm399, %v3267, 0
        %v3335 = vsel %vm399, %v3268, 0
        %v3338 = vsel %vm399, %v3269, 0
        %v3341 = vsel %vm399, %v3270, 0
        %v3344 = vsel %vm399, %v3271, 0
        %v3347 = vsel %vm399, %v3272, 0
        %v3350 = vsel %vm399, %v3273, 0
        %v3353 = vsel %vm399, %v3274, 0
        %v3356 = vsel %vm399, %v3275, 0
        %v3359 = vsel %vm399, %v3276, 0
        %v3362 = vsel %vm399, %v3277, 0
        %v3365 = vsel %vm399, %v3278, 0
        %v3368 = vsel %vm399, %v3279, 0
        %v3371 = vsel %vm399, %v3280, 0
        %v3374 = vsel %vm399, %v3281, 0
        %v3377 = vsel %vm399, %v3282, 0
        %3379 = vmatprep.subr.mxu0 0.0
        %3380 = vmatpush1.msra.mxu0 %v367
        %3381 = vmatprep.subr.mxu0 0.0
        %3382 = vmatpush1.msra.mxu0 %v368
        %3383 = vmatprep.subr.mxu0 0.0
        %3384 = vmatpush1.msra.mxu0 %v369
        %3385 = vmatprep.subr.mxu0 0.0
        %3386 = vmatpush1.msra.mxu0 %v370
        %3387 = vmatprep.subr.mxu0 0.0
        %3388 = vmatpush1.msra.mxu0 %v371
        %3389 = vmatprep.subr.mxu0 0.0
        %3390 = vmatpush1.msra.mxu0 %v372
        %3391 = vmatprep.subr.mxu0 0.0
        %3392 = vmatpush1.msra.mxu0 %v373
        %3393 = vmatprep.subr.mxu0 0.0
        %3394 = vmatpush1.msra.mxu0 %v374
        %3395 = vmatprep.subr.mxu0 0.0
        %3396 = vmatpush1.msra.mxu0 0.0
        %3397 = vmatprep.subr.mxu0 0.0
        %3398 = vmatpush1.msra.mxu0 0.0
        %3399 = vmatprep.subr.mxu0 0.0
        %3400 = vmatpush1.msra.mxu0 0.0
        %3401 = vmatprep.subr.mxu0 0.0
        %3402 = vmatpush1.msra.mxu0 0.0
        %3403 = vmatprep.subr.mxu0 0.0
        %3404 = vmatpush1.msra.mxu0 0.0
        %3405 = vmatprep.subr.mxu0 0.0
        %3406 = vmatpush1.msra.mxu0 0.0
        %3407 = vmatprep.subr.mxu0 0.0
        %3408 = vmatpush1.msra.mxu0 0.0
        %3409 = vmatprep.subr.mxu0 0.0
        %3410 = vmatpush1.msra.mxu0 0.0
        %3411 = vmatprep.subr.mxu0 0.0
        %3412 = vmatpush1.msra.mxu0 0.0
        %3413 = vmatprep.subr.mxu0 0.0
        %3414 = vmatpush1.msra.mxu0 0.0
        %3415 = vmatprep.subr.mxu0 0.0
        %3416 = vmatpush1.msra.mxu0 0.0
        %3417 = vmatprep.subr.mxu0 0.0
        %3418 = vmatpush1.msra.mxu0 0.0
        %3419 = vmatprep.subr.mxu0 0.0
        %3420 = vmatpush1.msra.mxu0 0.0
        %3421 = vmatprep.subr.mxu0 0.0
        %3422 = vmatpush1.msra.mxu0 0.0
        %3423 = vmatprep.subr.mxu0 0.0
        %3424 = vmatpush1.msra.mxu0 0.0
        %3425 = vmatprep.subr.mxu0 0.0
        %3426 = vmatpush1.msra.mxu0 0.0
        %3427 = vmatprep.subr.mxu0 0.0
        %3428 = vmatpush1.msra.mxu0 0.0
        %3429 = vmatprep.subr.mxu0 0.0
        %3430 = vmatpush1.msra.mxu0 0.0
        %3431 = vmatprep.subr.mxu0 0.0
        %3432 = vmatpush1.msra.mxu0 0.0
        %3433 = vmatprep.subr.mxu0 0.0
        %3434 = vmatpush1.msra.mxu0 0.0
        %3435 = vmatprep.subr.mxu0 0.0
        %3436 = vmatpush1.msra.mxu0 0.0
        %3437 = vmatprep.subr.mxu0 0.0
        %3438 = vmatpush1.msra.mxu0 0.0
        %3439 = vmatprep.subr.mxu0 0.0
        %3440 = vmatpush1.msra.mxu0 0.0
        %3441 = vmatprep.subr.mxu0 0.0
        %3442 = vmatpush1.msra.mxu0 0.0
        %3443 = vmatprep.mubr.f32.mxu0 0.0
        %3444 = vmatmul.mubr.f32.gmra.mrb[0].mxu0 %v3284
        %v3445 = vpop.f32.mrb[0].mxu0
        %v3446 = vadd.f32 0.0, %v3445
        %v3447 = vpop.f32.mrb[0].mxu0
        %3448 = vmatprep.mubr.f32.mxu0 0.0
        %3449 = vmatmul.mubr.f32.gmra.mrb[0].mxu0 %v3287
        %v3450 = vpop.f32.mrb[0].mxu0
        %v3451 = vadd.f32 0.0, %v3450
        %v3452 = vpop.f32.mrb[0].mxu0
        %3453 = vmatprep.mubr.f32.mxu0 0.0
        %3454 = vmatmul.mubr.f32.gmra.mrb[0].mxu0 %v3290
        %v3455 = vpop.f32.mrb[0].mxu0
        %v3456 = vadd.f32 0.0, %v3455
        %v3457 = vpop.f32.mrb[0].mxu0
        %3458 = vmatprep.mubr.f32.mxu0 0.0
        %3459 = vmatmul.mubr.f32.gmra.mrb[0].mxu0 %v3293
        %v3460 = vpop.f32.mrb[0].mxu0
        %v3461 = vadd.f32 0.0, %v3460
        %v3462 = vpop.f32.mrb[0].mxu0
        %3463 = vmatprep.mubr.f32.mxu0 0.0
        %3464 = vmatmul.mubr.f32.gmra.mrb[0].mxu0 %v3296
        %v3465 = vpop.f32.mrb[0].mxu0
        %v3466 = vadd.f32 0.0, %v3465
        %v3467 = vpop.f32.mrb[0].mxu0
        %3468 = vmatprep.mubr.f32.mxu0 0.0
        %3469 = vmatmul.mubr.f32.gmra.mrb[0].mxu0 %v3299
        %v3470 = vpop.f32.mrb[0].mxu0
        %v3471 = vadd.f32 0.0, %v3470
        %v3472 = vpop.f32.mrb[0].mxu0
        %3473 = vmatprep.mubr.f32.mxu0 0.0
        %3474 = vmatmul.mubr.f32.gmra.mrb[0].mxu0 %v3302
        %v3475 = vpop.f32.mrb[0].mxu0
        %v3476 = vadd.f32 0.0, %v3475
        %v3477 = vpop.f32.mrb[0].mxu0
        %3478 = vmatprep.mubr.f32.mxu0 0.0
        %3479 = vmatmul.mubr.f32.gmra.mrb[0].mxu0 %v3305
        %v3480 = vpop.f32.mrb[0].mxu0
        %v3481 = vadd.f32 0.0, %v3480
        %v3482 = vpop.f32.mrb[0].mxu0
        %3483 = vmatprep.mubr.f32.mxu0 0.0
        %3484 = vmatmul.mubr.f32.gmra.mrb[0].mxu0 %v3308
        %v3485 = vpop.f32.mrb[0].mxu0
        %v3486 = vadd.f32 0.0, %v3485
        %v3487 = vpop.f32.mrb[0].mxu0
        %3488 = vmatprep.mubr.f32.mxu0 0.0
        %3489 = vmatmul.mubr.f32.gmra.mrb[0].mxu0 %v3311
        %v3490 = vpop.f32.mrb[0].mxu0
        %v3491 = vadd.f32 0.0, %v3490
        %v3492 = vpop.f32.mrb[0].mxu0
        %3493 = vmatprep.mubr.f32.mxu0 0.0
        %3494 = vmatmul.mubr.f32.gmra.mrb[0].mxu0 %v3314
        %v3495 = vpop.f32.mrb[0].mxu0
        %v3496 = vadd.f32 0.0, %v3495
        %v3497 = vpop.f32.mrb[0].mxu0
        %3498 = vmatprep.mubr.f32.mxu0 0.0
        %3499 = vmatmul.mubr.f32.gmra.mrb[0].mxu0 %v3317
        %v3500 = vpop.f32.mrb[0].mxu0
        %v3501 = vadd.f32 0.0, %v3500
        %v3502 = vpop.f32.mrb[0].mxu0
        %3503 = vmatprep.mubr.f32.mxu0 0.0
        %3504 = vmatmul.mubr.f32.gmra.mrb[0].mxu0 %v3320
        %v3505 = vpop.f32.mrb[0].mxu0
        %v3506 = vadd.f32 0.0, %v3505
        %v3507 = vpop.f32.mrb[0].mxu0
        %3508 = vmatprep.mubr.f32.mxu0 0.0
        %3509 = vmatmul.mubr.f32.gmra.mrb[0].mxu0 %v3323
        %v3510 = vpop.f32.mrb[0].mxu0
        %v3511 = vadd.f32 0.0, %v3510
        %v3512 = vpop.f32.mrb[0].mxu0
        %3513 = vmatprep.mubr.f32.mxu0 0.0
        %3514 = vmatmul.mubr.f32.gmra.mrb[0].mxu0 %v3326
        %v3515 = vpop.f32.mrb[0].mxu0
        %v3516 = vadd.f32 0.0, %v3515
        %v3517 = vpop.f32.mrb[0].mxu0
        %3518 = vmatprep.mubr.f32.mxu0 0.0
        %3519 = vmatmul.mubr.f32.gmra.mrb[0].mxu0 %v3329
        %v3520 = vpop.f32.mrb[0].mxu0
        %v3521 = vadd.f32 0.0, %v3520
        %v3522 = vpop.f32.mrb[0].mxu0
        %3523 = vmatprep.mubr.f32.mxu0 0.0
        %3524 = vmatmul.mubr.f32.gmra.mrb[0].mxu0 %v3332
        %v3525 = vpop.f32.mrb[0].mxu0
        %v3526 = vadd.f32 0.0, %v3525
        %v3527 = vpop.f32.mrb[0].mxu0
        %3528 = vmatprep.mubr.f32.mxu0 0.0
        %3529 = vmatmul.mubr.f32.gmra.mrb[0].mxu0 %v3335
        %v3530 = vpop.f32.mrb[0].mxu0
        %v3531 = vadd.f32 0.0, %v3530
        %v3532 = vpop.f32.mrb[0].mxu0
        %3533 = vmatprep.mubr.f32.mxu0 0.0
        %3534 = vmatmul.mubr.f32.gmra.mrb[0].mxu0 %v3338
        %v3535 = vpop.f32.mrb[0].mxu0
        %v3536 = vadd.f32 0.0, %v3535
        %v3537 = vpop.f32.mrb[0].mxu0
        %3538 = vmatprep.mubr.f32.mxu0 0.0
        %3539 = vmatmul.mubr.f32.gmra.mrb[0].mxu0 %v3341
        %v3540 = vpop.f32.mrb[0].mxu0
        %v3541 = vadd.f32 0.0, %v3540
        %v3542 = vpop.f32.mrb[0].mxu0
        %3543 = vmatprep.mubr.f32.mxu0 0.0
        %3544 = vmatmul.mubr.f32.gmra.mrb[0].mxu0 %v3344
        %v3545 = vpop.f32.mrb[0].mxu0
        %v3546 = vadd.f32 0.0, %v3545
        %v3547 = vpop.f32.mrb[0].mxu0
        %3548 = vmatprep.mubr.f32.mxu0 0.0
        %3549 = vmatmul.mubr.f32.gmra.mrb[0].mxu0 %v3347
        %v3550 = vpop.f32.mrb[0].mxu0
        %v3551 = vadd.f32 0.0, %v3550
        %v3552 = vpop.f32.mrb[0].mxu0
        %3553 = vmatprep.mubr.f32.mxu0 0.0
        %3554 = vmatmul.mubr.f32.gmra.mrb[0].mxu0 %v3350
        %v3555 = vpop.f32.mrb[0].mxu0
        %v3556 = vadd.f32 0.0, %v3555
        %v3557 = vpop.f32.mrb[0].mxu0
        %3558 = vmatprep.mubr.f32.mxu0 0.0
        %3559 = vmatmul.mubr.f32.gmra.mrb[0].mxu0 %v3353
        %v3560 = vpop.f32.mrb[0].mxu0
        %v3561 = vadd.f32 0.0, %v3560
        %v3562 = vpop.f32.mrb[0].mxu0
        %3563 = vmatprep.mubr.f32.mxu0 0.0
        %3564 = vmatmul.mubr.f32.gmra.mrb[0].mxu0 %v3356
        %v3565 = vpop.f32.mrb[0].mxu0
        %v3566 = vadd.f32 0.0, %v3565
        %v3567 = vpop.f32.mrb[0].mxu0
        %3568 = vmatprep.mubr.f32.mxu0 0.0
        %3569 = vmatmul.mubr.f32.gmra.mrb[0].mxu0 %v3359
        %v3570 = vpop.f32.mrb[0].mxu0
        %v3571 = vadd.f32 0.0, %v3570
        %v3572 = vpop.f32.mrb[0].mxu0
        %3573 = vmatprep.mubr.f32.mxu0 0.0
        %3574 = vmatmul.mubr.f32.gmra.mrb[0].mxu0 %v3362
        %v3575 = vpop.f32.mrb[0].mxu0
        %v3576 = vadd.f32 0.0, %v3575
        %v3577 = vpop.f32.mrb[0].mxu0
        %3578 = vmatprep.mubr.f32.mxu0 0.0
        %3579 = vmatmul.mubr.f32.gmra.mrb[0].mxu0 %v3365
        %v3580 = vpop.f32.mrb[0].mxu0
        %v3581 = vadd.f32 0.0, %v3580
        %v3582 = vpop.f32.mrb[0].mxu0
        %3583 = vmatprep.mubr.f32.mxu0 0.0
        %3584 = vmatmul.mubr.f32.gmra.mrb[0].mxu0 %v3368
        %v3585 = vpop.f32.mrb[0].mxu0
        %v3586 = vadd.f32 0.0, %v3585
        %v3587 = vpop.f32.mrb[0].mxu0
        %3588 = vmatprep.mubr.f32.mxu0 0.0
        %3589 = vmatmul.mubr.f32.gmra.mrb[0].mxu0 %v3371
        %v3590 = vpop.f32.mrb[0].mxu0
        %v3591 = vadd.f32 0.0, %v3590
        %v3592 = vpop.f32.mrb[0].mxu0
        %3593 = vmatprep.mubr.f32.mxu0 0.0
        %3594 = vmatmul.mubr.f32.gmra.mrb[0].mxu0 %v3374
        %v3595 = vpop.f32.mrb[0].mxu0
        %v3596 = vadd.f32 0.0, %v3595
        %v3597 = vpop.f32.mrb[0].mxu0
        %3598 = vmatprep.mubr.f32.mxu0 0.0
        %3599 = vmatmul.mubr.f32.gmra.mrb[0].mxu0 %v3377
        %v3600 = vpop.f32.mrb[0].mxu0
        %v3601 = vadd.f32 0.0, %v3600
        %v3602 = vpop.f32.mrb[0].mxu0
        %3603 = vdwg.mxu0
        %v3604 = vmul.f32 %v3446, %v565
        %v3605 = vmul.f32 %v3451, %v570
        %v3606 = vmul.f32 %v3456, %v565
        %v3607 = vmul.f32 %v3461, %v570
        %v3608 = vmul.f32 %v3466, %v565
        %v3609 = vmul.f32 %v3471, %v570
        %v3610 = vmul.f32 %v3476, %v565
        %v3611 = vmul.f32 %v3481, %v570
        %v3612 = vmul.f32 %v3486, %v565
        %v3613 = vmul.f32 %v3491, %v570
        %v3614 = vmul.f32 %v3496, %v565
        %v3615 = vmul.f32 %v3501, %v570
        %v3616 = vmul.f32 %v3506, %v565
        %v3617 = vmul.f32 %v3511, %v570
        %v3618 = vmul.f32 %v3516, %v565
        %v3619 = vmul.f32 %v3521, %v570
        %v3620 = vmul.f32 %v3526, %v565
        %v3621 = vmul.f32 %v3531, %v570
        %v3622 = vmul.f32 %v3536, %v565
        %v3623 = vmul.f32 %v3541, %v570
        %v3624 = vmul.f32 %v3546, %v565
        %v3625 = vmul.f32 %v3551, %v570
        %v3626 = vmul.f32 %v3556, %v565
        %v3627 = vmul.f32 %v3561, %v570
        %v3628 = vmul.f32 %v3566, %v565
        %v3629 = vmul.f32 %v3571, %v570
        %v3630 = vmul.f32 %v3576, %v565
        %v3631 = vmul.f32 %v3581, %v570
        %v3632 = vmul.f32 %v3586, %v565
        %v3633 = vmul.f32 %v3591, %v570
        %v3634 = vmul.f32 %v3596, %v565
        %v3635 = vmul.f32 %v3601, %v570
        %v3636 = vld [vmem:[#allocation2] sm:$0xff]
        %v3637 = vld [vmem:[#allocation2 + $0x8] sm:$0xff]
        %v3638 = vld [vmem:[#allocation2 + $0x10] sm:$0xff]
        %v3639 = vld [vmem:[#allocation2 + $0x18] sm:$0xff]
        %v3640 = vld [vmem:[#allocation2 + $0x20] sm:$0xff]
        %v3641 = vld [vmem:[#allocation2 + $0x28] sm:$0xff]
        %v3642 = vld [vmem:[#allocation2 + $0x30] sm:$0xff]
        %v3643 = vld [vmem:[#allocation2 + $0x38] sm:$0xff]
        %v3644 = vld [vmem:[%s4 + $0x50] sm:$0xff]
        %v3645 = vld [vmem:[%s4 + $0x58] sm:$0xff]
        %v3646 = vld [vmem:[%s4 + $0xd0] sm:$0xff]
        %v3647 = vld [vmem:[%s4 + $0xd8] sm:$0xff]
        %v3648 = vld [vmem:[%s4 + $0x150] sm:$0xff]
        %v3649 = vld [vmem:[%s4 + $0x158] sm:$0xff]
        %v3650 = vld [vmem:[%s4 + $0x1d0] sm:$0xff]
        %v3651 = vld [vmem:[%s4 + $0x1d8] sm:$0xff]
        %v3652 = vld [vmem:[%s4 + $0x250] sm:$0xff]
        %v3653 = vld [vmem:[%s4 + $0x258] sm:$0xff]
        %v3654 = vld [vmem:[%s4 + $0x2d0] sm:$0xff]
        %v3655 = vld [vmem:[%s4 + $0x2d8] sm:$0xff]
        %v3656 = vld [vmem:[%s4 + $0x350] sm:$0xff]
        %v3657 = vld [vmem:[%s4 + $0x358] sm:$0xff]
        %v3658 = vld [vmem:[%s4 + $0x3d0] sm:$0xff]
        %v3659 = vld [vmem:[%s4 + $0x3d8] sm:$0xff]
        %3660 = vmatprep.subr.mxu0 0.0
        %3661 = vmatpush1.msra.mxu0 %v3604
        %3662 = vmatprep.subr.mxu0 0.0
        %3663 = vmatpush1.msra.mxu0 %v3605
        %3664 = vmatprep.subr.mxu0 0.0
        %3665 = vmatpush1.msra.mxu0 %v3606
        %3666 = vmatprep.subr.mxu0 0.0
        %3667 = vmatpush1.msra.mxu0 %v3607
        %3668 = vmatprep.subr.mxu0 0.0
        %3669 = vmatpush1.msra.mxu0 %v3608
        %3670 = vmatprep.subr.mxu0 0.0
        %3671 = vmatpush1.msra.mxu0 %v3609
        %3672 = vmatprep.subr.mxu0 0.0
        %3673 = vmatpush1.msra.mxu0 %v3610
        %3674 = vmatprep.subr.mxu0 0.0
        %3675 = vmatpush1.msra.mxu0 %v3611
        %3676 = vmatprep.subr.mxu0 0.0
        %3677 = vmatpush1.msra.mxu0 %v3612
        %3678 = vmatprep.subr.mxu0 0.0
        %3679 = vmatpush1.msra.mxu0 %v3613
        %3680 = vmatprep.subr.mxu0 0.0
        %3681 = vmatpush1.msra.mxu0 %v3614
        %3682 = vmatprep.subr.mxu0 0.0
        %3683 = vmatpush1.msra.mxu0 %v3615
        %3684 = vmatprep.subr.mxu0 0.0
        %3685 = vmatpush1.msra.mxu0 %v3616
        %3686 = vmatprep.subr.mxu0 0.0
        %3687 = vmatpush1.msra.mxu0 %v3617
        %3688 = vmatprep.subr.mxu0 0.0
        %3689 = vmatpush1.msra.mxu0 %v3618
        %3690 = vmatprep.subr.mxu0 0.0
        %3691 = vmatpush1.msra.mxu0 %v3619
        %3692 = vmatprep.subr.mxu0 0.0
        %3693 = vmatpush1.msra.mxu0 %v3620
        %3694 = vmatprep.subr.mxu0 0.0
        %3695 = vmatpush1.msra.mxu0 %v3621
        %3696 = vmatprep.subr.mxu0 0.0
        %3697 = vmatpush1.msra.mxu0 %v3622
        %3698 = vmatprep.subr.mxu0 0.0
        %3699 = vmatpush1.msra.mxu0 %v3623
        %3700 = vmatprep.subr.mxu0 0.0
        %3701 = vmatpush1.msra.mxu0 %v3624
        %3702 = vmatprep.subr.mxu0 0.0
        %3703 = vmatpush1.msra.mxu0 %v3625
        %3704 = vmatprep.subr.mxu0 0.0
        %3705 = vmatpush1.msra.mxu0 %v3626
        %3706 = vmatprep.subr.mxu0 0.0
        %3707 = vmatpush1.msra.mxu0 %v3627
        %3708 = vmatprep.subr.mxu0 0.0
        %3709 = vmatpush1.msra.mxu0 %v3628
        %3710 = vmatprep.subr.mxu0 0.0
        %3711 = vmatpush1.msra.mxu0 %v3629
        %3712 = vmatprep.subr.mxu0 0.0
        %3713 = vmatpush1.msra.mxu0 %v3630
        %3714 = vmatprep.subr.mxu0 0.0
        %3715 = vmatpush1.msra.mxu0 %v3631
        %3716 = vmatprep.subr.mxu0 0.0
        %3717 = vmatpush1.msra.mxu0 %v3632
        %3718 = vmatprep.subr.mxu0 0.0
        %3719 = vmatpush1.msra.mxu0 %v3633
        %3720 = vmatprep.subr.mxu0 0.0
        %3721 = vmatpush1.msra.mxu0 %v3634
        %3722 = vmatprep.subr.mxu0 0.0
        %3723 = vmatpush1.msra.mxu0 %v3635
        %3724 = vmatprep.mubr.f32.mxu0 %v3645
        %3725 = vmatmul.mubr.f32.gmra.mrb[0].mxu0 %v3644
        %v3726 = vpop.f32.mrb[0].mxu0
        %v3727 = vadd.f32 0.0, %v3726
        %v3728 = vpop.f32.mrb[0].mxu0
        %3729 = vmatprep.mubr.f32.mxu0 %v3647
        %3730 = vmatmul.mubr.f32.gmra.mrb[0].mxu0 %v3646
        %v3731 = vpop.f32.mrb[0].mxu0
        %v3732 = vadd.f32 0.0, %v3731
        %v3733 = vpop.f32.mrb[0].mxu0
        %3734 = vmatprep.mubr.f32.mxu0 %v3649
        %3735 = vmatmul.mubr.f32.gmra.mrb[0].mxu0 %v3648
        %v3736 = vpop.f32.mrb[0].mxu0
        %v3737 = vadd.f32 0.0, %v3736
        %v3738 = vpop.f32.mrb[0].mxu0
        %3739 = vmatprep.mubr.f32.mxu0 %v3651
        %3740 = vmatmul.mubr.f32.gmra.mrb[0].mxu0 %v3650
        %v3741 = vpop.f32.mrb[0].mxu0
        %v3742 = vadd.f32 0.0, %v3741
        %v3743 = vpop.f32.mrb[0].mxu0
        %3744 = vmatprep.mubr.f32.mxu0 %v3653
        %3745 = vmatmul.mubr.f32.gmra.mrb[0].mxu0 %v3652
        %v3746 = vpop.f32.mrb[0].mxu0
        %v3747 = vadd.f32 0.0, %v3746
        %v3748 = vpop.f32.mrb[0].mxu0
        %3749 = vmatprep.mubr.f32.mxu0 %v3655
        %3750 = vmatmul.mubr.f32.gmra.mrb[0].mxu0 %v3654
        %v3751 = vpop.f32.mrb[0].mxu0
        %v3752 = vadd.f32 0.0, %v3751
        %v3753 = vpop.f32.mrb[0].mxu0
        %3754 = vmatprep.mubr.f32.mxu0 %v3657
        %3755 = vmatmul.mubr.f32.gmra.mrb[0].mxu0 %v3656
        %v3756 = vpop.f32.mrb[0].mxu0
        %v3757 = vadd.f32 0.0, %v3756
        %v3758 = vpop.f32.mrb[0].mxu0
        %3759 = vmatprep.mubr.f32.mxu0 %v3659
        %3760 = vmatmul.mubr.f32.gmra.mrb[0].mxu0 %v3658
        %v3761 = vpop.f32.mrb[0].mxu0
        %v3762 = vadd.f32 0.0, %v3761
        %v3763 = vpop.f32.mrb[0].mxu0
        %3764 = vdwg.mxu0
        %v3765 = vadd.f32 %v3636, %v3727
        %v3766 = vadd.f32 %v3637, %v3732
        %v3767 = vadd.f32 %v3638, %v3737
        %v3768 = vadd.f32 %v3639, %v3742
        %v3769 = vadd.f32 %v3640, %v3747
        %v3770 = vadd.f32 %v3641, %v3752
        %v3771 = vadd.f32 %v3642, %v3757
        %v3772 = vadd.f32 %v3643, %v3762
        %3773 = vst [vmem:[#allocation2] sm:$0xff] %v3765
        %3774 = vst [vmem:[#allocation2 + $0x8] sm:$0xff] %v3766
        %3775 = vst [vmem:[#allocation2 + $0x10] sm:$0xff] %v3767
        %3776 = vst [vmem:[#allocation2 + $0x18] sm:$0xff] %v3768
        %3777 = vst [vmem:[#allocation2 + $0x20] sm:$0xff] %v3769
        %3778 = vst [vmem:[#allocation2 + $0x28] sm:$0xff] %v3770
        %3779 = vst [vmem:[#allocation2 + $0x30] sm:$0xff] %v3771
        %3780 = vst [vmem:[#allocation2 + $0x38] sm:$0xff] %v3772
        %v3781 = vld [vmem:[%s2 + $0x600] sm:$0xff]
        %v3782 = vld [vmem:[%s2 + $0x608] sm:$0xff]
        %v3783 = vld [vmem:[%s2 + $0x610] sm:$0xff]
        %v3784 = vld [vmem:[%s2 + $0x618] sm:$0xff]
        %v3785 = vld [vmem:[%s2 + $0x620] sm:$0xff]
        %v3786 = vld [vmem:[%s2 + $0x628] sm:$0xff]
        %v3787 = vld [vmem:[%s2 + $0x630] sm:$0xff]
        %v3788 = vld [vmem:[%s2 + $0x638] sm:$0xff]
        %v3789 = vld [vmem:[%s2 + $0x640] sm:$0xff]
        %v3790 = vld [vmem:[%s2 + $0x648] sm:$0xff]
        %v3791 = vld [vmem:[%s2 + $0x650] sm:$0xff]
        %v3792 = vld [vmem:[%s2 + $0x658] sm:$0xff]
        %v3793 = vld [vmem:[%s2 + $0x660] sm:$0xff]
        %v3794 = vld [vmem:[%s2 + $0x668] sm:$0xff]
        %v3795 = vld [vmem:[%s2 + $0x670] sm:$0xff]
        %v3796 = vld [vmem:[%s2 + $0x678] sm:$0xff]
        %v3797 = vld [vmem:[%s2 + $0x680] sm:$0xff]
        %v3798 = vld [vmem:[%s2 + $0x688] sm:$0xff]
        %v3799 = vld [vmem:[%s2 + $0x690] sm:$0xff]
        %v3800 = vld [vmem:[%s2 + $0x698] sm:$0xff]
        %v3801 = vld [vmem:[%s2 + $0x6a0] sm:$0xff]
        %v3802 = vld [vmem:[%s2 + $0x6a8] sm:$0xff]
        %v3803 = vld [vmem:[%s2 + $0x6b0] sm:$0xff]
        %v3804 = vld [vmem:[%s2 + $0x6b8] sm:$0xff]
        %v3805 = vld [vmem:[%s2 + $0x6c0] sm:$0xff]
        %v3806 = vld [vmem:[%s2 + $0x6c8] sm:$0xff]
        %v3807 = vld [vmem:[%s2 + $0x6d0] sm:$0xff]
        %v3808 = vld [vmem:[%s2 + $0x6d8] sm:$0xff]
        %v3809 = vld [vmem:[%s2 + $0x6e0] sm:$0xff]
        %v3810 = vld [vmem:[%s2 + $0x6e8] sm:$0xff]
        %v3811 = vld [vmem:[%s2 + $0x6f0] sm:$0xff]
        %v3812 = vld [vmem:[%s2 + $0x6f8] sm:$0xff]
        %v3814 = vsel %vm399, %v3781, 0
        %v3817 = vsel %vm399, %v3782, 0
        %v3820 = vsel %vm399, %v3783, 0
        %v3823 = vsel %vm399, %v3784, 0
        %v3826 = vsel %vm399, %v3785, 0
        %v3829 = vsel %vm399, %v3786, 0
        %v3832 = vsel %vm399, %v3787, 0
        %v3835 = vsel %vm399, %v3788, 0
        %v3838 = vsel %vm399, %v3789, 0
        %v3841 = vsel %vm399, %v3790, 0
        %v3844 = vsel %vm399, %v3791, 0
        %v3847 = vsel %vm399, %v3792, 0
        %v3850 = vsel %vm399, %v3793, 0
        %v3853 = vsel %vm399, %v3794, 0
        %v3856 = vsel %vm399, %v3795, 0
        %v3859 = vsel %vm399, %v3796, 0
        %v3862 = vsel %vm399, %v3797, 0
        %v3865 = vsel %vm399, %v3798, 0
        %v3868 = vsel %vm399, %v3799, 0
        %v3871 = vsel %vm399, %v3800, 0
        %v3874 = vsel %vm399, %v3801, 0
        %v3877 = vsel %vm399, %v3802, 0
        %v3880 = vsel %vm399, %v3803, 0
        %v3883 = vsel %vm399, %v3804, 0
        %v3886 = vsel %vm399, %v3805, 0
        %v3889 = vsel %vm399, %v3806, 0
        %v3892 = vsel %vm399, %v3807, 0
        %v3895 = vsel %vm399, %v3808, 0
        %v3898 = vsel %vm399, %v3809, 0
        %v3901 = vsel %vm399, %v3810, 0
        %v3904 = vsel %vm399, %v3811, 0
        %v3907 = vsel %vm399, %v3812, 0
        %3909 = vmatprep.subr.mxu0 0.0
        %3910 = vmatpush1.msra.mxu0 %v367
        %3911 = vmatprep.subr.mxu0 0.0
        %3912 = vmatpush1.msra.mxu0 %v368
        %3913 = vmatprep.subr.mxu0 0.0
        %3914 = vmatpush1.msra.mxu0 %v369
        %3915 = vmatprep.subr.mxu0 0.0
        %3916 = vmatpush1.msra.mxu0 %v370
        %3917 = vmatprep.subr.mxu0 0.0
        %3918 = vmatpush1.msra.mxu0 %v371
        %3919 = vmatprep.subr.mxu0 0.0
        %3920 = vmatpush1.msra.mxu0 %v372
        %3921 = vmatprep.subr.mxu0 0.0
        %3922 = vmatpush1.msra.mxu0 %v373
        %3923 = vmatprep.subr.mxu0 0.0
        %3924 = vmatpush1.msra.mxu0 %v374
        %3925 = vmatprep.subr.mxu0 0.0
        %3926 = vmatpush1.msra.mxu0 0.0
        %3927 = vmatprep.subr.mxu0 0.0
        %3928 = vmatpush1.msra.mxu0 0.0
        %3929 = vmatprep.subr.mxu0 0.0
        %3930 = vmatpush1.msra.mxu0 0.0
        %3931 = vmatprep.subr.mxu0 0.0
        %3932 = vmatpush1.msra.mxu0 0.0
        %3933 = vmatprep.subr.mxu0 0.0
        %3934 = vmatpush1.msra.mxu0 0.0
        %3935 = vmatprep.subr.mxu0 0.0
        %3936 = vmatpush1.msra.mxu0 0.0
        %3937 = vmatprep.subr.mxu0 0.0
        %3938 = vmatpush1.msra.mxu0 0.0
        %3939 = vmatprep.subr.mxu0 0.0
        %3940 = vmatpush1.msra.mxu0 0.0
        %3941 = vmatprep.subr.mxu0 0.0
        %3942 = vmatpush1.msra.mxu0 0.0
        %3943 = vmatprep.subr.mxu0 0.0
        %3944 = vmatpush1.msra.mxu0 0.0
        %3945 = vmatprep.subr.mxu0 0.0
        %3946 = vmatpush1.msra.mxu0 0.0
        %3947 = vmatprep.subr.mxu0 0.0
        %3948 = vmatpush1.msra.mxu0 0.0
        %3949 = vmatprep.subr.mxu0 0.0
        %3950 = vmatpush1.msra.mxu0 0.0
        %3951 = vmatprep.subr.mxu0 0.0
        %3952 = vmatpush1.msra.mxu0 0.0
        %3953 = vmatprep.subr.mxu0 0.0
        %3954 = vmatpush1.msra.mxu0 0.0
        %3955 = vmatprep.subr.mxu0 0.0
        %3956 = vmatpush1.msra.mxu0 0.0
        %3957 = vmatprep.subr.mxu0 0.0
        %3958 = vmatpush1.msra.mxu0 0.0
        %3959 = vmatprep.subr.mxu0 0.0
        %3960 = vmatpush1.msra.mxu0 0.0
        %3961 = vmatprep.subr.mxu0 0.0
        %3962 = vmatpush1.msra.mxu0 0.0
        %3963 = vmatprep.subr.mxu0 0.0
        %3964 = vmatpush1.msra.mxu0 0.0
        %3965 = vmatprep.subr.mxu0 0.0
        %3966 = vmatpush1.msra.mxu0 0.0
        %3967 = vmatprep.subr.mxu0 0.0
        %3968 = vmatpush1.msra.mxu0 0.0
        %3969 = vmatprep.subr.mxu0 0.0
        %3970 = vmatpush1.msra.mxu0 0.0
        %3971 = vmatprep.subr.mxu0 0.0
        %3972 = vmatpush1.msra.mxu0 0.0
        %3973 = vmatprep.mubr.f32.mxu0 0.0
        %3974 = vmatmul.mubr.f32.gmra.mrb[0].mxu0 %v3814
        %v3975 = vpop.f32.mrb[0].mxu0
        %v3976 = vadd.f32 0.0, %v3975
        %v3977 = vpop.f32.mrb[0].mxu0
        %3978 = vmatprep.mubr.f32.mxu0 0.0
        %3979 = vmatmul.mubr.f32.gmra.mrb[0].mxu0 %v3817
        %v3980 = vpop.f32.mrb[0].mxu0
        %v3981 = vadd.f32 0.0, %v3980
        %v3982 = vpop.f32.mrb[0].mxu0
        %3983 = vmatprep.mubr.f32.mxu0 0.0
        %3984 = vmatmul.mubr.f32.gmra.mrb[0].mxu0 %v3820
        %v3985 = vpop.f32.mrb[0].mxu0
        %v3986 = vadd.f32 0.0, %v3985
        %v3987 = vpop.f32.mrb[0].mxu0
        %3988 = vmatprep.mubr.f32.mxu0 0.0
        %3989 = vmatmul.mubr.f32.gmra.mrb[0].mxu0 %v3823
        %v3990 = vpop.f32.mrb[0].mxu0
        %v3991 = vadd.f32 0.0, %v3990
        %v3992 = vpop.f32.mrb[0].mxu0
        %3993 = vmatprep.mubr.f32.mxu0 0.0
        %3994 = vmatmul.mubr.f32.gmra.mrb[0].mxu0 %v3826
        %v3995 = vpop.f32.mrb[0].mxu0
        %v3996 = vadd.f32 0.0, %v3995
        %v3997 = vpop.f32.mrb[0].mxu0
        %3998 = vmatprep.mubr.f32.mxu0 0.0
        %3999 = vmatmul.mubr.f32.gmra.mrb[0].mxu0 %v3829
        %v4000 = vpop.f32.mrb[0].mxu0
        %v4001 = vadd.f32 0.0, %v4000
        %v4002 = vpop.f32.mrb[0].mxu0
        %4003 = vmatprep.mubr.f32.mxu0 0.0
        %4004 = vmatmul.mubr.f32.gmra.mrb[0].mxu0 %v3832
        %v4005 = vpop.f32.mrb[0].mxu0
        %v4006 = vadd.f32 0.0, %v4005
        %v4007 = vpop.f32.mrb[0].mxu0
        %4008 = vmatprep.mubr.f32.mxu0 0.0
        %4009 = vmatmul.mubr.f32.gmra.mrb[0].mxu0 %v3835
        %v4010 = vpop.f32.mrb[0].mxu0
        %v4011 = vadd.f32 0.0, %v4010
        %v4012 = vpop.f32.mrb[0].mxu0
        %4013 = vmatprep.mubr.f32.mxu0 0.0
        %4014 = vmatmul.mubr.f32.gmra.mrb[0].mxu0 %v3838
        %v4015 = vpop.f32.mrb[0].mxu0
        %v4016 = vadd.f32 0.0, %v4015
        %v4017 = vpop.f32.mrb[0].mxu0
        %4018 = vmatprep.mubr.f32.mxu0 0.0
        %4019 = vmatmul.mubr.f32.gmra.mrb[0].mxu0 %v3841
        %v4020 = vpop.f32.mrb[0].mxu0
        %v4021 = vadd.f32 0.0, %v4020
        %v4022 = vpop.f32.mrb[0].mxu0
        %4023 = vmatprep.mubr.f32.mxu0 0.0
        %4024 = vmatmul.mubr.f32.gmra.mrb[0].mxu0 %v3844
        %v4025 = vpop.f32.mrb[0].mxu0
        %v4026 = vadd.f32 0.0, %v4025
        %v4027 = vpop.f32.mrb[0].mxu0
        %4028 = vmatprep.mubr.f32.mxu0 0.0
        %4029 = vmatmul.mubr.f32.gmra.mrb[0].mxu0 %v3847
        %v4030 = vpop.f32.mrb[0].mxu0
        %v4031 = vadd.f32 0.0, %v4030
        %v4032 = vpop.f32.mrb[0].mxu0
        %4033 = vmatprep.mubr.f32.mxu0 0.0
        %4034 = vmatmul.mubr.f32.gmra.mrb[0].mxu0 %v3850
        %v4035 = vpop.f32.mrb[0].mxu0
        %v4036 = vadd.f32 0.0, %v4035
        %v4037 = vpop.f32.mrb[0].mxu0
        %4038 = vmatprep.mubr.f32.mxu0 0.0
        %4039 = vmatmul.mubr.f32.gmra.mrb[0].mxu0 %v3853
        %v4040 = vpop.f32.mrb[0].mxu0
        %v4041 = vadd.f32 0.0, %v4040
        %v4042 = vpop.f32.mrb[0].mxu0
        %4043 = vmatprep.mubr.f32.mxu0 0.0
        %4044 = vmatmul.mubr.f32.gmra.mrb[0].mxu0 %v3856
        %v4045 = vpop.f32.mrb[0].mxu0
        %v4046 = vadd.f32 0.0, %v4045
        %v4047 = vpop.f32.mrb[0].mxu0
        %4048 = vmatprep.mubr.f32.mxu0 0.0
        %4049 = vmatmul.mubr.f32.gmra.mrb[0].mxu0 %v3859
        %v4050 = vpop.f32.mrb[0].mxu0
        %v4051 = vadd.f32 0.0, %v4050
        %v4052 = vpop.f32.mrb[0].mxu0
        %4053 = vmatprep.mubr.f32.mxu0 0.0
        %4054 = vmatmul.mubr.f32.gmra.mrb[0].mxu0 %v3862
        %v4055 = vpop.f32.mrb[0].mxu0
        %v4056 = vadd.f32 0.0, %v4055
        %v4057 = vpop.f32.mrb[0].mxu0
        %4058 = vmatprep.mubr.f32.mxu0 0.0
        %4059 = vmatmul.mubr.f32.gmra.mrb[0].mxu0 %v3865
        %v4060 = vpop.f32.mrb[0].mxu0
        %v4061 = vadd.f32 0.0, %v4060
        %v4062 = vpop.f32.mrb[0].mxu0
        %4063 = vmatprep.mubr.f32.mxu0 0.0
        %4064 = vmatmul.mubr.f32.gmra.mrb[0].mxu0 %v3868
        %v4065 = vpop.f32.mrb[0].mxu0
        %v4066 = vadd.f32 0.0, %v4065
        %v4067 = vpop.f32.mrb[0].mxu0
        %4068 = vmatprep.mubr.f32.mxu0 0.0
        %4069 = vmatmul.mubr.f32.gmra.mrb[0].mxu0 %v3871
        %v4070 = vpop.f32.mrb[0].mxu0
        %v4071 = vadd.f32 0.0, %v4070
        %v4072 = vpop.f32.mrb[0].mxu0
        %4073 = vmatprep.mubr.f32.mxu0 0.0
        %4074 = vmatmul.mubr.f32.gmra.mrb[0].mxu0 %v3874
        %v4075 = vpop.f32.mrb[0].mxu0
        %v4076 = vadd.f32 0.0, %v4075
        %v4077 = vpop.f32.mrb[0].mxu0
        %4078 = vmatprep.mubr.f32.mxu0 0.0
        %4079 = vmatmul.mubr.f32.gmra.mrb[0].mxu0 %v3877
        %v4080 = vpop.f32.mrb[0].mxu0
        %v4081 = vadd.f32 0.0, %v4080
        %v4082 = vpop.f32.mrb[0].mxu0
        %4083 = vmatprep.mubr.f32.mxu0 0.0
        %4084 = vmatmul.mubr.f32.gmra.mrb[0].mxu0 %v3880
        %v4085 = vpop.f32.mrb[0].mxu0
        %v4086 = vadd.f32 0.0, %v4085
        %v4087 = vpop.f32.mrb[0].mxu0
        %4088 = vmatprep.mubr.f32.mxu0 0.0
        %4089 = vmatmul.mubr.f32.gmra.mrb[0].mxu0 %v3883
        %v4090 = vpop.f32.mrb[0].mxu0
        %v4091 = vadd.f32 0.0, %v4090
        %v4092 = vpop.f32.mrb[0].mxu0
        %4093 = vmatprep.mubr.f32.mxu0 0.0
        %4094 = vmatmul.mubr.f32.gmra.mrb[0].mxu0 %v3886
        %v4095 = vpop.f32.mrb[0].mxu0
        %v4096 = vadd.f32 0.0, %v4095
        %v4097 = vpop.f32.mrb[0].mxu0
        %4098 = vmatprep.mubr.f32.mxu0 0.0
        %4099 = vmatmul.mubr.f32.gmra.mrb[0].mxu0 %v3889
        %v4100 = vpop.f32.mrb[0].mxu0
        %v4101 = vadd.f32 0.0, %v4100
        %v4102 = vpop.f32.mrb[0].mxu0
        %4103 = vmatprep.mubr.f32.mxu0 0.0
        %4104 = vmatmul.mubr.f32.gmra.mrb[0].mxu0 %v3892
        %v4105 = vpop.f32.mrb[0].mxu0
        %v4106 = vadd.f32 0.0, %v4105
        %v4107 = vpop.f32.mrb[0].mxu0
        %4108 = vmatprep.mubr.f32.mxu0 0.0
        %4109 = vmatmul.mubr.f32.gmra.mrb[0].mxu0 %v3895
        %v4110 = vpop.f32.mrb[0].mxu0
        %v4111 = vadd.f32 0.0, %v4110
        %v4112 = vpop.f32.mrb[0].mxu0
        %4113 = vmatprep.mubr.f32.mxu0 0.0
        %4114 = vmatmul.mubr.f32.gmra.mrb[0].mxu0 %v3898
        %v4115 = vpop.f32.mrb[0].mxu0
        %v4116 = vadd.f32 0.0, %v4115
        %v4117 = vpop.f32.mrb[0].mxu0
        %4118 = vmatprep.mubr.f32.mxu0 0.0
        %4119 = vmatmul.mubr.f32.gmra.mrb[0].mxu0 %v3901
        %v4120 = vpop.f32.mrb[0].mxu0
        %v4121 = vadd.f32 0.0, %v4120
        %v4122 = vpop.f32.mrb[0].mxu0
        %4123 = vmatprep.mubr.f32.mxu0 0.0
        %4124 = vmatmul.mubr.f32.gmra.mrb[0].mxu0 %v3904
        %v4125 = vpop.f32.mrb[0].mxu0
        %v4126 = vadd.f32 0.0, %v4125
        %v4127 = vpop.f32.mrb[0].mxu0
        %4128 = vmatprep.mubr.f32.mxu0 0.0
        %4129 = vmatmul.mubr.f32.gmra.mrb[0].mxu0 %v3907
        %v4130 = vpop.f32.mrb[0].mxu0
        %v4131 = vadd.f32 0.0, %v4130
        %v4132 = vpop.f32.mrb[0].mxu0
        %4133 = vdwg.mxu0
        %v4134 = vmul.f32 %v3976, %v575
        %v4135 = vmul.f32 %v3981, %v580
        %v4136 = vmul.f32 %v3986, %v575
        %v4137 = vmul.f32 %v3991, %v580
        %v4138 = vmul.f32 %v3996, %v575
        %v4139 = vmul.f32 %v4001, %v580
        %v4140 = vmul.f32 %v4006, %v575
        %v4141 = vmul.f32 %v4011, %v580
        %v4142 = vmul.f32 %v4016, %v575
        %v4143 = vmul.f32 %v4021, %v580
        %v4144 = vmul.f32 %v4026, %v575
        %v4145 = vmul.f32 %v4031, %v580
        %v4146 = vmul.f32 %v4036, %v575
        %v4147 = vmul.f32 %v4041, %v580
        %v4148 = vmul.f32 %v4046, %v575
        %v4149 = vmul.f32 %v4051, %v580
        %v4150 = vmul.f32 %v4056, %v575
        %v4151 = vmul.f32 %v4061, %v580
        %v4152 = vmul.f32 %v4066, %v575
        %v4153 = vmul.f32 %v4071, %v580
        %v4154 = vmul.f32 %v4076, %v575
        %v4155 = vmul.f32 %v4081, %v580
        %v4156 = vmul.f32 %v4086, %v575
        %v4157 = vmul.f32 %v4091, %v580
        %v4158 = vmul.f32 %v4096, %v575
        %v4159 = vmul.f32 %v4101, %v580
        %v4160 = vmul.f32 %v4106, %v575
        %v4161 = vmul.f32 %v4111, %v580
        %v4162 = vmul.f32 %v4116, %v575
        %v4163 = vmul.f32 %v4121, %v580
        %v4164 = vmul.f32 %v4126, %v575
        %v4165 = vmul.f32 %v4131, %v580
        %v4166 = vld [vmem:[#allocation2] sm:$0xff]
        %v4167 = vld [vmem:[#allocation2 + $0x8] sm:$0xff]
        %v4168 = vld [vmem:[#allocation2 + $0x10] sm:$0xff]
        %v4169 = vld [vmem:[#allocation2 + $0x18] sm:$0xff]
        %v4170 = vld [vmem:[#allocation2 + $0x20] sm:$0xff]
        %v4171 = vld [vmem:[#allocation2 + $0x28] sm:$0xff]
        %v4172 = vld [vmem:[#allocation2 + $0x30] sm:$0xff]
        %v4173 = vld [vmem:[#allocation2 + $0x38] sm:$0xff]
        %v4174 = vld [vmem:[%s4 + $0x60] sm:$0xff]
        %v4175 = vld [vmem:[%s4 + $0x68] sm:$0xff]
        %v4176 = vld [vmem:[%s4 + $0xe0] sm:$0xff]
        %v4177 = vld [vmem:[%s4 + $0xe8] sm:$0xff]
        %v4178 = vld [vmem:[%s4 + $0x160] sm:$0xff]
        %v4179 = vld [vmem:[%s4 + $0x168] sm:$0xff]
        %v4180 = vld [vmem:[%s4 + $0x1e0] sm:$0xff]
        %v4181 = vld [vmem:[%s4 + $0x1e8] sm:$0xff]
        %v4182 = vld [vmem:[%s4 + $0x260] sm:$0xff]
        %v4183 = vld [vmem:[%s4 + $0x268] sm:$0xff]
        %v4184 = vld [vmem:[%s4 + $0x2e0] sm:$0xff]
        %v4185 = vld [vmem:[%s4 + $0x2e8] sm:$0xff]
        %v4186 = vld [vmem:[%s4 + $0x360] sm:$0xff]
        %v4187 = vld [vmem:[%s4 + $0x368] sm:$0xff]
        %v4188 = vld [vmem:[%s4 + $0x3e0] sm:$0xff]
        %v4189 = vld [vmem:[%s4 + $0x3e8] sm:$0xff]
        %4190 = vmatprep.subr.mxu0 0.0
        %4191 = vmatpush1.msra.mxu0 %v4134
        %4192 = vmatprep.subr.mxu0 0.0
        %4193 = vmatpush1.msra.mxu0 %v4135
        %4194 = vmatprep.subr.mxu0 0.0
        %4195 = vmatpush1.msra.mxu0 %v4136
        %4196 = vmatprep.subr.mxu0 0.0
        %4197 = vmatpush1.msra.mxu0 %v4137
        %4198 = vmatprep.subr.mxu0 0.0
        %4199 = vmatpush1.msra.mxu0 %v4138
        %4200 = vmatprep.subr.mxu0 0.0
        %4201 = vmatpush1.msra.mxu0 %v4139
        %4202 = vmatprep.subr.mxu0 0.0
        %4203 = vmatpush1.msra.mxu0 %v4140
        %4204 = vmatprep.subr.mxu0 0.0
        %4205 = vmatpush1.msra.mxu0 %v4141
        %4206 = vmatprep.subr.mxu0 0.0
        %4207 = vmatpush1.msra.mxu0 %v4142
        %4208 = vmatprep.subr.mxu0 0.0
        %4209 = vmatpush1.msra.mxu0 %v4143
        %4210 = vmatprep.subr.mxu0 0.0
        %4211 = vmatpush1.msra.mxu0 %v4144
        %4212 = vmatprep.subr.mxu0 0.0
        %4213 = vmatpush1.msra.mxu0 %v4145
        %4214 = vmatprep.subr.mxu0 0.0
        %4215 = vmatpush1.msra.mxu0 %v4146
        %4216 = vmatprep.subr.mxu0 0.0
        %4217 = vmatpush1.msra.mxu0 %v4147
        %4218 = vmatprep.subr.mxu0 0.0
        %4219 = vmatpush1.msra.mxu0 %v4148
        %4220 = vmatprep.subr.mxu0 0.0
        %4221 = vmatpush1.msra.mxu0 %v4149
        %4222 = vmatprep.subr.mxu0 0.0
        %4223 = vmatpush1.msra.mxu0 %v4150
        %4224 = vmatprep.subr.mxu0 0.0
        %4225 = vmatpush1.msra.mxu0 %v4151
        %4226 = vmatprep.subr.mxu0 0.0
        %4227 = vmatpush1.msra.mxu0 %v4152
        %4228 = vmatprep.subr.mxu0 0.0
        %4229 = vmatpush1.msra.mxu0 %v4153
        %4230 = vmatprep.subr.mxu0 0.0
        %4231 = vmatpush1.msra.mxu0 %v4154
        %4232 = vmatprep.subr.mxu0 0.0
        %4233 = vmatpush1.msra.mxu0 %v4155
        %4234 = vmatprep.subr.mxu0 0.0
        %4235 = vmatpush1.msra.mxu0 %v4156
        %4236 = vmatprep.subr.mxu0 0.0
        %4237 = vmatpush1.msra.mxu0 %v4157
        %4238 = vmatprep.subr.mxu0 0.0
        %4239 = vmatpush1.msra.mxu0 %v4158
        %4240 = vmatprep.subr.mxu0 0.0
        %4241 = vmatpush1.msra.mxu0 %v4159
        %4242 = vmatprep.subr.mxu0 0.0
        %4243 = vmatpush1.msra.mxu0 %v4160
        %4244 = vmatprep.subr.mxu0 0.0
        %4245 = vmatpush1.msra.mxu0 %v4161
        %4246 = vmatprep.subr.mxu0 0.0
        %4247 = vmatpush1.msra.mxu0 %v4162
        %4248 = vmatprep.subr.mxu0 0.0
        %4249 = vmatpush1.msra.mxu0 %v4163
        %4250 = vmatprep.subr.mxu0 0.0
        %4251 = vmatpush1.msra.mxu0 %v4164
        %4252 = vmatprep.subr.mxu0 0.0
        %4253 = vmatpush1.msra.mxu0 %v4165
        %4254 = vmatprep.mubr.f32.mxu0 %v4175
        %4255 = vmatmul.mubr.f32.gmra.mrb[0].mxu0 %v4174
        %v4256 = vpop.f32.mrb[0].mxu0
        %v4257 = vadd.f32 0.0, %v4256
        %v4258 = vpop.f32.mrb[0].mxu0
        %4259 = vmatprep.mubr.f32.mxu0 %v4177
        %4260 = vmatmul.mubr.f32.gmra.mrb[0].mxu0 %v4176
        %v4261 = vpop.f32.mrb[0].mxu0
        %v4262 = vadd.f32 0.0, %v4261
        %v4263 = vpop.f32.mrb[0].mxu0
        %4264 = vmatprep.mubr.f32.mxu0 %v4179
        %4265 = vmatmul.mubr.f32.gmra.mrb[0].mxu0 %v4178
        %v4266 = vpop.f32.mrb[0].mxu0
        %v4267 = vadd.f32 0.0, %v4266
        %v4268 = vpop.f32.mrb[0].mxu0
        %4269 = vmatprep.mubr.f32.mxu0 %v4181
        %4270 = vmatmul.mubr.f32.gmra.mrb[0].mxu0 %v4180
        %v4271 = vpop.f32.mrb[0].mxu0
        %v4272 = vadd.f32 0.0, %v4271
        %v4273 = vpop.f32.mrb[0].mxu0
        %4274 = vmatprep.mubr.f32.mxu0 %v4183
        %4275 = vmatmul.mubr.f32.gmra.mrb[0].mxu0 %v4182
        %v4276 = vpop.f32.mrb[0].mxu0
        %v4277 = vadd.f32 0.0, %v4276
        %v4278 = vpop.f32.mrb[0].mxu0
        %4279 = vmatprep.mubr.f32.mxu0 %v4185
        %4280 = vmatmul.mubr.f32.gmra.mrb[0].mxu0 %v4184
        %v4281 = vpop.f32.mrb[0].mxu0
        %v4282 = vadd.f32 0.0, %v4281
        %v4283 = vpop.f32.mrb[0].mxu0
        %4284 = vmatprep.mubr.f32.mxu0 %v4187
        %4285 = vmatmul.mubr.f32.gmra.mrb[0].mxu0 %v4186
        %v4286 = vpop.f32.mrb[0].mxu0
        %v4287 = vadd.f32 0.0, %v4286
        %v4288 = vpop.f32.mrb[0].mxu0
        %4289 = vmatprep.mubr.f32.mxu0 %v4189
        %4290 = vmatmul.mubr.f32.gmra.mrb[0].mxu0 %v4188
        %v4291 = vpop.f32.mrb[0].mxu0
        %v4292 = vadd.f32 0.0, %v4291
        %v4293 = vpop.f32.mrb[0].mxu0
        %4294 = vdwg.mxu0
        %v4295 = vadd.f32 %v4166, %v4257
        %v4296 = vadd.f32 %v4167, %v4262
        %v4297 = vadd.f32 %v4168, %v4267
        %v4298 = vadd.f32 %v4169, %v4272
        %v4299 = vadd.f32 %v4170, %v4277
        %v4300 = vadd.f32 %v4171, %v4282
        %v4301 = vadd.f32 %v4172, %v4287
        %v4302 = vadd.f32 %v4173, %v4292
        %4303 = vst [vmem:[#allocation2] sm:$0xff] %v4295
        %4304 = vst [vmem:[#allocation2 + $0x8] sm:$0xff] %v4296
        %4305 = vst [vmem:[#allocation2 + $0x10] sm:$0xff] %v4297
        %4306 = vst [vmem:[#allocation2 + $0x18] sm:$0xff] %v4298
        %4307 = vst [vmem:[#allocation2 + $0x20] sm:$0xff] %v4299
        %4308 = vst [vmem:[#allocation2 + $0x28] sm:$0xff] %v4300
        %4309 = vst [vmem:[#allocation2 + $0x30] sm:$0xff] %v4301
        %4310 = vst [vmem:[#allocation2 + $0x38] sm:$0xff] %v4302
        %v4311 = vld [vmem:[%s2 + $0x700] sm:$0xff]
        %v4312 = vld [vmem:[%s2 + $0x708] sm:$0xff]
        %v4313 = vld [vmem:[%s2 + $0x710] sm:$0xff]
        %v4314 = vld [vmem:[%s2 + $0x718] sm:$0xff]
        %v4315 = vld [vmem:[%s2 + $0x720] sm:$0xff]
        %v4316 = vld [vmem:[%s2 + $0x728] sm:$0xff]
        %v4317 = vld [vmem:[%s2 + $0x730] sm:$0xff]
        %v4318 = vld [vmem:[%s2 + $0x738] sm:$0xff]
        %v4319 = vld [vmem:[%s2 + $0x740] sm:$0xff]
        %v4320 = vld [vmem:[%s2 + $0x748] sm:$0xff]
        %v4321 = vld [vmem:[%s2 + $0x750] sm:$0xff]
        %v4322 = vld [vmem:[%s2 + $0x758] sm:$0xff]
        %v4323 = vld [vmem:[%s2 + $0x760] sm:$0xff]
        %v4324 = vld [vmem:[%s2 + $0x768] sm:$0xff]
        %v4325 = vld [vmem:[%s2 + $0x770] sm:$0xff]
        %v4326 = vld [vmem:[%s2 + $0x778] sm:$0xff]
        %v4327 = vld [vmem:[%s2 + $0x780] sm:$0xff]
        %v4328 = vld [vmem:[%s2 + $0x788] sm:$0xff]
        %v4329 = vld [vmem:[%s2 + $0x790] sm:$0xff]
        %v4330 = vld [vmem:[%s2 + $0x798] sm:$0xff]
        %v4331 = vld [vmem:[%s2 + $0x7a0] sm:$0xff]
        %v4332 = vld [vmem:[%s2 + $0x7a8] sm:$0xff]
        %v4333 = vld [vmem:[%s2 + $0x7b0] sm:$0xff]
        %v4334 = vld [vmem:[%s2 + $0x7b8] sm:$0xff]
        %v4335 = vld [vmem:[%s2 + $0x7c0] sm:$0xff]
        %v4336 = vld [vmem:[%s2 + $0x7c8] sm:$0xff]
        %v4337 = vld [vmem:[%s2 + $0x7d0] sm:$0xff]
        %v4338 = vld [vmem:[%s2 + $0x7d8] sm:$0xff]
        %v4339 = vld [vmem:[%s2 + $0x7e0] sm:$0xff]
        %v4340 = vld [vmem:[%s2 + $0x7e8] sm:$0xff]
        %v4341 = vld [vmem:[%s2 + $0x7f0] sm:$0xff]
        %v4342 = vld [vmem:[%s2 + $0x7f8] sm:$0xff]
        %v4344 = vsel %vm399, %v4311, 0
        %v4347 = vsel %vm399, %v4312, 0
        %v4350 = vsel %vm399, %v4313, 0
        %v4353 = vsel %vm399, %v4314, 0
        %v4356 = vsel %vm399, %v4315, 0
        %v4359 = vsel %vm399, %v4316, 0
        %v4362 = vsel %vm399, %v4317, 0
        %v4365 = vsel %vm399, %v4318, 0
        %v4368 = vsel %vm399, %v4319, 0
        %v4371 = vsel %vm399, %v4320, 0
        %v4374 = vsel %vm399, %v4321, 0
        %v4377 = vsel %vm399, %v4322, 0
        %v4380 = vsel %vm399, %v4323, 0
        %v4383 = vsel %vm399, %v4324, 0
        %v4386 = vsel %vm399, %v4325, 0
        %v4389 = vsel %vm399, %v4326, 0
        %v4392 = vsel %vm399, %v4327, 0
        %v4395 = vsel %vm399, %v4328, 0
        %v4398 = vsel %vm399, %v4329, 0
        %v4401 = vsel %vm399, %v4330, 0
        %v4404 = vsel %vm399, %v4331, 0
        %v4407 = vsel %vm399, %v4332, 0
        %v4410 = vsel %vm399, %v4333, 0
        %v4413 = vsel %vm399, %v4334, 0
        %v4416 = vsel %vm399, %v4335, 0
        %v4419 = vsel %vm399, %v4336, 0
        %v4422 = vsel %vm399, %v4337, 0
        %v4425 = vsel %vm399, %v4338, 0
        %v4428 = vsel %vm399, %v4339, 0
        %v4431 = vsel %vm399, %v4340, 0
        %v4434 = vsel %vm399, %v4341, 0
        %v4437 = vsel %vm399, %v4342, 0
        %4439 = vmatprep.subr.mxu0 0.0
        %4440 = vmatpush1.msra.mxu0 %v367
        %4441 = vmatprep.subr.mxu0 0.0
        %4442 = vmatpush1.msra.mxu0 %v368
        %4443 = vmatprep.subr.mxu0 0.0
        %4444 = vmatpush1.msra.mxu0 %v369
        %4445 = vmatprep.subr.mxu0 0.0
        %4446 = vmatpush1.msra.mxu0 %v370
        %4447 = vmatprep.subr.mxu0 0.0
        %4448 = vmatpush1.msra.mxu0 %v371
        %4449 = vmatprep.subr.mxu0 0.0
        %4450 = vmatpush1.msra.mxu0 %v372
        %4451 = vmatprep.subr.mxu0 0.0
        %4452 = vmatpush1.msra.mxu0 %v373
        %4453 = vmatprep.subr.mxu0 0.0
        %4454 = vmatpush1.msra.mxu0 %v374
        %4455 = vmatprep.subr.mxu0 0.0
        %4456 = vmatpush1.msra.mxu0 0.0
        %4457 = vmatprep.subr.mxu0 0.0
        %4458 = vmatpush1.msra.mxu0 0.0
        %4459 = vmatprep.subr.mxu0 0.0
        %4460 = vmatpush1.msra.mxu0 0.0
        %4461 = vmatprep.subr.mxu0 0.0
        %4462 = vmatpush1.msra.mxu0 0.0
        %4463 = vmatprep.subr.mxu0 0.0
        %4464 = vmatpush1.msra.mxu0 0.0
        %4465 = vmatprep.subr.mxu0 0.0
        %4466 = vmatpush1.msra.mxu0 0.0
        %4467 = vmatprep.subr.mxu0 0.0
        %4468 = vmatpush1.msra.mxu0 0.0
        %4469 = vmatprep.subr.mxu0 0.0
        %4470 = vmatpush1.msra.mxu0 0.0
        %4471 = vmatprep.subr.mxu0 0.0
        %4472 = vmatpush1.msra.mxu0 0.0
        %4473 = vmatprep.subr.mxu0 0.0
        %4474 = vmatpush1.msra.mxu0 0.0
        %4475 = vmatprep.subr.mxu0 0.0
        %4476 = vmatpush1.msra.mxu0 0.0
        %4477 = vmatprep.subr.mxu0 0.0
        %4478 = vmatpush1.msra.mxu0 0.0
        %4479 = vmatprep.subr.mxu0 0.0
        %4480 = vmatpush1.msra.mxu0 0.0
        %4481 = vmatprep.subr.mxu0 0.0
        %4482 = vmatpush1.msra.mxu0 0.0
        %4483 = vmatprep.subr.mxu0 0.0
        %4484 = vmatpush1.msra.mxu0 0.0
        %4485 = vmatprep.subr.mxu0 0.0
        %4486 = vmatpush1.msra.mxu0 0.0
        %4487 = vmatprep.subr.mxu0 0.0
        %4488 = vmatpush1.msra.mxu0 0.0
        %4489 = vmatprep.subr.mxu0 0.0
        %4490 = vmatpush1.msra.mxu0 0.0
        %4491 = vmatprep.subr.mxu0 0.0
        %4492 = vmatpush1.msra.mxu0 0.0
        %4493 = vmatprep.subr.mxu0 0.0
        %4494 = vmatpush1.msra.mxu0 0.0
        %4495 = vmatprep.subr.mxu0 0.0
        %4496 = vmatpush1.msra.mxu0 0.0
        %4497 = vmatprep.subr.mxu0 0.0
        %4498 = vmatpush1.msra.mxu0 0.0
        %4499 = vmatprep.subr.mxu0 0.0
        %4500 = vmatpush1.msra.mxu0 0.0
        %4501 = vmatprep.subr.mxu0 0.0
        %4502 = vmatpush1.msra.mxu0 0.0
        %4503 = vmatprep.mubr.f32.mxu0 0.0
        %4504 = vmatmul.mubr.f32.gmra.mrb[0].mxu0 %v4344
        %v4505 = vpop.f32.mrb[0].mxu0
        %v4506 = vadd.f32 0.0, %v4505
        %v4507 = vpop.f32.mrb[0].mxu0
        %4508 = vmatprep.mubr.f32.mxu0 0.0
        %4509 = vmatmul.mubr.f32.gmra.mrb[0].mxu0 %v4347
        %v4510 = vpop.f32.mrb[0].mxu0
        %v4511 = vadd.f32 0.0, %v4510
        %v4512 = vpop.f32.mrb[0].mxu0
        %4513 = vmatprep.mubr.f32.mxu0 0.0
        %4514 = vmatmul.mubr.f32.gmra.mrb[0].mxu0 %v4350
        %v4515 = vpop.f32.mrb[0].mxu0
        %v4516 = vadd.f32 0.0, %v4515
        %v4517 = vpop.f32.mrb[0].mxu0
        %4518 = vmatprep.mubr.f32.mxu0 0.0
        %4519 = vmatmul.mubr.f32.gmra.mrb[0].mxu0 %v4353
        %v4520 = vpop.f32.mrb[0].mxu0
        %v4521 = vadd.f32 0.0, %v4520
        %v4522 = vpop.f32.mrb[0].mxu0
        %4523 = vmatprep.mubr.f32.mxu0 0.0
        %4524 = vmatmul.mubr.f32.gmra.mrb[0].mxu0 %v4356
        %v4525 = vpop.f32.mrb[0].mxu0
        %v4526 = vadd.f32 0.0, %v4525
        %v4527 = vpop.f32.mrb[0].mxu0
        %4528 = vmatprep.mubr.f32.mxu0 0.0
        %4529 = vmatmul.mubr.f32.gmra.mrb[0].mxu0 %v4359
        %v4530 = vpop.f32.mrb[0].mxu0
        %v4531 = vadd.f32 0.0, %v4530
        %v4532 = vpop.f32.mrb[0].mxu0
        %4533 = vmatprep.mubr.f32.mxu0 0.0
        %4534 = vmatmul.mubr.f32.gmra.mrb[0].mxu0 %v4362
        %v4535 = vpop.f32.mrb[0].mxu0
        %v4536 = vadd.f32 0.0, %v4535
        %v4537 = vpop.f32.mrb[0].mxu0
        %4538 = vmatprep.mubr.f32.mxu0 0.0
        %4539 = vmatmul.mubr.f32.gmra.mrb[0].mxu0 %v4365
        %v4540 = vpop.f32.mrb[0].mxu0
        %v4541 = vadd.f32 0.0, %v4540
        %v4542 = vpop.f32.mrb[0].mxu0
        %4543 = vmatprep.mubr.f32.mxu0 0.0
        %4544 = vmatmul.mubr.f32.gmra.mrb[0].mxu0 %v4368
        %v4545 = vpop.f32.mrb[0].mxu0
        %v4546 = vadd.f32 0.0, %v4545
        %v4547 = vpop.f32.mrb[0].mxu0
        %4548 = vmatprep.mubr.f32.mxu0 0.0
        %4549 = vmatmul.mubr.f32.gmra.mrb[0].mxu0 %v4371
        %v4550 = vpop.f32.mrb[0].mxu0
        %v4551 = vadd.f32 0.0, %v4550
        %v4552 = vpop.f32.mrb[0].mxu0
        %4553 = vmatprep.mubr.f32.mxu0 0.0
        %4554 = vmatmul.mubr.f32.gmra.mrb[0].mxu0 %v4374
        %v4555 = vpop.f32.mrb[0].mxu0
        %v4556 = vadd.f32 0.0, %v4555
        %v4557 = vpop.f32.mrb[0].mxu0
        %4558 = vmatprep.mubr.f32.mxu0 0.0
        %4559 = vmatmul.mubr.f32.gmra.mrb[0].mxu0 %v4377
        %v4560 = vpop.f32.mrb[0].mxu0
        %v4561 = vadd.f32 0.0, %v4560
        %v4562 = vpop.f32.mrb[0].mxu0
        %4563 = vmatprep.mubr.f32.mxu0 0.0
        %4564 = vmatmul.mubr.f32.gmra.mrb[0].mxu0 %v4380
        %v4565 = vpop.f32.mrb[0].mxu0
        %v4566 = vadd.f32 0.0, %v4565
        %v4567 = vpop.f32.mrb[0].mxu0
        %4568 = vmatprep.mubr.f32.mxu0 0.0
        %4569 = vmatmul.mubr.f32.gmra.mrb[0].mxu0 %v4383
        %v4570 = vpop.f32.mrb[0].mxu0
        %v4571 = vadd.f32 0.0, %v4570
        %v4572 = vpop.f32.mrb[0].mxu0
        %4573 = vmatprep.mubr.f32.mxu0 0.0
        %4574 = vmatmul.mubr.f32.gmra.mrb[0].mxu0 %v4386
        %v4575 = vpop.f32.mrb[0].mxu0
        %v4576 = vadd.f32 0.0, %v4575
        %v4577 = vpop.f32.mrb[0].mxu0
        %4578 = vmatprep.mubr.f32.mxu0 0.0
        %4579 = vmatmul.mubr.f32.gmra.mrb[0].mxu0 %v4389
        %v4580 = vpop.f32.mrb[0].mxu0
        %v4581 = vadd.f32 0.0, %v4580
        %v4582 = vpop.f32.mrb[0].mxu0
        %4583 = vmatprep.mubr.f32.mxu0 0.0
        %4584 = vmatmul.mubr.f32.gmra.mrb[0].mxu0 %v4392
        %v4585 = vpop.f32.mrb[0].mxu0
        %v4586 = vadd.f32 0.0, %v4585
        %v4587 = vpop.f32.mrb[0].mxu0
        %4588 = vmatprep.mubr.f32.mxu0 0.0
        %4589 = vmatmul.mubr.f32.gmra.mrb[0].mxu0 %v4395
        %v4590 = vpop.f32.mrb[0].mxu0
        %v4591 = vadd.f32 0.0, %v4590
        %v4592 = vpop.f32.mrb[0].mxu0
        %4593 = vmatprep.mubr.f32.mxu0 0.0
        %4594 = vmatmul.mubr.f32.gmra.mrb[0].mxu0 %v4398
        %v4595 = vpop.f32.mrb[0].mxu0
        %v4596 = vadd.f32 0.0, %v4595
        %v4597 = vpop.f32.mrb[0].mxu0
        %4598 = vmatprep.mubr.f32.mxu0 0.0
        %4599 = vmatmul.mubr.f32.gmra.mrb[0].mxu0 %v4401
        %v4600 = vpop.f32.mrb[0].mxu0
        %v4601 = vadd.f32 0.0, %v4600
        %v4602 = vpop.f32.mrb[0].mxu0
        %4603 = vmatprep.mubr.f32.mxu0 0.0
        %4604 = vmatmul.mubr.f32.gmra.mrb[0].mxu0 %v4404
        %v4605 = vpop.f32.mrb[0].mxu0
        %v4606 = vadd.f32 0.0, %v4605
        %v4607 = vpop.f32.mrb[0].mxu0
        %4608 = vmatprep.mubr.f32.mxu0 0.0
        %4609 = vmatmul.mubr.f32.gmra.mrb[0].mxu0 %v4407
        %v4610 = vpop.f32.mrb[0].mxu0
        %v4611 = vadd.f32 0.0, %v4610
        %v4612 = vpop.f32.mrb[0].mxu0
        %4613 = vmatprep.mubr.f32.mxu0 0.0
        %4614 = vmatmul.mubr.f32.gmra.mrb[0].mxu0 %v4410
        %v4615 = vpop.f32.mrb[0].mxu0
        %v4616 = vadd.f32 0.0, %v4615
        %v4617 = vpop.f32.mrb[0].mxu0
        %4618 = vmatprep.mubr.f32.mxu0 0.0
        %4619 = vmatmul.mubr.f32.gmra.mrb[0].mxu0 %v4413
        %v4620 = vpop.f32.mrb[0].mxu0
        %v4621 = vadd.f32 0.0, %v4620
        %v4622 = vpop.f32.mrb[0].mxu0
        %4623 = vmatprep.mubr.f32.mxu0 0.0
        %4624 = vmatmul.mubr.f32.gmra.mrb[0].mxu0 %v4416
        %v4625 = vpop.f32.mrb[0].mxu0
        %v4626 = vadd.f32 0.0, %v4625
        %v4627 = vpop.f32.mrb[0].mxu0
        %4628 = vmatprep.mubr.f32.mxu0 0.0
        %4629 = vmatmul.mubr.f32.gmra.mrb[0].mxu0 %v4419
        %v4630 = vpop.f32.mrb[0].mxu0
        %v4631 = vadd.f32 0.0, %v4630
        %v4632 = vpop.f32.mrb[0].mxu0
        %4633 = vmatprep.mubr.f32.mxu0 0.0
        %4634 = vmatmul.mubr.f32.gmra.mrb[0].mxu0 %v4422
        %v4635 = vpop.f32.mrb[0].mxu0
        %v4636 = vadd.f32 0.0, %v4635
        %v4637 = vpop.f32.mrb[0].mxu0
        %4638 = vmatprep.mubr.f32.mxu0 0.0
        %4639 = vmatmul.mubr.f32.gmra.mrb[0].mxu0 %v4425
        %v4640 = vpop.f32.mrb[0].mxu0
        %v4641 = vadd.f32 0.0, %v4640
        %v4642 = vpop.f32.mrb[0].mxu0
        %4643 = vmatprep.mubr.f32.mxu0 0.0
        %4644 = vmatmul.mubr.f32.gmra.mrb[0].mxu0 %v4428
        %v4645 = vpop.f32.mrb[0].mxu0
        %v4646 = vadd.f32 0.0, %v4645
        %v4647 = vpop.f32.mrb[0].mxu0
        %4648 = vmatprep.mubr.f32.mxu0 0.0
        %4649 = vmatmul.mubr.f32.gmra.mrb[0].mxu0 %v4431
        %v4650 = vpop.f32.mrb[0].mxu0
        %v4651 = vadd.f32 0.0, %v4650
        %v4652 = vpop.f32.mrb[0].mxu0
        %4653 = vmatprep.mubr.f32.mxu0 0.0
        %4654 = vmatmul.mubr.f32.gmra.mrb[0].mxu0 %v4434
        %v4655 = vpop.f32.mrb[0].mxu0
        %v4656 = vadd.f32 0.0, %v4655
        %v4657 = vpop.f32.mrb[0].mxu0
        %4658 = vmatprep.mubr.f32.mxu0 0.0
        %4659 = vmatmul.mubr.f32.gmra.mrb[0].mxu0 %v4437
        %v4660 = vpop.f32.mrb[0].mxu0
        %v4661 = vadd.f32 0.0, %v4660
        %v4662 = vpop.f32.mrb[0].mxu0
        %4663 = vdwg.mxu0
        %v4664 = vmul.f32 %v4506, %v585
        %v4665 = vmul.f32 %v4511, %v590
        %v4666 = vmul.f32 %v4516, %v585
        %v4667 = vmul.f32 %v4521, %v590
        %v4668 = vmul.f32 %v4526, %v585
        %v4669 = vmul.f32 %v4531, %v590
        %v4670 = vmul.f32 %v4536, %v585
        %v4671 = vmul.f32 %v4541, %v590
        %v4672 = vmul.f32 %v4546, %v585
        %v4673 = vmul.f32 %v4551, %v590
        %v4674 = vmul.f32 %v4556, %v585
        %v4675 = vmul.f32 %v4561, %v590
        %v4676 = vmul.f32 %v4566, %v585
        %v4677 = vmul.f32 %v4571, %v590
        %v4678 = vmul.f32 %v4576, %v585
        %v4679 = vmul.f32 %v4581, %v590
        %v4680 = vmul.f32 %v4586, %v585
        %v4681 = vmul.f32 %v4591, %v590
        %v4682 = vmul.f32 %v4596, %v585
        %v4683 = vmul.f32 %v4601, %v590
        %v4684 = vmul.f32 %v4606, %v585
        %v4685 = vmul.f32 %v4611, %v590
        %v4686 = vmul.f32 %v4616, %v585
        %v4687 = vmul.f32 %v4621, %v590
        %v4688 = vmul.f32 %v4626, %v585
        %v4689 = vmul.f32 %v4631, %v590
        %v4690 = vmul.f32 %v4636, %v585
        %v4691 = vmul.f32 %v4641, %v590
        %v4692 = vmul.f32 %v4646, %v585
        %v4693 = vmul.f32 %v4651, %v590
        %v4694 = vmul.f32 %v4656, %v585
        %v4695 = vmul.f32 %v4661, %v590
        %v4696 = vld [vmem:[#allocation2] sm:$0xff]
        %v4697 = vld [vmem:[#allocation2 + $0x8] sm:$0xff]
        %v4698 = vld [vmem:[#allocation2 + $0x10] sm:$0xff]
        %v4699 = vld [vmem:[#allocation2 + $0x18] sm:$0xff]
        %v4700 = vld [vmem:[#allocation2 + $0x20] sm:$0xff]
        %v4701 = vld [vmem:[#allocation2 + $0x28] sm:$0xff]
        %v4702 = vld [vmem:[#allocation2 + $0x30] sm:$0xff]
        %v4703 = vld [vmem:[#allocation2 + $0x38] sm:$0xff]
        %v4704 = vld [vmem:[%s4 + $0x70] sm:$0xff]
        %v4705 = vld [vmem:[%s4 + $0x78] sm:$0xff]
        %v4706 = vld [vmem:[%s4 + $0xf0] sm:$0xff]
        %v4707 = vld [vmem:[%s4 + $0xf8] sm:$0xff]
        %v4708 = vld [vmem:[%s4 + $0x170] sm:$0xff]
        %v4709 = vld [vmem:[%s4 + $0x178] sm:$0xff]
        %v4710 = vld [vmem:[%s4 + $0x1f0] sm:$0xff]
        %v4711 = vld [vmem:[%s4 + $0x1f8] sm:$0xff]
        %v4712 = vld [vmem:[%s4 + $0x270] sm:$0xff]
        %v4713 = vld [vmem:[%s4 + $0x278] sm:$0xff]
        %v4714 = vld [vmem:[%s4 + $0x2f0] sm:$0xff]
        %v4715 = vld [vmem:[%s4 + $0x2f8] sm:$0xff]
        %v4716 = vld [vmem:[%s4 + $0x370] sm:$0xff]
        %v4717 = vld [vmem:[%s4 + $0x378] sm:$0xff]
        %v4718 = vld [vmem:[%s4 + $0x3f0] sm:$0xff]
        %v4719 = vld [vmem:[%s4 + $0x3f8] sm:$0xff]
        %4720 = vmatprep.subr.mxu0 0.0
        %4721 = vmatpush1.msra.mxu0 %v4664
        %4722 = vmatprep.subr.mxu0 0.0
        %4723 = vmatpush1.msra.mxu0 %v4665
        %4724 = vmatprep.subr.mxu0 0.0
        %4725 = vmatpush1.msra.mxu0 %v4666
        %4726 = vmatprep.subr.mxu0 0.0
        %4727 = vmatpush1.msra.mxu0 %v4667
        %4728 = vmatprep.subr.mxu0 0.0
        %4729 = vmatpush1.msra.mxu0 %v4668
        %4730 = vmatprep.subr.mxu0 0.0
        %4731 = vmatpush1.msra.mxu0 %v4669
        %4732 = vmatprep.subr.mxu0 0.0
        %4733 = vmatpush1.msra.mxu0 %v4670
        %4734 = vmatprep.subr.mxu0 0.0
        %4735 = vmatpush1.msra.mxu0 %v4671
        %4736 = vmatprep.subr.mxu0 0.0
        %4737 = vmatpush1.msra.mxu0 %v4672
        %4738 = vmatprep.subr.mxu0 0.0
        %4739 = vmatpush1.msra.mxu0 %v4673
        %4740 = vmatprep.subr.mxu0 0.0
        %4741 = vmatpush1.msra.mxu0 %v4674
        %4742 = vmatprep.subr.mxu0 0.0
        %4743 = vmatpush1.msra.mxu0 %v4675
        %4744 = vmatprep.subr.mxu0 0.0
        %4745 = vmatpush1.msra.mxu0 %v4676
        %4746 = vmatprep.subr.mxu0 0.0
        %4747 = vmatpush1.msra.mxu0 %v4677
        %4748 = vmatprep.subr.mxu0 0.0
        %4749 = vmatpush1.msra.mxu0 %v4678
        %4750 = vmatprep.subr.mxu0 0.0
        %4751 = vmatpush1.msra.mxu0 %v4679
        %4752 = vmatprep.subr.mxu0 0.0
        %4753 = vmatpush1.msra.mxu0 %v4680
        %4754 = vmatprep.subr.mxu0 0.0
        %4755 = vmatpush1.msra.mxu0 %v4681
        %4756 = vmatprep.subr.mxu0 0.0
        %4757 = vmatpush1.msra.mxu0 %v4682
        %4758 = vmatprep.subr.mxu0 0.0
        %4759 = vmatpush1.msra.mxu0 %v4683
        %4760 = vmatprep.subr.mxu0 0.0
        %4761 = vmatpush1.msra.mxu0 %v4684
        %4762 = vmatprep.subr.mxu0 0.0
        %4763 = vmatpush1.msra.mxu0 %v4685
        %4764 = vmatprep.subr.mxu0 0.0
        %4765 = vmatpush1.msra.mxu0 %v4686
        %4766 = vmatprep.subr.mxu0 0.0
        %4767 = vmatpush1.msra.mxu0 %v4687
        %4768 = vmatprep.subr.mxu0 0.0
        %4769 = vmatpush1.msra.mxu0 %v4688
        %4770 = vmatprep.subr.mxu0 0.0
        %4771 = vmatpush1.msra.mxu0 %v4689
        %4772 = vmatprep.subr.mxu0 0.0
        %4773 = vmatpush1.msra.mxu0 %v4690
        %4774 = vmatprep.subr.mxu0 0.0
        %4775 = vmatpush1.msra.mxu0 %v4691
        %4776 = vmatprep.subr.mxu0 0.0
        %4777 = vmatpush1.msra.mxu0 %v4692
        %4778 = vmatprep.subr.mxu0 0.0
        %4779 = vmatpush1.msra.mxu0 %v4693
        %4780 = vmatprep.subr.mxu0 0.0
        %4781 = vmatpush1.msra.mxu0 %v4694
        %4782 = vmatprep.subr.mxu0 0.0
        %4783 = vmatpush1.msra.mxu0 %v4695
        %4784 = vmatprep.mubr.f32.mxu0 %v4705
        %4785 = vmatmul.mubr.f32.gmra.mrb[0].mxu0 %v4704
        %v4786 = vpop.f32.mrb[0].mxu0
        %v4787 = vadd.f32 0.0, %v4786
        %v4788 = vpop.f32.mrb[0].mxu0
        %4789 = vmatprep.mubr.f32.mxu0 %v4707
        %4790 = vmatmul.mubr.f32.gmra.mrb[0].mxu0 %v4706
        %v4791 = vpop.f32.mrb[0].mxu0
        %v4792 = vadd.f32 0.0, %v4791
        %v4793 = vpop.f32.mrb[0].mxu0
        %4794 = vmatprep.mubr.f32.mxu0 %v4709
        %4795 = vmatmul.mubr.f32.gmra.mrb[0].mxu0 %v4708
        %v4796 = vpop.f32.mrb[0].mxu0
        %v4797 = vadd.f32 0.0, %v4796
        %v4798 = vpop.f32.mrb[0].mxu0
        %4799 = vmatprep.mubr.f32.mxu0 %v4711
        %4800 = vmatmul.mubr.f32.gmra.mrb[0].mxu0 %v4710
        %v4801 = vpop.f32.mrb[0].mxu0
        %v4802 = vadd.f32 0.0, %v4801
        %v4803 = vpop.f32.mrb[0].mxu0
        %4804 = vmatprep.mubr.f32.mxu0 %v4713
        %4805 = vmatmul.mubr.f32.gmra.mrb[0].mxu0 %v4712
        %v4806 = vpop.f32.mrb[0].mxu0
        %v4807 = vadd.f32 0.0, %v4806
        %v4808 = vpop.f32.mrb[0].mxu0
        %4809 = vmatprep.mubr.f32.mxu0 %v4715
        %4810 = vmatmul.mubr.f32.gmra.mrb[0].mxu0 %v4714
        %v4811 = vpop.f32.mrb[0].mxu0
        %v4812 = vadd.f32 0.0, %v4811
        %v4813 = vpop.f32.mrb[0].mxu0
        %4814 = vmatprep.mubr.f32.mxu0 %v4717
        %4815 = vmatmul.mubr.f32.gmra.mrb[0].mxu0 %v4716
        %v4816 = vpop.f32.mrb[0].mxu0
        %v4817 = vadd.f32 0.0, %v4816
        %v4818 = vpop.f32.mrb[0].mxu0
        %4819 = vmatprep.mubr.f32.mxu0 %v4719
        %4820 = vmatmul.mubr.f32.gmra.mrb[0].mxu0 %v4718
        %v4821 = vpop.f32.mrb[0].mxu0
        %v4822 = vadd.f32 0.0, %v4821
        %v4823 = vpop.f32.mrb[0].mxu0
        %4824 = vdwg.mxu0
        %v4825 = vadd.f32 %v4696, %v4787
        %v4826 = vadd.f32 %v4697, %v4792
        %v4827 = vadd.f32 %v4698, %v4797
        %v4828 = vadd.f32 %v4699, %v4802
        %v4829 = vadd.f32 %v4700, %v4807
        %v4830 = vadd.f32 %v4701, %v4812
        %v4831 = vadd.f32 %v4702, %v4817
        %v4832 = vadd.f32 %v4703, %v4822
        %4833 = vst [vmem:[#allocation2] sm:$0xff] %v4825
        %4834 = vst [vmem:[#allocation2 + $0x8] sm:$0xff] %v4826
        %4835 = vst [vmem:[#allocation2 + $0x10] sm:$0xff] %v4827
        %4836 = vst [vmem:[#allocation2 + $0x18] sm:$0xff] %v4828
        %4837 = vst [vmem:[#allocation2 + $0x20] sm:$0xff] %v4829
        %4838 = vst [vmem:[#allocation2 + $0x28] sm:$0xff] %v4830
        %4839 = vst [vmem:[#allocation2 + $0x30] sm:$0xff] %v4831
        %4840 = vst [vmem:[#allocation2 + $0x38] sm:$0xff] %v4832
        %v4841 = vld [vmem:[#allocation2] sm:$0xff]
        %v4842 = vld [vmem:[#allocation2 + $0x8] sm:$0xff]
        %v4843 = vld [vmem:[#allocation2 + $0x10] sm:$0xff]
        %v4844 = vld [vmem:[#allocation2 + $0x18] sm:$0xff]
        %v4845 = vld [vmem:[#allocation2 + $0x20] sm:$0xff]
        %v4846 = vld [vmem:[#allocation2 + $0x28] sm:$0xff]
        %v4847 = vld [vmem:[#allocation2 + $0x30] sm:$0xff]
        %v4848 = vld [vmem:[#allocation2 + $0x38] sm:$0xff]
        %4849 = vst [vmem:[%s366] sm:$0xff] %v4841
        %4850 = vst [vmem:[%s366 + $0x8] sm:$0xff] %v4842
        %4851 = vst [vmem:[%s366 + $0x10] sm:$0xff] %v4843
        %4852 = vst [vmem:[%s366 + $0x18] sm:$0xff] %v4844
        %4853 = vst [vmem:[%s366 + $0x20] sm:$0xff] %v4845
        %4854 = vst [vmem:[%s366 + $0x28] sm:$0xff] %v4846
        %4855 = vst [vmem:[%s366 + $0x30] sm:$0xff] %v4847
        %4856 = vst [vmem:[%s366 + $0x38] sm:$0xff] %v4848
        %s4857 = sand.u32 %s142, 1
        %s4858 = scalar_lea.sflag [#allocation6], %s4857
        %s4859 = sand.u32 %s142, 1
        %s4860 = smul.addr %s4859, 64
        %s4861 = scalar_lea.vmem [#allocation5], %s4860
        // Predicated region
        $region117: #{tpu_custom_call.1} parent=107 // pred_check
          %p4862 = pneg %p152
        $region118: #{tpu_custom_call.1} parent=107 // pred_check_branch
          %4864 = sbr.rel (%p4862) target = $region120
        $region119: #{tpu_custom_call.1} parent=107 // pred_region
          %s4866 = ssub.s32 1024, 1024
          %4867 = vsyncadd %s4858, %s4866
          %s4868 = smul.addr %s19, 128
          %s4869 = scalar_lea.hbm %s5, %s4868
          %s4870 = sshll.u32 %s4861, 4
          %s4871 = int_to_ptr.vmem [resolvable:$true] %s4870
          %4876 = dma.vmem_to_hbm [thread:$0]  %s4871, 1024, %s4869, %s4858, 128, 512, 8
        $region120: #{tpu_custom_call.1} parent=107 // pred_fallthru
          _
      $region108: #{tpu_custom_call.1} parent=5 // pred_fallthru
        _
      %p4877 = scmp.le.s32.totalorder 2, %s14
      // Predicated region
      $region121: #{tpu_custom_call.1} parent=5 // pred_check
        %p4878 = pneg %p4877
      $region122: #{tpu_custom_call.1} parent=5 // pred_check_branch
        %4880 = sbr.rel (%p4878) target = $region124
      $region123: #{tpu_custom_call.1} parent=5 // pred_region
        %s4881 = ssub.s32 %s14, 2
        // Predicated region
        $region125: #{tpu_custom_call.1} parent=123 // pred_check
          %p4882 = pneg %p158
        $region126: #{tpu_custom_call.1} parent=123 // pred_check_branch
          %4884 = sbr.rel (%p4882) target = $region128
        $region127: #{tpu_custom_call.1} parent=123 // pred_region
          %s4885 = sand.u32 %s143, 1
          %s4886 = scalar_lea.sflag [#allocation6], %s4885
          %s4887 = sand.u32 %s143, 1
          %s4888 = smul.addr %s4887, 64
          %s4889 = scalar_lea.vmem [#allocation5], %s4888
          %4890 = dma.done %s4886, 1024
        $region128: #{tpu_custom_call.1} parent=123 // pred_fallthru
          _
      $region124: #{tpu_custom_call.1} parent=5 // pred_fallthru
        _
    $region6: #{tpu_custom_call.1} parent=1 // loop_footer
      %s18 = sadd.s32 1, %s14
    $region7: #{tpu_custom_call.1} parent=1 // loop_footer_branch
      %13 = sbr.rel target = $region3
    $region8: #{tpu_custom_call.1} parent=1 // loop_exit
      _
    %4891 = vsyncpa [#allocation6], 1
    %s4892 = scalar_lea.sflag [#allocation6], 1
    %4893 = vsyncpa %s4892, 1

</llo_original>
